<compile_context>
chip_gen: v7x
topology: tpu7x:2x2x1
jax: 0.10.0
libtpu: 0.0.40
codegen_flags: <defaults>
</compile_context>

<pallas_src>
import functools

import jax
import jax.numpy as jnp
from jax.experimental import pallas as pl
from jax.experimental.pallas import tpu as pltpu

VOCAB_SIZE = 50
EMBED_SIZE = 32        # embedding_size (== conv1 kernel width)
NUM_CLASSES = 2
C1_OUT = 256           # conv1 out_channels (== conv2 kernel width)
C2_OUT = 128           # conv2 out_channels
FC1_OUT = 32
PADDING_IDX = 0
OUT_PAD = 128          # lane-dense output width (classes live in lanes [0, NUM_CLASSES))
NEG_PAD = -1e9         # bias for padding class lanes -> exp() underflows to 0
# dropout_p = 0.0 in the reference config -> dropout is a no-op (eval semantics).


def csc_kernel(x1_ref, w1_ref, b1_ref, w2_ref, b2_ref,
               wf1_ref, bf1_ref, wf2_ref, bf2_ref, out_ref, *, l2):
    """One grid step = BB sequences.

    x1_ref: [BB, Lp, 3E] bf16  (conv1 im2col built in the wrapper; rows >= L-2 are 0)
    l2:     number of valid conv2 output rows per sequence (L - 4), static.
    """
    BB, Lp, K1 = x1_ref.shape
    C1 = w1_ref.shape[1]          # 256
    C2 = w2_ref.shape[1]          # 128

    # ---- conv1: one im2col matmul [BB*Lp, 3E] @ [3E, C1], fused bias + ReLU ----
    x1 = x1_ref[...].reshape(BB * Lp, K1)
    h1 = jnp.dot(x1, w1_ref[...], preferred_element_type=jnp.float32)
    h1 = jnp.maximum(h1 + b1_ref[...], 0.0)                     # [BB*Lp, C1] f32
    h1b = h1.astype(jnp.bfloat16)                                # single 256-lane cast

    # ---- conv2: three K=C1 matmuls, sublane-shifted f32 outputs summed ----
    # Valid conv2 row t needs conv1 rows t, t+1, t+2 (all < L-2), so slicing each
    # y_k to exactly l2 rows uses only valid rows and never crosses a sequence.
    acc = None
    for k in range(3):
        yk = jnp.dot(h1b, w2_ref[k * C1:(k + 1) * C1, :],
                     preferred_element_type=jnp.float32)         # [BB*Lp, C2] f32
        yk = yk.reshape(BB, Lp, C2)[:, k:k + l2, :]              # [BB, l2, C2]
        acc = yk if acc is None else acc + yk
    h2 = jnp.maximum(acc + b2_ref[...], 0.0)                     # fused bias + ReLU

    # ---- global max pool over the l2 valid positions (no mask needed) ----
    m = jnp.max(h2, axis=1)                                      # [BB, C2] f32

    # ---- fc1 -> fc2 (weights lane-padded to OUT_PAD in the wrapper) ----
    f1 = jnp.dot(m.astype(jnp.bfloat16), wf1_ref[...],
                 preferred_element_type=jnp.float32) + bf1_ref[...]   # [BB, 128]
    f2 = jnp.dot(f1.astype(jnp.bfloat16), wf2_ref[...],
                 preferred_element_type=jnp.float32) + bf2_ref[...]   # [BB, 128]

    # ---- log softmax (padding lanes have bias -1e9 -> exp underflows to 0) ----
    mx = jnp.max(f2, axis=-1, keepdims=True)
    z = f2 - mx
    lse = jnp.log(jnp.sum(jnp.exp(z), axis=-1, keepdims=True))
    out_ref[...] = z - lse                                       # full-lane, unmasked store


def csc_forward(embedded, w1, b1, w2, b2, wf1, bf1, wf2, bf2, *, block_b=32):
    """embedded: [B, L, E] float32. Returns [B, NUM_CLASSES] log-probs.

    block_b sequences are processed per grid step (M = block_b * L matmul rows).
    Default 32 (M = 512 at L = 16) amortizes per-step overhead and fills a
    v6e/v7x 256-wide MXU pass; cap around ~64-128 on v5e/v7x for VMEM headroom,
    and for v7x prefer block_b <= B/2 so the parallel grid axis spans both TCs.
    """
    B, L, E = embedded.shape
    if L < 5:
        raise ValueError("sequence length must be >= 5 (two valid conv1x3 layers)")
    L1, L2 = L - 2, L - 4                      # valid conv1 / conv2 output lengths
    L_pad = ((L + 7) // 8) * 8                 # tile-aligned row count per sequence
    C1 = w1.shape[2]
    C2 = w2.shape[2]
    F1 = wf1.shape[1]
    C = wf2.shape[1]

    n_blocks = pl.cdiv(B, block_b)
    B_pad = n_blocks * block_b

    # conv1 im2col hoisted to the wrapper (gather glue): [B, L1, 3E], zero-padded
    # to L_pad rows / B_pad sequences, cast once to bf16.
    x = embedded.astype(jnp.float32)
    x1 = jnp.concatenate([x[:, k:k + L1, :] for k in range(3)], axis=-1)   # [B, L1, 3E]
    x1 = jnp.pad(x1, ((0, B_pad - B), (0, L_pad - L1), (0, 0))).astype(jnp.bfloat16)

    # Weight layouts: conv weights as [3*K, C] (bf16 operands, f32 accumulate).
    w1r = w1.astype(jnp.bfloat16).reshape(3 * E, C1)
    w2r = w2.astype(jnp.bfloat16).reshape(3 * C1, C2)
    b1r = b1.reshape(1, C1).astype(jnp.float32)
    b2r = b2.reshape(1, C2).astype(jnp.float32)

    # Lane-pad fc weights/biases to OUT_PAD so the kernel output is lane-dense.
    wf1p = jnp.zeros((C2, OUT_PAD), jnp.bfloat16).at[:, :F1].set(wf1.astype(jnp.bfloat16))
    bf1p = jnp.zeros((1, OUT_PAD), jnp.float32).at[:, :F1].set(bf1.reshape(1, F1))
    wf2p = jnp.zeros((OUT_PAD, OUT_PAD), jnp.bfloat16).at[:F1, :C].set(wf2.astype(jnp.bfloat16))
    bf2p = jnp.full((1, OUT_PAD), NEG_PAD, jnp.float32).at[:, :C].set(bf2.reshape(1, C))

    kernel = functools.partial(csc_kernel, l2=L2)

    out = pl.pallas_call(
        kernel,
        out_shape=jax.ShapeDtypeStruct((B_pad, OUT_PAD), jnp.float32),
        grid_spec=pltpu.PrefetchScalarGridSpec(
            num_scalar_prefetch=0,
            grid=(n_blocks,),
            in_specs=[
                pl.BlockSpec((block_b, L_pad, 3 * E), lambda b: (b, 0, 0)),  # conv1 im2col input
                pl.BlockSpec((3 * E, C1), lambda b: (0, 0)),                 # conv1 w
                pl.BlockSpec((1, C1), lambda b: (0, 0)),                     # conv1 b
                pl.BlockSpec((3 * C1, C2), lambda b: (0, 0)),                # conv2 w (3 stacked taps)
                pl.BlockSpec((1, C2), lambda b: (0, 0)),                     # conv2 b
                pl.BlockSpec((C2, OUT_PAD), lambda b: (0, 0)),               # fc1 w (lane-padded)
                pl.BlockSpec((1, OUT_PAD), lambda b: (0, 0)),                # fc1 b
                pl.BlockSpec((OUT_PAD, OUT_PAD), lambda b: (0, 0)),          # fc2 w (lane-padded)
                pl.BlockSpec((1, OUT_PAD), lambda b: (0, 0)),                # fc2 b
            ],
            out_specs=pl.BlockSpec((block_b, OUT_PAD), lambda b: (b, 0)),
        ),
        compiler_params=pltpu.CompilerParams(
            dimension_semantics=("parallel",)),   # independent batch blocks (v7x 2 TCs)
    )(x1, w1r, b1r, w2r, b2r, wf1p, bf1p, wf2p, bf2p)
    return out[:B, :C]                            # [B, NUM_CLASSES]


def make_params(key):
    ks = jax.random.split(key, 9)
    scale = 0.05
    emb_table = scale * jax.random.normal(ks[0], (VOCAB_SIZE, EMBED_SIZE), jnp.float32)
    emb_table = emb_table.at[PADDING_IDX].set(0.0)          # padding_idx row = 0

    # conv1.weight torch shape: [256, 1, 3, E]  ->  kernel layout [3, E, 256]
    w1_t = scale * jax.random.normal(ks[1], (C1_OUT, 1, 3, EMBED_SIZE), jnp.float32)
    w1 = jnp.transpose(w1_t[:, 0, :, :], (1, 2, 0))          # [3, E, 256]
    b1 = scale * jax.random.normal(ks[2], (1, C1_OUT), jnp.float32)

    # conv2.weight torch shape: [128, 1, 3, 256] -> kernel layout [3, 256, 128]
    w2_t = scale * jax.random.normal(ks[3], (C2_OUT, 1, 3, C1_OUT), jnp.float32)
    w2 = jnp.transpose(w2_t[:, 0, :, :], (1, 2, 0))          # [3, 256, 128]
    b2 = scale * jax.random.normal(ks[4], (1, C2_OUT), jnp.float32)

    # fc layers: torch Linear weight [out, in]; kernel uses [in, out]
    wf1 = scale * jax.random.normal(ks[5], (C2_OUT, FC1_OUT), jnp.float32)
    bf1 = scale * jax.random.normal(ks[6], (1, FC1_OUT), jnp.float32)
    wf2 = scale * jax.random.normal(ks[7], (FC1_OUT, NUM_CLASSES), jnp.float32)
    bf2 = scale * jax.random.normal(ks[8], (1, NUM_CLASSES), jnp.float32)
    return emb_table, w1, b1, w2, b2, wf1, bf1, wf2, bf2


def reference_forward_f32(embedded, w1, b1, w2, b2, wf1, bf1, wf2, bf2):
    """Pure-JAX f32 reference with the original (per-tap) conv math."""
    B, L, E = embedded.shape
    L1, L2 = L - 2, L - 4
    h1 = jnp.stack([embedded[:, k:k + L1, :] @ w1[k] for k in range(3)]).sum(0) + b1
    h1 = jnp.maximum(h1, 0.0)
    h2 = jnp.stack([h1[:, k:k + L2, :] @ w2[k] for k in range(3)]).sum(0) + b2
    h2 = jnp.maximum(h2, 0.0)
    m = jnp.max(h2, axis=1)
    f2 = (m @ wf1 + bf1) @ wf2 + bf2
    return jax.nn.log_softmax(f2, axis=1)


def reference_forward_bf16(embedded, w1, b1, w2, b2, wf1, bf1, wf2, bf2):
    """Pure-JAX reference mirroring the kernel numerics (bf16 operands, f32 acc)."""
    B, L, E = embedded.shape
    L1, L2 = L - 2, L - 4
    x = embedded.astype(jnp.bfloat16)
    w1r = w1.astype(jnp.bfloat16).reshape(3 * E, -1)
    w2r = w2.astype(jnp.bfloat16).reshape(3 * C1_OUT, -1)
    x1 = jnp.concatenate([x[:, k:k + L1, :] for k in range(3)], axis=-1)
    h1 = jnp.maximum(
        jnp.einsum('blk,kc->blc', x1, w1r, preferred_element_type=jnp.float32) + b1, 0.0)
    h1 = h1.astype(jnp.bfloat16)
    x2 = jnp.concatenate([h1[:, k:k + L2, :] for k in range(3)], axis=-1)
    h2 = jnp.maximum(
        jnp.einsum('blk,kc->blc', x2, w2r, preferred_element_type=jnp.float32) + b2, 0.0)
    m = jnp.max(h2, axis=1)
    f1 = jnp.dot(m.astype(jnp.bfloat16), wf1.astype(jnp.bfloat16),
                 preferred_element_type=jnp.float32) + bf1
    f2 = jnp.dot(f1.astype(jnp.bfloat16), wf2.astype(jnp.bfloat16),
                 preferred_element_type=jnp.float32) + bf2
    return jax.nn.log_softmax(f2, axis=-1)


if __name__ == "__main__":
    key = jax.random.PRNGKey(0)
    pkey, ikey = jax.random.split(key)
    params = make_params(pkey)
    emb_table = params[0]

    B, L = 2, 16
    inputs = jax.random.randint(ikey, (B, L), 0, VOCAB_SIZE, dtype=jnp.int32)
    # Embedding lookup is gather glue (kept in plain JAX); all compute runs in the kernel.
    embedded = jnp.take(emb_table, inputs, axis=0)           # [B, L, E] f32

    out = jax.block_until_ready(csc_forward(embedded, *params[1:]))

    ref_bf16 = reference_forward_bf16(embedded, *params[1:])
    ref_f32 = reference_forward_f32(embedded, *params[1:])

    assert out.shape == (B, NUM_CLASSES)
    assert bool(jnp.all(jnp.isfinite(out)))
    # Tight check vs a bf16-matched reference; loose check vs the f32 original math.
    assert bool(jnp.allclose(out, ref_bf16, atol=5e-4, rtol=5e-4))
    assert bool(jnp.allclose(out, ref_f32, atol=1e-2, rtol=1e-2))

    # Multi-block sanity check (exercises n_blocks > 1 and the "parallel" grid axis).
    B2 = 48
    inputs2 = jax.random.randint(jax.random.PRNGKey(1), (B2, L), 0, VOCAB_SIZE, dtype=jnp.int32)
    embedded2 = jnp.take(emb_table, inputs2, axis=0)
    out2 = jax.block_until_ready(csc_forward(embedded2, *params[1:]))
    ref2 = reference_forward_bf16(embedded2, *params[1:])
    assert out2.shape == (B2, NUM_CLASSES)
    assert bool(jnp.allclose(out2, ref2, atol=5e-4, rtol=5e-4))

    print("KERNEL_OK")
</pallas_src>

<mosaic_0001>
module attributes {stable_mosaic.version = 11 : i64} {
  func.func @csc_kernel(%arg0: i32, %arg1: memref<32x16x96xbf16, #tpu.memory_space<vmem>>, %arg2: memref<96x256xbf16, #tpu.memory_space<vmem>>, %arg3: memref<1x256xf32, #tpu.memory_space<vmem>>, %arg4: memref<768x128xbf16, #tpu.memory_space<vmem>>, %arg5: memref<1x128xf32, #tpu.memory_space<vmem>>, %arg6: memref<128x128xbf16, #tpu.memory_space<vmem>>, %arg7: memref<1x128xf32, #tpu.memory_space<vmem>>, %arg8: memref<128x128xbf16, #tpu.memory_space<vmem>>, %arg9: memref<1x128xf32, #tpu.memory_space<vmem>>, %arg10: memref<32x128xf32, #tpu.memory_space<vmem>>) attributes {dimension_semantics = [#tpu.dimension_semantics<parallel>], iteration_bounds = array<i64: 1>, scalar_prefetch = 0 : i64, scratch_operands = 0 : i64, tpu.core_type = #tpu.core_type<tc>, window_params = [{transform_indices = @transform_0, window_bounds = array<i64: 32, 16, 96>}, {pipeline_mode = #tpu.pipeline_mode<synchronous>, transform_indices = @transform_1, window_bounds = array<i64: 96, 256>}, {pipeline_mode = #tpu.pipeline_mode<synchronous>, transform_indices = @transform_2, window_bounds = array<i64: 1, 256>}, {pipeline_mode = #tpu.pipeline_mode<synchronous>, transform_indices = @transform_3, window_bounds = array<i64: 768, 128>}, {pipeline_mode = #tpu.pipeline_mode<synchronous>, transform_indices = @transform_4, window_bounds = array<i64: 1, 128>}, {pipeline_mode = #tpu.pipeline_mode<synchronous>, transform_indices = @transform_5, window_bounds = array<i64: 128, 128>}, {pipeline_mode = #tpu.pipeline_mode<synchronous>, transform_indices = @transform_6, window_bounds = array<i64: 1, 128>}, {pipeline_mode = #tpu.pipeline_mode<synchronous>, transform_indices = @transform_7, window_bounds = array<i64: 128, 128>}, {pipeline_mode = #tpu.pipeline_mode<synchronous>, transform_indices = @transform_8, window_bounds = array<i64: 1, 128>}, {transform_indices = @transform_9, window_bounds = array<i64: 32, 128>}]} {
    %c0 = arith.constant 0 : index
    %c0_0 = arith.constant 0 : index
    %c0_1 = arith.constant 0 : index
    %0 = vector.load %arg1[%c0, %c0_0, %c0_1] : memref<32x16x96xbf16, #tpu.memory_space<vmem>>, vector<32x16x96xbf16>
    %1 = vector.shape_cast %0 : vector<32x16x96xbf16> to vector<512x96xbf16>
    %c0_2 = arith.constant 0 : index
    %c0_3 = arith.constant 0 : index
    %2 = vector.load %arg2[%c0_2, %c0_3] : memref<96x256xbf16, #tpu.memory_space<vmem>>, vector<96x256xbf16>
    %cst = arith.constant dense<0.000000e+00> : vector<512x256xf32>
    %3 = tpu.matmul %1, %2, %cst {dimension_numbers = #tpu.dot_dimension_numbers<[1], [0], [0], [1], [0, 0, 1, 1], [], []>} : vector<512x96xbf16>, vector<96x256xbf16>, vector<512x256xf32> -> vector<512x256xf32>
    %c0_4 = arith.constant 0 : index
    %c0_5 = arith.constant 0 : index
    %4 = vector.load %arg3[%c0_4, %c0_5] : memref<1x256xf32, #tpu.memory_space<vmem>>, vector<1x256xf32>
    %5 = vector.broadcast %4 : vector<1x256xf32> to vector<512x256xf32>
    %6 = arith.addf %3, %5 : vector<512x256xf32>
    %cst_6 = arith.constant 0.000000e+00 : f32
    %7 = vector.broadcast %cst_6 : f32 to vector<512x256xf32>
    %8 = arith.maximumf %6, %7 : vector<512x256xf32>
    %9 = arith.truncf %8 : vector<512x256xf32> to vector<512x256xbf16>
    %c0_7 = arith.constant 0 : index
    %c0_8 = arith.constant 0 : index
    %10 = vector.load %arg4[%c0_7, %c0_8] : memref<768x128xbf16, #tpu.memory_space<vmem>>, vector<256x128xbf16>
    %cst_9 = arith.constant dense<0.000000e+00> : vector<512x128xf32>
    %11 = tpu.matmul %9, %10, %cst_9 {dimension_numbers = #tpu.dot_dimension_numbers<[1], [0], [0], [1], [0, 0, 1, 1], [], []>} : vector<512x256xbf16>, vector<256x128xbf16>, vector<512x128xf32> -> vector<512x128xf32>
    %12 = vector.shape_cast %11 : vector<512x128xf32> to vector<32x16x128xf32>
    %13 = vector.extract_strided_slice %12 {offsets = [0, 0, 0], sizes = [32, 12, 128], strides = [1, 1, 1]} : vector<32x16x128xf32> to vector<32x12x128xf32>
    %c256 = arith.constant 256 : index
    %c0_10 = arith.constant 0 : index
    %14 = vector.load %arg4[%c256, %c0_10] : memref<768x128xbf16, #tpu.memory_space<vmem>>, vector<256x128xbf16>
    %cst_11 = arith.constant dense<0.000000e+00> : vector<512x128xf32>
    %15 = tpu.matmul %9, %14, %cst_11 {dimension_numbers = #tpu.dot_dimension_numbers<[1], [0], [0], [1], [0, 0, 1, 1], [], []>} : vector<512x256xbf16>, vector<256x128xbf16>, vector<512x128xf32> -> vector<512x128xf32>
    %16 = vector.shape_cast %15 : vector<512x128xf32> to vector<32x16x128xf32>
    %17 = vector.extract_strided_slice %16 {offsets = [0, 1, 0], sizes = [32, 12, 128], strides = [1, 1, 1]} : vector<32x16x128xf32> to vector<32x12x128xf32>
    %18 = arith.addf %13, %17 : vector<32x12x128xf32>
    %c512 = arith.constant 512 : index
    %c0_12 = arith.constant 0 : index
    %19 = vector.load %arg4[%c512, %c0_12] : memref<768x128xbf16, #tpu.memory_space<vmem>>, vector<256x128xbf16>
    %cst_13 = arith.constant dense<0.000000e+00> : vector<512x128xf32>
    %20 = tpu.matmul %9, %19, %cst_13 {dimension_numbers = #tpu.dot_dimension_numbers<[1], [0], [0], [1], [0, 0, 1, 1], [], []>} : vector<512x256xbf16>, vector<256x128xbf16>, vector<512x128xf32> -> vector<512x128xf32>
    %21 = vector.shape_cast %20 : vector<512x128xf32> to vector<32x16x128xf32>
    %22 = vector.extract_strided_slice %21 {offsets = [0, 2, 0], sizes = [32, 12, 128], strides = [1, 1, 1]} : vector<32x16x128xf32> to vector<32x12x128xf32>
    %23 = arith.addf %18, %22 : vector<32x12x128xf32>
    %c0_14 = arith.constant 0 : index
    %c0_15 = arith.constant 0 : index
    %24 = vector.load %arg5[%c0_14, %c0_15] : memref<1x128xf32, #tpu.memory_space<vmem>>, vector<1x128xf32>
    %25 = vector.shape_cast %24 : vector<1x128xf32> to vector<1x1x128xf32>
    %26 = vector.broadcast %25 : vector<1x1x128xf32> to vector<32x12x128xf32>
    %27 = arith.addf %23, %26 : vector<32x12x128xf32>
    %cst_16 = arith.constant 0.000000e+00 : f32
    %28 = vector.broadcast %cst_16 : f32 to vector<32x12x128xf32>
    %29 = arith.maximumf %27, %28 : vector<32x12x128xf32>
    %cst_17 = arith.constant dense<0xFF800000> : vector<32x128xf32>
    %30 = vector.multi_reduction <maximumf>, %29, %cst_17 [1] : vector<32x12x128xf32> to vector<32x128xf32>
    %31 = arith.truncf %30 : vector<32x128xf32> to vector<32x128xbf16>
    %c0_18 = arith.constant 0 : index
    %c0_19 = arith.constant 0 : index
    %32 = vector.load %arg6[%c0_18, %c0_19] : memref<128x128xbf16, #tpu.memory_space<vmem>>, vector<128x128xbf16>
    %cst_20 = arith.constant dense<0.000000e+00> : vector<32x128xf32>
    %33 = tpu.matmul %31, %32, %cst_20 {dimension_numbers = #tpu.dot_dimension_numbers<[1], [0], [0], [1], [0, 0, 1, 1], [], []>} : vector<32x128xbf16>, vector<128x128xbf16>, vector<32x128xf32> -> vector<32x128xf32>
    %c0_21 = arith.constant 0 : index
    %c0_22 = arith.constant 0 : index
    %34 = vector.load %arg7[%c0_21, %c0_22] : memref<1x128xf32, #tpu.memory_space<vmem>>, vector<1x128xf32>
    %35 = vector.broadcast %34 : vector<1x128xf32> to vector<32x128xf32>
    %36 = arith.addf %33, %35 : vector<32x128xf32>
    %37 = arith.truncf %36 : vector<32x128xf32> to vector<32x128xbf16>
    %c0_23 = arith.constant 0 : index
    %c0_24 = arith.constant 0 : index
    %38 = vector.load %arg8[%c0_23, %c0_24] : memref<128x128xbf16, #tpu.memory_space<vmem>>, vector<128x128xbf16>
    %cst_25 = arith.constant dense<0.000000e+00> : vector<32x128xf32>
    %39 = tpu.matmul %37, %38, %cst_25 {dimension_numbers = #tpu.dot_dimension_numbers<[1], [0], [0], [1], [0, 0, 1, 1], [], []>} : vector<32x128xbf16>, vector<128x128xbf16>, vector<32x128xf32> -> vector<32x128xf32>
    %c0_26 = arith.constant 0 : index
    %c0_27 = arith.constant 0 : index
    %40 = vector.load %arg9[%c0_26, %c0_27] : memref<1x128xf32, #tpu.memory_space<vmem>>, vector<1x128xf32>
    %41 = vector.broadcast %40 : vector<1x128xf32> to vector<32x128xf32>
    %42 = arith.addf %39, %41 : vector<32x128xf32>
    %cst_28 = arith.constant dense<0xFF800000> : vector<32xf32>
    %43 = vector.multi_reduction <maximumf>, %42, %cst_28 [1] : vector<32x128xf32> to vector<32xf32>
    %44 = vector.shape_cast %43 : vector<32xf32> to vector<32x1xf32>
    %45 = vector.broadcast %44 : vector<32x1xf32> to vector<32x128xf32>
    %46 = arith.subf %42, %45 : vector<32x128xf32>
    %47 = math.exp %46 : vector<32x128xf32>
    %cst_29 = arith.constant dense<0.000000e+00> : vector<32xf32>
    %48 = vector.multi_reduction <add>, %47, %cst_29 [1] : vector<32x128xf32> to vector<32xf32>
    %49 = vector.shape_cast %48 : vector<32xf32> to vector<32x1xf32>
    %50 = math.log %49 : vector<32x1xf32>
    %51 = vector.broadcast %50 : vector<32x1xf32> to vector<32x128xf32>
    %52 = arith.subf %46, %51 : vector<32x128xf32>
    %c0_30 = arith.constant 0 : index
    %c0_31 = arith.constant 0 : index
    %53 = vector.load %arg10[%c0_30, %c0_31] : memref<32x128xf32, #tpu.memory_space<vmem>>, vector<32x128xf32>
    tpu.vector_store %arg10[%c0_30, %c0_31], %52 {strides = array<i32>} : memref<32x128xf32, #tpu.memory_space<vmem>>, vector<32x128xf32>,
    return
  }
  func.func @transform_0(%arg0: i32) -> (i32, i32, i32) {
    %c0_i32 = arith.constant 0 : i32
    %c0_i32_0 = arith.constant 0 : i32
    %c0_i32_1 = arith.constant 0 : i32
    return %arg0, %c0_i32, %c0_i32_0 : i32, i32, i32
  }
  func.func @transform_1(%arg0: i32) -> (i32, i32) {
    %c0_i32 = arith.constant 0 : i32
    %c0_i32_0 = arith.constant 0 : i32
    %c0_i32_1 = arith.constant 0 : i32
    return %c0_i32, %c0_i32_0 : i32, i32
  }
  func.func @transform_2(%arg0: i32) -> (i32, i32) {
    %c0_i32 = arith.constant 0 : i32
    %c0_i32_0 = arith.constant 0 : i32
    %c0_i32_1 = arith.constant 0 : i32
    return %c0_i32, %c0_i32_0 : i32, i32
  }
  func.func @transform_3(%arg0: i32) -> (i32, i32) {
    %c0_i32 = arith.constant 0 : i32
    %c0_i32_0 = arith.constant 0 : i32
    %c0_i32_1 = arith.constant 0 : i32
    return %c0_i32, %c0_i32_0 : i32, i32
  }
  func.func @transform_4(%arg0: i32) -> (i32, i32) {
    %c0_i32 = arith.constant 0 : i32
    %c0_i32_0 = arith.constant 0 : i32
    %c0_i32_1 = arith.constant 0 : i32
    return %c0_i32, %c0_i32_0 : i32, i32
  }
  func.func @transform_5(%arg0: i32) -> (i32, i32) {
    %c0_i32 = arith.constant 0 : i32
    %c0_i32_0 = arith.constant 0 : i32
    %c0_i32_1 = arith.constant 0 : i32
    return %c0_i32, %c0_i32_0 : i32, i32
  }
  func.func @transform_6(%arg0: i32) -> (i32, i32) {
    %c0_i32 = arith.constant 0 : i32
    %c0_i32_0 = arith.constant 0 : i32
    %c0_i32_1 = arith.constant 0 : i32
    return %c0_i32, %c0_i32_0 : i32, i32
  }
  func.func @transform_7(%arg0: i32) -> (i32, i32) {
    %c0_i32 = arith.constant 0 : i32
    %c0_i32_0 = arith.constant 0 : i32
    %c0_i32_1 = arith.constant 0 : i32
    return %c0_i32, %c0_i32_0 : i32, i32
  }
  func.func @transform_8(%arg0: i32) -> (i32, i32) {
    %c0_i32 = arith.constant 0 : i32
    %c0_i32_0 = arith.constant 0 : i32
    %c0_i32_1 = arith.constant 0 : i32
    return %c0_i32, %c0_i32_0 : i32, i32
  }
  func.func @transform_9(%arg0: i32) -> (i32, i32) {
    %c0_i32 = arith.constant 0 : i32
    %c0_i32_0 = arith.constant 0 : i32
    return %arg0, %c0_i32 : i32, i32
  }
}

</mosaic_0001>

<llo_original>
// kernel: tpu_custom_call.1
$region0: #{tpu_custom_call.1}
  #allocation0 [shape = 'u32[]', space=smem, size = 0x4, offset = 0x4, fixed_abs, tag = 'smem constant byte address 0x4 - core index']
  #allocation1 [shape = 'u32[144,128]{1,0:T(1,128)}', space=vmem, size = 0x12000, scoped, tag = 'internal scratch']
  %s0 = inlined_call_operand.hbm [shape: bf16[32,16,96], index: 0, kind: input, shape index: {}]
  %s1 = inlined_call_operand.hbm [shape: bf16[96,256], index: 1, kind: input, shape index: {}]
  %s2 = inlined_call_operand.vmem [shape: f32[1,256], index: 2, kind: input, shape index: {}]
  %s3 = inlined_call_operand.hbm [shape: bf16[768,128], index: 3, kind: input, shape index: {}]
  %s4 = inlined_call_operand.vmem [shape: f32[1,128], index: 4, kind: input, shape index: {}]
  %s5 = inlined_call_operand.hbm [shape: bf16[128,128], index: 5, kind: input, shape index: {}]
  %s6 = inlined_call_operand.vmem [shape: f32[1,128], index: 6, kind: input, shape index: {}]
  %s7 = inlined_call_operand.hbm [shape: bf16[128,128], index: 7, kind: input, shape index: {}]
  %s8 = inlined_call_operand.vmem [shape: f32[1,128], index: 8, kind: input, shape index: {}]
  %s9 = inlined_call_operand.hbm [shape: f32[32,128], index: 9, kind: output, shape index: {}]
  %s10 = sld [smem:[#allocation0]]
  $region66: #{tpu_custom_call.1} parent=0
    _
  %s12 = ssub.s32 1, %s10
  %s13 = scalar_select 0, %s12, %s10
  $region1: #{tpu_custom_call.1} parent=0
    #allocation2 [shape = 'u8[131072]{0}', space=vmem, size = 0x20000, scoped, tag = 'input window, operand 0, single buffered']
    #allocation3 [shape = 's32[1]{0}', space=sflag, size = 0x4, scoped, tag = 'scoped memory for tpu_custom_call.1']
    #allocation4 [shape = 's32[1]{0}', space=sflag, size = 0x4, scoped, tag = 'scoped memory for tpu_custom_call.1']
    #allocation5 [shape = 'u8[49152]{0}', space=vmem, size = 0xc000, scoped, tag = 'input window, operand 1, single buffered']
    #allocation6 [shape = 's32[1]{0}', space=sflag, size = 0x4, scoped, tag = 'scoped memory for tpu_custom_call.1']
    #allocation7 [shape = 'u8[196608]{0}', space=vmem, size = 0x30000, scoped, tag = 'input window, operand 3, single buffered']
    #allocation8 [shape = 'u8[32768]{0}', space=vmem, size = 0x8000, scoped, tag = 'input window, operand 5, single buffered']
    #allocation9 [shape = 's32[1]{0}', space=sflag, size = 0x4, scoped, tag = 'scoped memory for tpu_custom_call.1']
    #allocation10 [shape = 'u8[32768]{0}', space=vmem, size = 0x8000, scoped, tag = 'input window, operand 7, single buffered']
    #allocation11 [shape = 'u8[16384]{0}', space=vmem, size = 0x4000, scoped, tag = 'output window, operand 0, single buffered']
    %14 = vsyncpa [#allocation3], 0
    %15 = vsyncpa [#allocation6], 0
    %16 = vsyncpa [#allocation9], 0
    %17 = vsyncpa [#allocation4], 0
    // Predicated region
    $region2: #{tpu_custom_call.1} parent=1 // pred_check
      _
    $region3: #{tpu_custom_call.1} parent=1 // pred_check_branch
      %19 = sbr.rel (0) target = $region5
    $region4: #{tpu_custom_call.1} parent=1 // pred_region
      %s21 = ssub.s32 4096, 4096
      %22 = vsyncadd [#allocation3], %s21
      %s23 = sshll.u32 [#allocation2], 4
      %s24 = int_to_ptr.vmem [resolvable:$true] %s23
      %29 = dma.hbm_to_vmem [thread:$0]  %s0, 4096, %s24, [#allocation3], 64, 64, 4
    $region5: #{tpu_custom_call.1} parent=1 // pred_fallthru
      _
    // Predicated region
    $region6: #{tpu_custom_call.1} parent=1 // pred_check
      _
    $region7: #{tpu_custom_call.1} parent=1 // pred_check_branch
      %31 = sbr.rel (0) target = $region9
    $region8: #{tpu_custom_call.1} parent=1 // pred_region
      %s33 = ssub.s32 1536, 1536
      %34 = vsyncadd [#allocation6], %s33
      %s35 = sshll.u32 [#allocation5], 4
      %s36 = int_to_ptr.vmem [resolvable:$true] %s35
      %41 = dma.hbm_to_vmem [thread:$0]  %s1, 1536, %s36, [#allocation6], 128, 128, 8
    $region9: #{tpu_custom_call.1} parent=1 // pred_fallthru
      _
    // Predicated region
    $region10: #{tpu_custom_call.1} parent=1 // pred_check
      _
    $region11: #{tpu_custom_call.1} parent=1 // pred_check_branch
      %43 = sbr.rel (0) target = $region13
    $region12: #{tpu_custom_call.1} parent=1 // pred_region
      _
    $region13: #{tpu_custom_call.1} parent=1 // pred_fallthru
      _
    // Predicated region
    $region14: #{tpu_custom_call.1} parent=1 // pred_check
      _
    $region15: #{tpu_custom_call.1} parent=1 // pred_check_branch
      %45 = sbr.rel (0) target = $region17
    $region16: #{tpu_custom_call.1} parent=1 // pred_region
      %s47 = ssub.s32 6144, 6144
      %48 = vsyncadd [#allocation6], %s47
      %s49 = sshll.u32 [#allocation7], 4
      %s50 = int_to_ptr.vmem [resolvable:$true] %s49
      %55 = dma.hbm_to_vmem [thread:$0]  %s3, 6144, %s50, [#allocation6], 64, 64, 4
    $region17: #{tpu_custom_call.1} parent=1 // pred_fallthru
      _
    // Predicated region
    $region18: #{tpu_custom_call.1} parent=1 // pred_check
      _
    $region19: #{tpu_custom_call.1} parent=1 // pred_check_branch
      %57 = sbr.rel (0) target = $region21
    $region20: #{tpu_custom_call.1} parent=1 // pred_region
      _
    $region21: #{tpu_custom_call.1} parent=1 // pred_fallthru
      _
    // Predicated region
    $region22: #{tpu_custom_call.1} parent=1 // pred_check
      _
    $region23: #{tpu_custom_call.1} parent=1 // pred_check_branch
      %59 = sbr.rel (0) target = $region25
    $region24: #{tpu_custom_call.1} parent=1 // pred_region
      %s61 = ssub.s32 1024, 1024
      %62 = vsyncadd [#allocation9], %s61
      %s63 = sshll.u32 [#allocation8], 4
      %s64 = int_to_ptr.vmem [resolvable:$true] %s63
      %69 = dma.hbm_to_vmem [thread:$0]  %s5, 1024, %s64, [#allocation9], 64, 64, 4
    $region25: #{tpu_custom_call.1} parent=1 // pred_fallthru
      _
    // Predicated region
    $region26: #{tpu_custom_call.1} parent=1 // pred_check
      _
    $region27: #{tpu_custom_call.1} parent=1 // pred_check_branch
      %71 = sbr.rel (0) target = $region29
    $region28: #{tpu_custom_call.1} parent=1 // pred_region
      _
    $region29: #{tpu_custom_call.1} parent=1 // pred_fallthru
      _
    // Predicated region
    $region30: #{tpu_custom_call.1} parent=1 // pred_check
      _
    $region31: #{tpu_custom_call.1} parent=1 // pred_check_branch
      %73 = sbr.rel (0) target = $region33
    $region32: #{tpu_custom_call.1} parent=1 // pred_region
      %s75 = ssub.s32 1024, 1024
      %76 = vsyncadd [#allocation9], %s75
      %s77 = sshll.u32 [#allocation10], 4
      %s78 = int_to_ptr.vmem [resolvable:$true] %s77
      %83 = dma.hbm_to_vmem [thread:$0]  %s7, 1024, %s78, [#allocation9], 64, 64, 4
    $region33: #{tpu_custom_call.1} parent=1 // pred_fallthru
      _
    // Predicated region
    $region34: #{tpu_custom_call.1} parent=1 // pred_check
      _
    $region35: #{tpu_custom_call.1} parent=1 // pred_check_branch
      %85 = sbr.rel (0) target = $region37
    $region36: #{tpu_custom_call.1} parent=1 // pred_region
      _
    $region37: #{tpu_custom_call.1} parent=1 // pred_fallthru
      _
    // Predicated region
    $region38: #{tpu_custom_call.1} parent=1 // pred_check
      _
    $region39: #{tpu_custom_call.1} parent=1 // pred_check_branch
      %87 = sbr.rel (0) target = $region41
    $region40: #{tpu_custom_call.1} parent=1 // pred_region
      %88 = dma.done [#allocation3], 4096
    $region41: #{tpu_custom_call.1} parent=1 // pred_fallthru
      _
    // Predicated region
    $region42: #{tpu_custom_call.1} parent=1 // pred_check
      _
    $region43: #{tpu_custom_call.1} parent=1 // pred_check_branch
      %90 = sbr.rel (0) target = $region45
    $region44: #{tpu_custom_call.1} parent=1 // pred_region
      %91 = dma.done [#allocation6], 1536
    $region45: #{tpu_custom_call.1} parent=1 // pred_fallthru
      _
    // Predicated region
    $region46: #{tpu_custom_call.1} parent=1 // pred_check
      _
    $region47: #{tpu_custom_call.1} parent=1 // pred_check_branch
      %93 = sbr.rel (0) target = $region49
    $region48: #{tpu_custom_call.1} parent=1 // pred_region
      %94 = dma.done [#allocation6], 6144
    $region49: #{tpu_custom_call.1} parent=1 // pred_fallthru
      _
    // Predicated region
    $region50: #{tpu_custom_call.1} parent=1 // pred_check
      _
    $region51: #{tpu_custom_call.1} parent=1 // pred_check_branch
      %96 = sbr.rel (0) target = $region53
    $region52: #{tpu_custom_call.1} parent=1 // pred_region
      %97 = dma.done [#allocation9], 1024
    $region53: #{tpu_custom_call.1} parent=1 // pred_fallthru
      _
    // Predicated region
    $region54: #{tpu_custom_call.1} parent=1 // pred_check
      _
    $region55: #{tpu_custom_call.1} parent=1 // pred_check_branch
      %99 = sbr.rel (0) target = $region57
    $region56: #{tpu_custom_call.1} parent=1 // pred_region
      %100 = dma.done [#allocation9], 1024
    $region57: #{tpu_custom_call.1} parent=1 // pred_fallthru
      _
    %v102 = vld [vmem:[#allocation2] sm:$0xf]
    %v103 = vld [vmem:[#allocation2 + $0x4] sm:$0xf]
    %v104 = vld [vmem:[#allocation2 + $0x8] sm:$0xf]
    %v105 = vld [vmem:[#allocation2 + $0xc] sm:$0xf]
    %v106 = vld [vmem:[#allocation2 + $0x10] sm:$0xf]
    %v107 = vld [vmem:[#allocation2 + $0x14] sm:$0xf]
    %v108 = vld [vmem:[#allocation2 + $0x18] sm:$0xf]
    %v109 = vld [vmem:[#allocation2 + $0x1c] sm:$0xf]
    %v110 = vld [vmem:[#allocation2 + $0x20] sm:$0xf]
    %v111 = vld [vmem:[#allocation2 + $0x24] sm:$0xf]
    %v112 = vld [vmem:[#allocation2 + $0x28] sm:$0xf]
    %v113 = vld [vmem:[#allocation2 + $0x2c] sm:$0xf]
    %v114 = vld [vmem:[#allocation2 + $0x30] sm:$0xf]
    %v115 = vld [vmem:[#allocation2 + $0x34] sm:$0xf]
    %v116 = vld [vmem:[#allocation2 + $0x38] sm:$0xf]
    %v117 = vld [vmem:[#allocation2 + $0x3c] sm:$0xf]
    %v118 = vld [vmem:[#allocation2 + $0x40] sm:$0xf]
    %v119 = vld [vmem:[#allocation2 + $0x44] sm:$0xf]
    %v120 = vld [vmem:[#allocation2 + $0x48] sm:$0xf]
    %v121 = vld [vmem:[#allocation2 + $0x4c] sm:$0xf]
    %v122 = vld [vmem:[#allocation2 + $0x50] sm:$0xf]
    %v123 = vld [vmem:[#allocation2 + $0x54] sm:$0xf]
    %v124 = vld [vmem:[#allocation2 + $0x58] sm:$0xf]
    %v125 = vld [vmem:[#allocation2 + $0x5c] sm:$0xf]
    %v126 = vld [vmem:[#allocation2 + $0x60] sm:$0xf]
    %v127 = vld [vmem:[#allocation2 + $0x64] sm:$0xf]
    %v128 = vld [vmem:[#allocation2 + $0x68] sm:$0xf]
    %v129 = vld [vmem:[#allocation2 + $0x6c] sm:$0xf]
    %v130 = vld [vmem:[#allocation2 + $0x70] sm:$0xf]
    %v131 = vld [vmem:[#allocation2 + $0x74] sm:$0xf]
    %v132 = vld [vmem:[#allocation2 + $0x78] sm:$0xf]
    %v133 = vld [vmem:[#allocation2 + $0x7c] sm:$0xf]
    %v134 = vld [vmem:[#allocation2 + $0x80] sm:$0xf]
    %v135 = vld [vmem:[#allocation2 + $0x84] sm:$0xf]
    %v136 = vld [vmem:[#allocation2 + $0x88] sm:$0xf]
    %v137 = vld [vmem:[#allocation2 + $0x8c] sm:$0xf]
    %v138 = vld [vmem:[#allocation2 + $0x90] sm:$0xf]
    %v139 = vld [vmem:[#allocation2 + $0x94] sm:$0xf]
    %v140 = vld [vmem:[#allocation2 + $0x98] sm:$0xf]
    %v141 = vld [vmem:[#allocation2 + $0x9c] sm:$0xf]
    %v142 = vld [vmem:[#allocation2 + $0xa0] sm:$0xf]
    %v143 = vld [vmem:[#allocation2 + $0xa4] sm:$0xf]
    %v144 = vld [vmem:[#allocation2 + $0xa8] sm:$0xf]
    %v145 = vld [vmem:[#allocation2 + $0xac] sm:$0xf]
    %v146 = vld [vmem:[#allocation2 + $0xb0] sm:$0xf]
    %v147 = vld [vmem:[#allocation2 + $0xb4] sm:$0xf]
    %v148 = vld [vmem:[#allocation2 + $0xb8] sm:$0xf]
    %v149 = vld [vmem:[#allocation2 + $0xbc] sm:$0xf]
    %v150 = vld [vmem:[#allocation2 + $0xc0] sm:$0xf]
    %v151 = vld [vmem:[#allocation2 + $0xc4] sm:$0xf]
    %v152 = vld [vmem:[#allocation2 + $0xc8] sm:$0xf]
    %v153 = vld [vmem:[#allocation2 + $0xcc] sm:$0xf]
    %v154 = vld [vmem:[#allocation2 + $0xd0] sm:$0xf]
    %v155 = vld [vmem:[#allocation2 + $0xd4] sm:$0xf]
    %v156 = vld [vmem:[#allocation2 + $0xd8] sm:$0xf]
    %v157 = vld [vmem:[#allocation2 + $0xdc] sm:$0xf]
    %v158 = vld [vmem:[#allocation2 + $0xe0] sm:$0xf]
    %v159 = vld [vmem:[#allocation2 + $0xe4] sm:$0xf]
    %v160 = vld [vmem:[#allocation2 + $0xe8] sm:$0xf]
    %v161 = vld [vmem:[#allocation2 + $0xec] sm:$0xf]
    %v162 = vld [vmem:[#allocation2 + $0xf0] sm:$0xf]
    %v163 = vld [vmem:[#allocation2 + $0xf4] sm:$0xf]
    %v164 = vld [vmem:[#allocation2 + $0xf8] sm:$0xf]
    %v165 = vld [vmem:[#allocation2 + $0xfc] sm:$0xf]
    %v166 = vld [vmem:[#allocation5] sm:$0xff]
    %v167 = vld [vmem:[#allocation5 + $0x8] sm:$0xff]
    %v168 = vld [vmem:[#allocation5 + $0x10] sm:$0xff]
    %v169 = vld [vmem:[#allocation5 + $0x18] sm:$0xff]
    %v170 = vld [vmem:[#allocation5 + $0x20] sm:$0xff]
    %v171 = vld [vmem:[#allocation5 + $0x28] sm:$0xff]
    %v172 = vld [vmem:[#allocation5 + $0x30] sm:$0xff]
    %v173 = vld [vmem:[#allocation5 + $0x38] sm:$0xff]
    %v174 = vld [vmem:[#allocation5 + $0x40] sm:$0xff]
    %v175 = vld [vmem:[#allocation5 + $0x48] sm:$0xff]
    %v176 = vld [vmem:[#allocation5 + $0x50] sm:$0xff]
    %v177 = vld [vmem:[#allocation5 + $0x58] sm:$0xff]
    %v178 = vld [vmem:[%s2] sm:$0x3]
    %v180 = vlaneseq
    %v181 = vshrl.u32 %v180, 7
    %v182 = vsub.s32 0, %v181
    %v183 = vrot.slane %v178, %v182
    %v184 = vlaneseq
    %v185 = vshrl.u32 %v184, 7
    %v186 = vsub.s32 1, %v185
    %v187 = vrot.slane %v178, %v186
    %v254 = vunpack.c.l.b16 %v102
    %v255 = vunpack.c.l.b16 %v103
    %v256 = vunpack.c.l.b16 %v104
    %v257 = vunpack.c.l.b16 %v105
    %v258 = vunpack.c.l.b16 %v106
    %v259 = vunpack.c.l.b16 %v107
    %v260 = vunpack.c.l.b16 %v108
    %v261 = vunpack.c.l.b16 %v109
    %v262 = vunpack.c.l.b16 %v110
    %v263 = vunpack.c.l.b16 %v111
    %v264 = vunpack.c.l.b16 %v112
    %v265 = vunpack.c.l.b16 %v113
    %v266 = vunpack.c.l.b16 %v114
    %v267 = vunpack.c.l.b16 %v115
    %v268 = vunpack.c.l.b16 %v116
    %v269 = vunpack.c.l.b16 %v117
    %v270 = vunpack.c.l.b16 %v118
    %v271 = vunpack.c.l.b16 %v119
    %v272 = vunpack.c.l.b16 %v120
    %v273 = vunpack.c.l.b16 %v121
    %v274 = vunpack.c.l.b16 %v122
    %v275 = vunpack.c.l.b16 %v123
    %v276 = vunpack.c.l.b16 %v124
    %v277 = vunpack.c.l.b16 %v125
    %v278 = vunpack.c.l.b16 %v126
    %v279 = vunpack.c.l.b16 %v127
    %v280 = vunpack.c.l.b16 %v128
    %v281 = vunpack.c.l.b16 %v129
    %v282 = vunpack.c.l.b16 %v130
    %v283 = vunpack.c.l.b16 %v131
    %v284 = vunpack.c.l.b16 %v132
    %v285 = vunpack.c.l.b16 %v133
    %v286 = vunpack.c.l.b16 %v134
    %v287 = vunpack.c.l.b16 %v135
    %v288 = vunpack.c.l.b16 %v136
    %v289 = vunpack.c.l.b16 %v137
    %v290 = vunpack.c.l.b16 %v138
    %v291 = vunpack.c.l.b16 %v139
    %v292 = vunpack.c.l.b16 %v140
    %v293 = vunpack.c.l.b16 %v141
    %v294 = vunpack.c.l.b16 %v142
    %v295 = vunpack.c.l.b16 %v143
    %v296 = vunpack.c.l.b16 %v144
    %v297 = vunpack.c.l.b16 %v145
    %v298 = vunpack.c.l.b16 %v146
    %v299 = vunpack.c.l.b16 %v147
    %v300 = vunpack.c.l.b16 %v148
    %v301 = vunpack.c.l.b16 %v149
    %v302 = vunpack.c.l.b16 %v150
    %v303 = vunpack.c.l.b16 %v151
    %v304 = vunpack.c.l.b16 %v152
    %v305 = vunpack.c.l.b16 %v153
    %v306 = vunpack.c.l.b16 %v154
    %v307 = vunpack.c.l.b16 %v155
    %v308 = vunpack.c.l.b16 %v156
    %v309 = vunpack.c.l.b16 %v157
    %v310 = vunpack.c.l.b16 %v158
    %v311 = vunpack.c.l.b16 %v159
    %v312 = vunpack.c.l.b16 %v160
    %v313 = vunpack.c.l.b16 %v161
    %v314 = vunpack.c.l.b16 %v162
    %v315 = vunpack.c.l.b16 %v163
    %v316 = vunpack.c.l.b16 %v164
    %v317 = vunpack.c.l.b16 %v165
    %v318 = vpack.c.b16 %v255, %v254
    %v319 = vpack.c.b16 %v257, %v256
    %v320 = vpack.c.b16 %v259, %v258
    %v321 = vpack.c.b16 %v261, %v260
    %v322 = vpack.c.b16 %v263, %v262
    %v323 = vpack.c.b16 %v265, %v264
    %v324 = vpack.c.b16 %v267, %v266
    %v325 = vpack.c.b16 %v269, %v268
    %v326 = vpack.c.b16 %v271, %v270
    %v327 = vpack.c.b16 %v273, %v272
    %v328 = vpack.c.b16 %v275, %v274
    %v329 = vpack.c.b16 %v277, %v276
    %v330 = vpack.c.b16 %v279, %v278
    %v331 = vpack.c.b16 %v281, %v280
    %v332 = vpack.c.b16 %v283, %v282
    %v333 = vpack.c.b16 %v285, %v284
    %v334 = vpack.c.b16 %v287, %v286
    %v335 = vpack.c.b16 %v289, %v288
    %v336 = vpack.c.b16 %v291, %v290
    %v337 = vpack.c.b16 %v293, %v292
    %v338 = vpack.c.b16 %v295, %v294
    %v339 = vpack.c.b16 %v297, %v296
    %v340 = vpack.c.b16 %v299, %v298
    %v341 = vpack.c.b16 %v301, %v300
    %v342 = vpack.c.b16 %v303, %v302
    %v343 = vpack.c.b16 %v305, %v304
    %v344 = vpack.c.b16 %v307, %v306
    %v345 = vpack.c.b16 %v309, %v308
    %v346 = vpack.c.b16 %v311, %v310
    %v347 = vpack.c.b16 %v313, %v312
    %v348 = vpack.c.b16 %v315, %v314
    %v349 = vpack.c.b16 %v317, %v316
    %v362 = vunpack.c.l.b16 %v166
    %v363 = vunpack.c.h.b16 %v166
    %v364 = vunpack.c.l.b16 %v167
    %v365 = vunpack.c.h.b16 %v167
    %v366 = vunpack.c.l.b16 %v168
    %v367 = vunpack.c.h.b16 %v168
    %v368 = vunpack.c.l.b16 %v169
    %v369 = vunpack.c.h.b16 %v169
    %v370 = vunpack.c.l.b16 %v170
    %v371 = vunpack.c.h.b16 %v170
    %v372 = vunpack.c.l.b16 %v171
    %v373 = vunpack.c.h.b16 %v171
    %v374 = vunpack.c.l.b16 %v172
    %v375 = vunpack.c.h.b16 %v172
    %v376 = vunpack.c.l.b16 %v173
    %v377 = vunpack.c.h.b16 %v173
    %v378 = vunpack.c.l.b16 %v174
    %v379 = vunpack.c.h.b16 %v174
    %v380 = vunpack.c.l.b16 %v175
    %v381 = vunpack.c.h.b16 %v175
    %v382 = vunpack.c.l.b16 %v176
    %v383 = vunpack.c.h.b16 %v176
    %v384 = vunpack.c.l.b16 %v177
    %v385 = vunpack.c.h.b16 %v177
    %v386 = vpack.c.b16 %v364, %v362
    %v387 = vpack.c.b16 %v365, %v363
    %v388 = vpack.c.b16 %v368, %v366
    %v389 = vpack.c.b16 %v369, %v367
    %v390 = vpack.c.b16 %v372, %v370
    %v391 = vpack.c.b16 %v373, %v371
    %v392 = vpack.c.b16 %v376, %v374
    %v393 = vpack.c.b16 %v377, %v375
    %v394 = vpack.c.b16 %v380, %v378
    %v395 = vpack.c.b16 %v381, %v379
    %v396 = vpack.c.b16 %v384, %v382
    %v397 = vpack.c.b16 %v385, %v383
    %vm410 = vcmask 785408
    %v412 = vsel %vm410, %v318, 0
    %v415 = vsel %vm410, %v319, 0
    %v418 = vsel %vm410, %v320, 0
    %v421 = vsel %vm410, %v321, 0
    %v424 = vsel %vm410, %v322, 0
    %v427 = vsel %vm410, %v323, 0
    %v430 = vsel %vm410, %v324, 0
    %v433 = vsel %vm410, %v325, 0
    %v436 = vsel %vm410, %v326, 0
    %v439 = vsel %vm410, %v327, 0
    %v442 = vsel %vm410, %v328, 0
    %v445 = vsel %vm410, %v329, 0
    %v448 = vsel %vm410, %v330, 0
    %v451 = vsel %vm410, %v331, 0
    %v454 = vsel %vm410, %v332, 0
    %v457 = vsel %vm410, %v333, 0
    %v460 = vsel %vm410, %v334, 0
    %v463 = vsel %vm410, %v335, 0
    %v466 = vsel %vm410, %v336, 0
    %v469 = vsel %vm410, %v337, 0
    %v472 = vsel %vm410, %v338, 0
    %v475 = vsel %vm410, %v339, 0
    %v478 = vsel %vm410, %v340, 0
    %v481 = vsel %vm410, %v341, 0
    %v484 = vsel %vm410, %v342, 0
    %v487 = vsel %vm410, %v343, 0
    %v490 = vsel %vm410, %v344, 0
    %v493 = vsel %vm410, %v345, 0
    %v496 = vsel %vm410, %v346, 0
    %v499 = vsel %vm410, %v347, 0
    %v502 = vsel %vm410, %v348, 0
    %v505 = vsel %vm410, %v349, 0
    %507 = vmatprep.subr.bf16.mxu0 %v387
    %508 = vmatpush1.bf16.msra.mxu0 %v386
    %509 = vmatprep.subr.bf16.mxu0 %v389
    %510 = vmatpush1.bf16.msra.mxu0 %v388
    %511 = vmatprep.subr.bf16.mxu0 %v391
    %512 = vmatpush1.bf16.msra.mxu0 %v390
    %513 = vmatprep.subr.bf16.mxu0 %v393
    %514 = vmatpush1.bf16.msra.mxu0 %v392
    %515 = vmatprep.subr.bf16.mxu0 %v395
    %516 = vmatpush1.bf16.msra.mxu0 %v394
    %517 = vmatprep.subr.bf16.mxu0 %v397
    %518 = vmatpush1.bf16.msra.mxu0 %v396
    %519 = vmatprep.subr.bf16.mxu0 0
    %520 = vmatpush1.bf16.msra.mxu0 0
    %521 = vmatprep.subr.bf16.mxu0 0
    %522 = vmatpush1.bf16.msra.mxu0 0
    %523 = vmatprep.subr.bf16.mxu0 0
    %524 = vmatpush1.bf16.msra.mxu0 0
    %525 = vmatprep.subr.bf16.mxu0 0
    %526 = vmatpush1.bf16.msra.mxu0 0
    %527 = vmatprep.subr.bf16.mxu0 0
    %528 = vmatpush1.bf16.msra.mxu0 0
    %529 = vmatprep.subr.bf16.mxu0 0
    %530 = vmatpush1.bf16.msra.mxu0 0
    %531 = vmatprep.subr.bf16.mxu0 0
    %532 = vmatpush1.bf16.msra.mxu0 0
    %533 = vmatprep.subr.bf16.mxu0 0
    %534 = vmatpush1.bf16.msra.mxu0 0
    %535 = vmatprep.subr.bf16.mxu0 0
    %536 = vmatpush1.bf16.msra.mxu0 0
    %537 = vmatprep.subr.bf16.mxu0 0
    %538 = vmatpush1.bf16.msra.mxu0 0
    %539 = vmatprep.mubr.bf16.mxu0 0
    %540 = vmatmul.mubr.bf16.gmra.mrb[0].mxu0 %v412
    %v541 = vpop.f32.mrb[0].mxu0
    %v542 = vadd.f32 %v183, %v541
    %v543 = vpop.f32.mrb[0].mxu0
    %v544 = vadd.f32 %v187, %v543
    %v545 = vpop.f32.mrb[0].mxu0
    %v546 = vadd.f32 %v183, %v545
    %v547 = vpop.f32.mrb[0].mxu0
    %v548 = vadd.f32 %v187, %v547
    %549 = vmatprep.mubr.bf16.mxu0 0
    %550 = vmatmul.mubr.bf16.gmra.mrb[0].mxu0 %v415
    %v551 = vpop.f32.mrb[0].mxu0
    %v552 = vadd.f32 %v183, %v551
    %v553 = vpop.f32.mrb[0].mxu0
    %v554 = vadd.f32 %v187, %v553
    %v555 = vpop.f32.mrb[0].mxu0
    %v556 = vadd.f32 %v183, %v555
    %v557 = vpop.f32.mrb[0].mxu0
    %v558 = vadd.f32 %v187, %v557
    %559 = vmatprep.mubr.bf16.mxu0 0
    %560 = vmatmul.mubr.bf16.gmra.mrb[0].mxu0 %v418
    %v561 = vpop.f32.mrb[0].mxu0
    %v562 = vadd.f32 %v183, %v561
    %v563 = vpop.f32.mrb[0].mxu0
    %v564 = vadd.f32 %v187, %v563
    %v565 = vpop.f32.mrb[0].mxu0
    %v566 = vadd.f32 %v183, %v565
    %v567 = vpop.f32.mrb[0].mxu0
    %v568 = vadd.f32 %v187, %v567
    %569 = vmatprep.mubr.bf16.mxu0 0
    %570 = vmatmul.mubr.bf16.gmra.mrb[0].mxu0 %v421
    %v571 = vpop.f32.mrb[0].mxu0
    %v572 = vadd.f32 %v183, %v571
    %v573 = vpop.f32.mrb[0].mxu0
    %v574 = vadd.f32 %v187, %v573
    %v575 = vpop.f32.mrb[0].mxu0
    %v576 = vadd.f32 %v183, %v575
    %v577 = vpop.f32.mrb[0].mxu0
    %v578 = vadd.f32 %v187, %v577
    %579 = vmatprep.mubr.bf16.mxu0 0
    %580 = vmatmul.mubr.bf16.gmra.mrb[0].mxu0 %v424
    %v581 = vpop.f32.mrb[0].mxu0
    %v582 = vadd.f32 %v183, %v581
    %v583 = vpop.f32.mrb[0].mxu0
    %v584 = vadd.f32 %v187, %v583
    %v585 = vpop.f32.mrb[0].mxu0
    %v586 = vadd.f32 %v183, %v585
    %v587 = vpop.f32.mrb[0].mxu0
    %v588 = vadd.f32 %v187, %v587
    %589 = vmatprep.mubr.bf16.mxu0 0
    %590 = vmatmul.mubr.bf16.gmra.mrb[0].mxu0 %v427
    %v591 = vpop.f32.mrb[0].mxu0
    %v592 = vadd.f32 %v183, %v591
    %v593 = vpop.f32.mrb[0].mxu0
    %v594 = vadd.f32 %v187, %v593
    %v595 = vpop.f32.mrb[0].mxu0
    %v596 = vadd.f32 %v183, %v595
    %v597 = vpop.f32.mrb[0].mxu0
    %v598 = vadd.f32 %v187, %v597
    %599 = vmatprep.mubr.bf16.mxu0 0
    %600 = vmatmul.mubr.bf16.gmra.mrb[0].mxu0 %v430
    %v601 = vpop.f32.mrb[0].mxu0
    %v602 = vadd.f32 %v183, %v601
    %v603 = vpop.f32.mrb[0].mxu0
    %v604 = vadd.f32 %v187, %v603
    %v605 = vpop.f32.mrb[0].mxu0
    %v606 = vadd.f32 %v183, %v605
    %v607 = vpop.f32.mrb[0].mxu0
    %v608 = vadd.f32 %v187, %v607
    %609 = vmatprep.mubr.bf16.mxu0 0
    %610 = vmatmul.mubr.bf16.gmra.mrb[0].mxu0 %v433
    %v611 = vpop.f32.mrb[0].mxu0
    %v612 = vadd.f32 %v183, %v611
    %v613 = vpop.f32.mrb[0].mxu0
    %v614 = vadd.f32 %v187, %v613
    %v615 = vpop.f32.mrb[0].mxu0
    %v616 = vadd.f32 %v183, %v615
    %v617 = vpop.f32.mrb[0].mxu0
    %v618 = vadd.f32 %v187, %v617
    %619 = vmatprep.mubr.bf16.mxu0 0
    %620 = vmatmul.mubr.bf16.gmra.mrb[0].mxu0 %v436
    %v621 = vpop.f32.mrb[0].mxu0
    %v622 = vadd.f32 %v183, %v621
    %v623 = vpop.f32.mrb[0].mxu0
    %v624 = vadd.f32 %v187, %v623
    %v625 = vpop.f32.mrb[0].mxu0
    %v626 = vadd.f32 %v183, %v625
    %v627 = vpop.f32.mrb[0].mxu0
    %v628 = vadd.f32 %v187, %v627
    %629 = vmatprep.mubr.bf16.mxu0 0
    %630 = vmatmul.mubr.bf16.gmra.mrb[0].mxu0 %v439
    %v631 = vpop.f32.mrb[0].mxu0
    %v632 = vadd.f32 %v183, %v631
    %v633 = vpop.f32.mrb[0].mxu0
    %v634 = vadd.f32 %v187, %v633
    %v635 = vpop.f32.mrb[0].mxu0
    %v636 = vadd.f32 %v183, %v635
    %v637 = vpop.f32.mrb[0].mxu0
    %v638 = vadd.f32 %v187, %v637
    %639 = vmatprep.mubr.bf16.mxu0 0
    %640 = vmatmul.mubr.bf16.gmra.mrb[0].mxu0 %v442
    %v641 = vpop.f32.mrb[0].mxu0
    %v642 = vadd.f32 %v183, %v641
    %v643 = vpop.f32.mrb[0].mxu0
    %v644 = vadd.f32 %v187, %v643
    %v645 = vpop.f32.mrb[0].mxu0
    %v646 = vadd.f32 %v183, %v645
    %v647 = vpop.f32.mrb[0].mxu0
    %v648 = vadd.f32 %v187, %v647
    %649 = vmatprep.mubr.bf16.mxu0 0
    %650 = vmatmul.mubr.bf16.gmra.mrb[0].mxu0 %v445
    %v651 = vpop.f32.mrb[0].mxu0
    %v652 = vadd.f32 %v183, %v651
    %v653 = vpop.f32.mrb[0].mxu0
    %v654 = vadd.f32 %v187, %v653
    %v655 = vpop.f32.mrb[0].mxu0
    %v656 = vadd.f32 %v183, %v655
    %v657 = vpop.f32.mrb[0].mxu0
    %v658 = vadd.f32 %v187, %v657
    %659 = vmatprep.mubr.bf16.mxu0 0
    %660 = vmatmul.mubr.bf16.gmra.mrb[0].mxu0 %v448
    %v661 = vpop.f32.mrb[0].mxu0
    %v662 = vadd.f32 %v183, %v661
    %v663 = vpop.f32.mrb[0].mxu0
    %v664 = vadd.f32 %v187, %v663
    %v665 = vpop.f32.mrb[0].mxu0
    %v666 = vadd.f32 %v183, %v665
    %v667 = vpop.f32.mrb[0].mxu0
    %v668 = vadd.f32 %v187, %v667
    %669 = vmatprep.mubr.bf16.mxu0 0
    %670 = vmatmul.mubr.bf16.gmra.mrb[0].mxu0 %v451
    %v671 = vpop.f32.mrb[0].mxu0
    %v672 = vadd.f32 %v183, %v671
    %v673 = vpop.f32.mrb[0].mxu0
    %v674 = vadd.f32 %v187, %v673
    %v675 = vpop.f32.mrb[0].mxu0
    %v676 = vadd.f32 %v183, %v675
    %v677 = vpop.f32.mrb[0].mxu0
    %v678 = vadd.f32 %v187, %v677
    %679 = vmatprep.mubr.bf16.mxu0 0
    %680 = vmatmul.mubr.bf16.gmra.mrb[0].mxu0 %v454
    %v681 = vpop.f32.mrb[0].mxu0
    %v682 = vadd.f32 %v183, %v681
    %v683 = vpop.f32.mrb[0].mxu0
    %v684 = vadd.f32 %v187, %v683
    %v685 = vpop.f32.mrb[0].mxu0
    %v686 = vadd.f32 %v183, %v685
    %v687 = vpop.f32.mrb[0].mxu0
    %v688 = vadd.f32 %v187, %v687
    %689 = vmatprep.mubr.bf16.mxu0 0
    %690 = vmatmul.mubr.bf16.gmra.mrb[0].mxu0 %v457
    %v691 = vpop.f32.mrb[0].mxu0
    %v692 = vadd.f32 %v183, %v691
    %v693 = vpop.f32.mrb[0].mxu0
    %v694 = vadd.f32 %v187, %v693
    %v695 = vpop.f32.mrb[0].mxu0
    %v696 = vadd.f32 %v183, %v695
    %v697 = vpop.f32.mrb[0].mxu0
    %v698 = vadd.f32 %v187, %v697
    %699 = vmatprep.mubr.bf16.mxu0 0
    %700 = vmatmul.mubr.bf16.gmra.mrb[0].mxu0 %v460
    %v701 = vpop.f32.mrb[0].mxu0
    %v702 = vadd.f32 %v183, %v701
    %v703 = vpop.f32.mrb[0].mxu0
    %v704 = vadd.f32 %v187, %v703
    %v705 = vpop.f32.mrb[0].mxu0
    %v706 = vadd.f32 %v183, %v705
    %v707 = vpop.f32.mrb[0].mxu0
    %v708 = vadd.f32 %v187, %v707
    %709 = vmatprep.mubr.bf16.mxu0 0
    %710 = vmatmul.mubr.bf16.gmra.mrb[0].mxu0 %v463
    %v711 = vpop.f32.mrb[0].mxu0
    %v712 = vadd.f32 %v183, %v711
    %v713 = vpop.f32.mrb[0].mxu0
    %v714 = vadd.f32 %v187, %v713
    %v715 = vpop.f32.mrb[0].mxu0
    %v716 = vadd.f32 %v183, %v715
    %v717 = vpop.f32.mrb[0].mxu0
    %v718 = vadd.f32 %v187, %v717
    %719 = vmatprep.mubr.bf16.mxu0 0
    %720 = vmatmul.mubr.bf16.gmra.mrb[0].mxu0 %v466
    %v721 = vpop.f32.mrb[0].mxu0
    %v722 = vadd.f32 %v183, %v721
    %v723 = vpop.f32.mrb[0].mxu0
    %v724 = vadd.f32 %v187, %v723
    %v725 = vpop.f32.mrb[0].mxu0
    %v726 = vadd.f32 %v183, %v725
    %v727 = vpop.f32.mrb[0].mxu0
    %v728 = vadd.f32 %v187, %v727
    %729 = vmatprep.mubr.bf16.mxu0 0
    %730 = vmatmul.mubr.bf16.gmra.mrb[0].mxu0 %v469
    %v731 = vpop.f32.mrb[0].mxu0
    %v732 = vadd.f32 %v183, %v731
    %v733 = vpop.f32.mrb[0].mxu0
    %v734 = vadd.f32 %v187, %v733
    %v735 = vpop.f32.mrb[0].mxu0
    %v736 = vadd.f32 %v183, %v735
    %v737 = vpop.f32.mrb[0].mxu0
    %v738 = vadd.f32 %v187, %v737
    %739 = vmatprep.mubr.bf16.mxu0 0
    %740 = vmatmul.mubr.bf16.gmra.mrb[0].mxu0 %v472
    %v741 = vpop.f32.mrb[0].mxu0
    %v742 = vadd.f32 %v183, %v741
    %v743 = vpop.f32.mrb[0].mxu0
    %v744 = vadd.f32 %v187, %v743
    %v745 = vpop.f32.mrb[0].mxu0
    %v746 = vadd.f32 %v183, %v745
    %v747 = vpop.f32.mrb[0].mxu0
    %v748 = vadd.f32 %v187, %v747
    %749 = vmatprep.mubr.bf16.mxu0 0
    %750 = vmatmul.mubr.bf16.gmra.mrb[0].mxu0 %v475
    %v751 = vpop.f32.mrb[0].mxu0
    %v752 = vadd.f32 %v183, %v751
    %v753 = vpop.f32.mrb[0].mxu0
    %v754 = vadd.f32 %v187, %v753
    %v755 = vpop.f32.mrb[0].mxu0
    %v756 = vadd.f32 %v183, %v755
    %v757 = vpop.f32.mrb[0].mxu0
    %v758 = vadd.f32 %v187, %v757
    %759 = vmatprep.mubr.bf16.mxu0 0
    %760 = vmatmul.mubr.bf16.gmra.mrb[0].mxu0 %v478
    %v761 = vpop.f32.mrb[0].mxu0
    %v762 = vadd.f32 %v183, %v761
    %v763 = vpop.f32.mrb[0].mxu0
    %v764 = vadd.f32 %v187, %v763
    %v765 = vpop.f32.mrb[0].mxu0
    %v766 = vadd.f32 %v183, %v765
    %v767 = vpop.f32.mrb[0].mxu0
    %v768 = vadd.f32 %v187, %v767
    %769 = vmatprep.mubr.bf16.mxu0 0
    %770 = vmatmul.mubr.bf16.gmra.mrb[0].mxu0 %v481
    %v771 = vpop.f32.mrb[0].mxu0
    %v772 = vadd.f32 %v183, %v771
    %v773 = vpop.f32.mrb[0].mxu0
    %v774 = vadd.f32 %v187, %v773
    %v775 = vpop.f32.mrb[0].mxu0
    %v776 = vadd.f32 %v183, %v775
    %v777 = vpop.f32.mrb[0].mxu0
    %v778 = vadd.f32 %v187, %v777
    %779 = vmatprep.mubr.bf16.mxu0 0
    %780 = vmatmul.mubr.bf16.gmra.mrb[0].mxu0 %v484
    %v781 = vpop.f32.mrb[0].mxu0
    %v782 = vadd.f32 %v183, %v781
    %v783 = vpop.f32.mrb[0].mxu0
    %v784 = vadd.f32 %v187, %v783
    %v785 = vpop.f32.mrb[0].mxu0
    %v786 = vadd.f32 %v183, %v785
    %v787 = vpop.f32.mrb[0].mxu0
    %v788 = vadd.f32 %v187, %v787
    %789 = vmatprep.mubr.bf16.mxu0 0
    %790 = vmatmul.mubr.bf16.gmra.mrb[0].mxu0 %v487
    %v791 = vpop.f32.mrb[0].mxu0
    %v792 = vadd.f32 %v183, %v791
    %v793 = vpop.f32.mrb[0].mxu0
    %v794 = vadd.f32 %v187, %v793
    %v795 = vpop.f32.mrb[0].mxu0
    %v796 = vadd.f32 %v183, %v795
    %v797 = vpop.f32.mrb[0].mxu0
    %v798 = vadd.f32 %v187, %v797
    %799 = vmatprep.mubr.bf16.mxu0 0
    %800 = vmatmul.mubr.bf16.gmra.mrb[0].mxu0 %v490
    %v801 = vpop.f32.mrb[0].mxu0
    %v802 = vadd.f32 %v183, %v801
    %v803 = vpop.f32.mrb[0].mxu0
    %v804 = vadd.f32 %v187, %v803
    %v805 = vpop.f32.mrb[0].mxu0
    %v806 = vadd.f32 %v183, %v805
    %v807 = vpop.f32.mrb[0].mxu0
    %v808 = vadd.f32 %v187, %v807
    %809 = vmatprep.mubr.bf16.mxu0 0
    %810 = vmatmul.mubr.bf16.gmra.mrb[0].mxu0 %v493
    %v811 = vpop.f32.mrb[0].mxu0
    %v812 = vadd.f32 %v183, %v811
    %v813 = vpop.f32.mrb[0].mxu0
    %v814 = vadd.f32 %v187, %v813
    %v815 = vpop.f32.mrb[0].mxu0
    %v816 = vadd.f32 %v183, %v815
    %v817 = vpop.f32.mrb[0].mxu0
    %v818 = vadd.f32 %v187, %v817
    %819 = vmatprep.mubr.bf16.mxu0 0
    %820 = vmatmul.mubr.bf16.gmra.mrb[0].mxu0 %v496
    %v821 = vpop.f32.mrb[0].mxu0
    %v822 = vadd.f32 %v183, %v821
    %v823 = vpop.f32.mrb[0].mxu0
    %v824 = vadd.f32 %v187, %v823
    %v825 = vpop.f32.mrb[0].mxu0
    %v826 = vadd.f32 %v183, %v825
    %v827 = vpop.f32.mrb[0].mxu0
    %v828 = vadd.f32 %v187, %v827
    %829 = vmatprep.mubr.bf16.mxu0 0
    %830 = vmatmul.mubr.bf16.gmra.mrb[0].mxu0 %v499
    %v831 = vpop.f32.mrb[0].mxu0
    %v832 = vadd.f32 %v183, %v831
    %v833 = vpop.f32.mrb[0].mxu0
    %v834 = vadd.f32 %v187, %v833
    %v835 = vpop.f32.mrb[0].mxu0
    %v836 = vadd.f32 %v183, %v835
    %v837 = vpop.f32.mrb[0].mxu0
    %v838 = vadd.f32 %v187, %v837
    %839 = vmatprep.mubr.bf16.mxu0 0
    %840 = vmatmul.mubr.bf16.gmra.mrb[0].mxu0 %v502
    %v841 = vpop.f32.mrb[0].mxu0
    %v842 = vadd.f32 %v183, %v841
    %v843 = vpop.f32.mrb[0].mxu0
    %v844 = vadd.f32 %v187, %v843
    %v845 = vpop.f32.mrb[0].mxu0
    %v846 = vadd.f32 %v183, %v845
    %v847 = vpop.f32.mrb[0].mxu0
    %v848 = vadd.f32 %v187, %v847
    %849 = vmatprep.mubr.bf16.mxu0 0
    %850 = vmatmul.mubr.bf16.gmra.mrb[0].mxu0 %v505
    %v851 = vpop.f32.mrb[0].mxu0
    %v852 = vadd.f32 %v183, %v851
    %v853 = vpop.f32.mrb[0].mxu0
    %v854 = vadd.f32 %v187, %v853
    %v855 = vpop.f32.mrb[0].mxu0
    %v856 = vadd.f32 %v183, %v855
    %v857 = vpop.f32.mrb[0].mxu0
    %v858 = vadd.f32 %v187, %v857
    %859 = vdwg.mxu0
    %v860 = vmax.f32 %v542, 0.0
    %v861 = vmax.f32 %v544, 0.0
    %v862 = vmax.f32 %v546, 0.0
    %v863 = vmax.f32 %v548, 0.0
    %v864 = vmax.f32 %v552, 0.0
    %v865 = vmax.f32 %v554, 0.0
    %v866 = vmax.f32 %v556, 0.0
    %v867 = vmax.f32 %v558, 0.0
    %v868 = vmax.f32 %v562, 0.0
    %v869 = vmax.f32 %v564, 0.0
    %v870 = vmax.f32 %v566, 0.0
    %v871 = vmax.f32 %v568, 0.0
    %v872 = vmax.f32 %v572, 0.0
    %v873 = vmax.f32 %v574, 0.0
    %v874 = vmax.f32 %v576, 0.0
    %v875 = vmax.f32 %v578, 0.0
    %v876 = vmax.f32 %v582, 0.0
    %v877 = vmax.f32 %v584, 0.0
    %v878 = vmax.f32 %v586, 0.0
    %v879 = vmax.f32 %v588, 0.0
    %v880 = vmax.f32 %v592, 0.0
    %v881 = vmax.f32 %v594, 0.0
    %v882 = vmax.f32 %v596, 0.0
    %v883 = vmax.f32 %v598, 0.0
    %v884 = vmax.f32 %v602, 0.0
    %v885 = vmax.f32 %v604, 0.0
    %v886 = vmax.f32 %v606, 0.0
    %v887 = vmax.f32 %v608, 0.0
    %v888 = vmax.f32 %v612, 0.0
    %v889 = vmax.f32 %v614, 0.0
    %v890 = vmax.f32 %v616, 0.0
    %v891 = vmax.f32 %v618, 0.0
    %v892 = vmax.f32 %v622, 0.0
    %v893 = vmax.f32 %v624, 0.0
    %v894 = vmax.f32 %v626, 0.0
    %v895 = vmax.f32 %v628, 0.0
    %v896 = vmax.f32 %v632, 0.0
    %v897 = vmax.f32 %v634, 0.0
    %v898 = vmax.f32 %v636, 0.0
    %v899 = vmax.f32 %v638, 0.0
    %v900 = vmax.f32 %v642, 0.0
    %v901 = vmax.f32 %v644, 0.0
    %v902 = vmax.f32 %v646, 0.0
    %v903 = vmax.f32 %v648, 0.0
    %v904 = vmax.f32 %v652, 0.0
    %v905 = vmax.f32 %v654, 0.0
    %v906 = vmax.f32 %v656, 0.0
    %v907 = vmax.f32 %v658, 0.0
    %v908 = vmax.f32 %v662, 0.0
    %v909 = vmax.f32 %v664, 0.0
    %v910 = vmax.f32 %v666, 0.0
    %v911 = vmax.f32 %v668, 0.0
    %v912 = vmax.f32 %v672, 0.0
    %v913 = vmax.f32 %v674, 0.0
    %v914 = vmax.f32 %v676, 0.0
    %v915 = vmax.f32 %v678, 0.0
    %v916 = vmax.f32 %v682, 0.0
    %v917 = vmax.f32 %v684, 0.0
    %v918 = vmax.f32 %v686, 0.0
    %v919 = vmax.f32 %v688, 0.0
    %v920 = vmax.f32 %v692, 0.0
    %v921 = vmax.f32 %v694, 0.0
    %v922 = vmax.f32 %v696, 0.0
    %v923 = vmax.f32 %v698, 0.0
    %v924 = vmax.f32 %v702, 0.0
    %v925 = vmax.f32 %v704, 0.0
    %v926 = vmax.f32 %v706, 0.0
    %v927 = vmax.f32 %v708, 0.0
    %v928 = vmax.f32 %v712, 0.0
    %v929 = vmax.f32 %v714, 0.0
    %v930 = vmax.f32 %v716, 0.0
    %v931 = vmax.f32 %v718, 0.0
    %v932 = vmax.f32 %v722, 0.0
    %v933 = vmax.f32 %v724, 0.0
    %v934 = vmax.f32 %v726, 0.0
    %v935 = vmax.f32 %v728, 0.0
    %v936 = vmax.f32 %v732, 0.0
    %v937 = vmax.f32 %v734, 0.0
    %v938 = vmax.f32 %v736, 0.0
    %v939 = vmax.f32 %v738, 0.0
    %v940 = vmax.f32 %v742, 0.0
    %v941 = vmax.f32 %v744, 0.0
    %v942 = vmax.f32 %v746, 0.0
    %v943 = vmax.f32 %v748, 0.0
    %v944 = vmax.f32 %v752, 0.0
    %v945 = vmax.f32 %v754, 0.0
    %v946 = vmax.f32 %v756, 0.0
    %v947 = vmax.f32 %v758, 0.0
    %v948 = vmax.f32 %v762, 0.0
    %v949 = vmax.f32 %v764, 0.0
    %v950 = vmax.f32 %v766, 0.0
    %v951 = vmax.f32 %v768, 0.0
    %v952 = vmax.f32 %v772, 0.0
    %v953 = vmax.f32 %v774, 0.0
    %v954 = vmax.f32 %v776, 0.0
    %v955 = vmax.f32 %v778, 0.0
    %v956 = vmax.f32 %v782, 0.0
    %v957 = vmax.f32 %v784, 0.0
    %v958 = vmax.f32 %v786, 0.0
    %v959 = vmax.f32 %v788, 0.0
    %v960 = vmax.f32 %v792, 0.0
    %v961 = vmax.f32 %v794, 0.0
    %v962 = vmax.f32 %v796, 0.0
    %v963 = vmax.f32 %v798, 0.0
    %v964 = vmax.f32 %v802, 0.0
    %v965 = vmax.f32 %v804, 0.0
    %v966 = vmax.f32 %v806, 0.0
    %v967 = vmax.f32 %v808, 0.0
    %v968 = vmax.f32 %v812, 0.0
    %v969 = vmax.f32 %v814, 0.0
    %v970 = vmax.f32 %v816, 0.0
    %v971 = vmax.f32 %v818, 0.0
    %v972 = vmax.f32 %v822, 0.0
    %v973 = vmax.f32 %v824, 0.0
    %v974 = vmax.f32 %v826, 0.0
    %v975 = vmax.f32 %v828, 0.0
    %v976 = vmax.f32 %v832, 0.0
    %v977 = vmax.f32 %v834, 0.0
    %v978 = vmax.f32 %v836, 0.0
    %v979 = vmax.f32 %v838, 0.0
    %v980 = vmax.f32 %v842, 0.0
    %v981 = vmax.f32 %v844, 0.0
    %v982 = vmax.f32 %v846, 0.0
    %v983 = vmax.f32 %v848, 0.0
    %v984 = vmax.f32 %v852, 0.0
    %v985 = vmax.f32 %v854, 0.0
    %v986 = vmax.f32 %v856, 0.0
    %v987 = vmax.f32 %v858, 0.0
    %v988 = vpack.c.bf16 %v862, %v860
    %v989 = vpack.c.bf16 %v863, %v861
    %v990 = vpack.c.bf16 %v866, %v864
    %v991 = vpack.c.bf16 %v867, %v865
    %v992 = vpack.c.bf16 %v870, %v868
    %v993 = vpack.c.bf16 %v871, %v869
    %v994 = vpack.c.bf16 %v874, %v872
    %v995 = vpack.c.bf16 %v875, %v873
    %v996 = vpack.c.bf16 %v878, %v876
    %v997 = vpack.c.bf16 %v879, %v877
    %v998 = vpack.c.bf16 %v882, %v880
    %v999 = vpack.c.bf16 %v883, %v881
    %v1000 = vpack.c.bf16 %v886, %v884
    %v1001 = vpack.c.bf16 %v887, %v885
    %v1002 = vpack.c.bf16 %v890, %v888
    %v1003 = vpack.c.bf16 %v891, %v889
    %v1004 = vpack.c.bf16 %v894, %v892
    %v1005 = vpack.c.bf16 %v895, %v893
    %v1006 = vpack.c.bf16 %v898, %v896
    %v1007 = vpack.c.bf16 %v899, %v897
    %v1008 = vpack.c.bf16 %v902, %v900
    %v1009 = vpack.c.bf16 %v903, %v901
    %v1010 = vpack.c.bf16 %v906, %v904
    %v1011 = vpack.c.bf16 %v907, %v905
    %v1012 = vpack.c.bf16 %v910, %v908
    %v1013 = vpack.c.bf16 %v911, %v909
    %v1014 = vpack.c.bf16 %v914, %v912
    %v1015 = vpack.c.bf16 %v915, %v913
    %v1016 = vpack.c.bf16 %v918, %v916
    %v1017 = vpack.c.bf16 %v919, %v917
    %v1018 = vpack.c.bf16 %v922, %v920
    %v1019 = vpack.c.bf16 %v923, %v921
    %v1020 = vpack.c.bf16 %v926, %v924
    %v1021 = vpack.c.bf16 %v927, %v925
    %v1022 = vpack.c.bf16 %v930, %v928
    %v1023 = vpack.c.bf16 %v931, %v929
    %v1024 = vpack.c.bf16 %v934, %v932
    %v1025 = vpack.c.bf16 %v935, %v933
    %v1026 = vpack.c.bf16 %v938, %v936
    %v1027 = vpack.c.bf16 %v939, %v937
    %v1028 = vpack.c.bf16 %v942, %v940
    %v1029 = vpack.c.bf16 %v943, %v941
    %v1030 = vpack.c.bf16 %v946, %v944
    %v1031 = vpack.c.bf16 %v947, %v945
    %v1032 = vpack.c.bf16 %v950, %v948
    %v1033 = vpack.c.bf16 %v951, %v949
    %v1034 = vpack.c.bf16 %v954, %v952
    %v1035 = vpack.c.bf16 %v955, %v953
    %v1036 = vpack.c.bf16 %v958, %v956
    %v1037 = vpack.c.bf16 %v959, %v957
    %v1038 = vpack.c.bf16 %v962, %v960
    %v1039 = vpack.c.bf16 %v963, %v961
    %v1040 = vpack.c.bf16 %v966, %v964
    %v1041 = vpack.c.bf16 %v967, %v965
    %v1042 = vpack.c.bf16 %v970, %v968
    %v1043 = vpack.c.bf16 %v971, %v969
    %v1044 = vpack.c.bf16 %v974, %v972
    %v1045 = vpack.c.bf16 %v975, %v973
    %v1046 = vpack.c.bf16 %v978, %v976
    %v1047 = vpack.c.bf16 %v979, %v977
    %v1048 = vpack.c.bf16 %v982, %v980
    %v1049 = vpack.c.bf16 %v983, %v981
    %v1050 = vpack.c.bf16 %v986, %v984
    %v1051 = vpack.c.bf16 %v987, %v985
    %v1052 = vld [vmem:[#allocation7] sm:$0xf]
    %v1053 = vld [vmem:[#allocation7 + $0x4] sm:$0xf]
    %v1054 = vld [vmem:[#allocation7 + $0x8] sm:$0xf]
    %v1055 = vld [vmem:[#allocation7 + $0xc] sm:$0xf]
    %v1056 = vld [vmem:[#allocation7 + $0x10] sm:$0xf]
    %v1057 = vld [vmem:[#allocation7 + $0x14] sm:$0xf]
    %v1058 = vld [vmem:[#allocation7 + $0x18] sm:$0xf]
    %v1059 = vld [vmem:[#allocation7 + $0x1c] sm:$0xf]
    %v1060 = vld [vmem:[#allocation7 + $0x20] sm:$0xf]
    %v1061 = vld [vmem:[#allocation7 + $0x24] sm:$0xf]
    %v1062 = vld [vmem:[#allocation7 + $0x28] sm:$0xf]
    %v1063 = vld [vmem:[#allocation7 + $0x2c] sm:$0xf]
    %v1064 = vld [vmem:[#allocation7 + $0x30] sm:$0xf]
    %v1065 = vld [vmem:[#allocation7 + $0x34] sm:$0xf]
    %v1066 = vld [vmem:[#allocation7 + $0x38] sm:$0xf]
    %v1067 = vld [vmem:[#allocation7 + $0x3c] sm:$0xf]
    %v1068 = vld [vmem:[#allocation7 + $0x40] sm:$0xf]
    %v1069 = vld [vmem:[#allocation7 + $0x44] sm:$0xf]
    %v1070 = vld [vmem:[#allocation7 + $0x48] sm:$0xf]
    %v1071 = vld [vmem:[#allocation7 + $0x4c] sm:$0xf]
    %v1072 = vld [vmem:[#allocation7 + $0x50] sm:$0xf]
    %v1073 = vld [vmem:[#allocation7 + $0x54] sm:$0xf]
    %v1074 = vld [vmem:[#allocation7 + $0x58] sm:$0xf]
    %v1075 = vld [vmem:[#allocation7 + $0x5c] sm:$0xf]
    %v1076 = vld [vmem:[#allocation7 + $0x60] sm:$0xf]
    %v1077 = vld [vmem:[#allocation7 + $0x64] sm:$0xf]
    %v1078 = vld [vmem:[#allocation7 + $0x68] sm:$0xf]
    %v1079 = vld [vmem:[#allocation7 + $0x6c] sm:$0xf]
    %v1080 = vld [vmem:[#allocation7 + $0x70] sm:$0xf]
    %v1081 = vld [vmem:[#allocation7 + $0x74] sm:$0xf]
    %v1082 = vld [vmem:[#allocation7 + $0x78] sm:$0xf]
    %v1083 = vld [vmem:[#allocation7 + $0x7c] sm:$0xf]
    %v1116 = vunpack.c.l.b16 %v1052
    %v1117 = vunpack.c.l.b16 %v1053
    %v1118 = vunpack.c.l.b16 %v1054
    %v1119 = vunpack.c.l.b16 %v1055
    %v1120 = vunpack.c.l.b16 %v1056
    %v1121 = vunpack.c.l.b16 %v1057
    %v1122 = vunpack.c.l.b16 %v1058
    %v1123 = vunpack.c.l.b16 %v1059
    %v1124 = vunpack.c.l.b16 %v1060
    %v1125 = vunpack.c.l.b16 %v1061
    %v1126 = vunpack.c.l.b16 %v1062
    %v1127 = vunpack.c.l.b16 %v1063
    %v1128 = vunpack.c.l.b16 %v1064
    %v1129 = vunpack.c.l.b16 %v1065
    %v1130 = vunpack.c.l.b16 %v1066
    %v1131 = vunpack.c.l.b16 %v1067
    %v1132 = vunpack.c.l.b16 %v1068
    %v1133 = vunpack.c.l.b16 %v1069
    %v1134 = vunpack.c.l.b16 %v1070
    %v1135 = vunpack.c.l.b16 %v1071
    %v1136 = vunpack.c.l.b16 %v1072
    %v1137 = vunpack.c.l.b16 %v1073
    %v1138 = vunpack.c.l.b16 %v1074
    %v1139 = vunpack.c.l.b16 %v1075
    %v1140 = vunpack.c.l.b16 %v1076
    %v1141 = vunpack.c.l.b16 %v1077
    %v1142 = vunpack.c.l.b16 %v1078
    %v1143 = vunpack.c.l.b16 %v1079
    %v1144 = vunpack.c.l.b16 %v1080
    %v1145 = vunpack.c.l.b16 %v1081
    %v1146 = vunpack.c.l.b16 %v1082
    %v1147 = vunpack.c.l.b16 %v1083
    %v1148 = vpack.c.b16 %v1117, %v1116
    %v1149 = vpack.c.b16 %v1119, %v1118
    %v1150 = vpack.c.b16 %v1121, %v1120
    %v1151 = vpack.c.b16 %v1123, %v1122
    %v1152 = vpack.c.b16 %v1125, %v1124
    %v1153 = vpack.c.b16 %v1127, %v1126
    %v1154 = vpack.c.b16 %v1129, %v1128
    %v1155 = vpack.c.b16 %v1131, %v1130
    %v1156 = vpack.c.b16 %v1133, %v1132
    %v1157 = vpack.c.b16 %v1135, %v1134
    %v1158 = vpack.c.b16 %v1137, %v1136
    %v1159 = vpack.c.b16 %v1139, %v1138
    %v1160 = vpack.c.b16 %v1141, %v1140
    %v1161 = vpack.c.b16 %v1143, %v1142
    %v1162 = vpack.c.b16 %v1145, %v1144
    %v1163 = vpack.c.b16 %v1147, %v1146
    %1180 = vmatprep.subr.bf16.mxu0 0
    %1181 = vmatpush1.bf16.msra.mxu0 %v1148
    %1182 = vmatprep.subr.bf16.mxu0 0
    %1183 = vmatpush1.bf16.msra.mxu0 %v1149
    %1184 = vmatprep.subr.bf16.mxu0 0
    %1185 = vmatpush1.bf16.msra.mxu0 %v1150
    %1186 = vmatprep.subr.bf16.mxu0 0
    %1187 = vmatpush1.bf16.msra.mxu0 %v1151
    %1188 = vmatprep.subr.bf16.mxu0 0
    %1189 = vmatpush1.bf16.msra.mxu0 %v1152
    %1190 = vmatprep.subr.bf16.mxu0 0
    %1191 = vmatpush1.bf16.msra.mxu0 %v1153
    %1192 = vmatprep.subr.bf16.mxu0 0
    %1193 = vmatpush1.bf16.msra.mxu0 %v1154
    %1194 = vmatprep.subr.bf16.mxu0 0
    %1195 = vmatpush1.bf16.msra.mxu0 %v1155
    %1196 = vmatprep.subr.bf16.mxu0 0
    %1197 = vmatpush1.bf16.msra.mxu0 %v1156
    %1198 = vmatprep.subr.bf16.mxu0 0
    %1199 = vmatpush1.bf16.msra.mxu0 %v1157
    %1200 = vmatprep.subr.bf16.mxu0 0
    %1201 = vmatpush1.bf16.msra.mxu0 %v1158
    %1202 = vmatprep.subr.bf16.mxu0 0
    %1203 = vmatpush1.bf16.msra.mxu0 %v1159
    %1204 = vmatprep.subr.bf16.mxu0 0
    %1205 = vmatpush1.bf16.msra.mxu0 %v1160
    %1206 = vmatprep.subr.bf16.mxu0 0
    %1207 = vmatpush1.bf16.msra.mxu0 %v1161
    %1208 = vmatprep.subr.bf16.mxu0 0
    %1209 = vmatpush1.bf16.msra.mxu0 %v1162
    %1210 = vmatprep.subr.bf16.mxu0 0
    %1211 = vmatpush1.bf16.msra.mxu0 %v1163
    %1212 = vmatprep.mubr.bf16.mxu0 %v989
    %1213 = vmatmul.mubr.bf16.gmra.mrb[0].mxu0 %v988
    %v1214 = vpop.f32.mrb[0].mxu0
    %v1215 = vadd.f32 0.0, %v1214
    %v1216 = vpop.f32.mrb[0].mxu0
    %v1217 = vpop.f32.mrb[0].mxu0
    %v1218 = vadd.f32 0.0, %v1217
    %v1219 = vpop.f32.mrb[0].mxu0
    %1220 = vmatprep.mubr.bf16.mxu0 %v991
    %1221 = vmatmul.mubr.bf16.gmra.mrb[0].mxu0 %v990
    %v1222 = vpop.f32.mrb[0].mxu0
    %v1223 = vadd.f32 0.0, %v1222
    %v1224 = vpop.f32.mrb[0].mxu0
    %v1225 = vpop.f32.mrb[0].mxu0
    %v1226 = vadd.f32 0.0, %v1225
    %v1227 = vpop.f32.mrb[0].mxu0
    %1228 = vmatprep.mubr.bf16.mxu0 %v993
    %1229 = vmatmul.mubr.bf16.gmra.mrb[0].mxu0 %v992
    %v1230 = vpop.f32.mrb[0].mxu0
    %v1231 = vadd.f32 0.0, %v1230
    %v1232 = vpop.f32.mrb[0].mxu0
    %v1233 = vpop.f32.mrb[0].mxu0
    %v1234 = vadd.f32 0.0, %v1233
    %v1235 = vpop.f32.mrb[0].mxu0
    %1236 = vmatprep.mubr.bf16.mxu0 %v995
    %1237 = vmatmul.mubr.bf16.gmra.mrb[0].mxu0 %v994
    %v1238 = vpop.f32.mrb[0].mxu0
    %v1239 = vadd.f32 0.0, %v1238
    %v1240 = vpop.f32.mrb[0].mxu0
    %v1241 = vpop.f32.mrb[0].mxu0
    %v1242 = vadd.f32 0.0, %v1241
    %v1243 = vpop.f32.mrb[0].mxu0
    %1244 = vmatprep.mubr.bf16.mxu0 %v997
    %1245 = vmatmul.mubr.bf16.gmra.mrb[0].mxu0 %v996
    %v1246 = vpop.f32.mrb[0].mxu0
    %v1247 = vadd.f32 0.0, %v1246
    %v1248 = vpop.f32.mrb[0].mxu0
    %v1249 = vpop.f32.mrb[0].mxu0
    %v1250 = vadd.f32 0.0, %v1249
    %v1251 = vpop.f32.mrb[0].mxu0
    %1252 = vmatprep.mubr.bf16.mxu0 %v999
    %1253 = vmatmul.mubr.bf16.gmra.mrb[0].mxu0 %v998
    %v1254 = vpop.f32.mrb[0].mxu0
    %v1255 = vadd.f32 0.0, %v1254
    %v1256 = vpop.f32.mrb[0].mxu0
    %v1257 = vpop.f32.mrb[0].mxu0
    %v1258 = vadd.f32 0.0, %v1257
    %v1259 = vpop.f32.mrb[0].mxu0
    %1260 = vmatprep.mubr.bf16.mxu0 %v1001
    %1261 = vmatmul.mubr.bf16.gmra.mrb[0].mxu0 %v1000
    %v1262 = vpop.f32.mrb[0].mxu0
    %v1263 = vadd.f32 0.0, %v1262
    %v1264 = vpop.f32.mrb[0].mxu0
    %v1265 = vpop.f32.mrb[0].mxu0
    %v1266 = vadd.f32 0.0, %v1265
    %v1267 = vpop.f32.mrb[0].mxu0
    %1268 = vmatprep.mubr.bf16.mxu0 %v1003
    %1269 = vmatmul.mubr.bf16.gmra.mrb[0].mxu0 %v1002
    %v1270 = vpop.f32.mrb[0].mxu0
    %v1271 = vadd.f32 0.0, %v1270
    %v1272 = vpop.f32.mrb[0].mxu0
    %v1273 = vpop.f32.mrb[0].mxu0
    %v1274 = vadd.f32 0.0, %v1273
    %v1275 = vpop.f32.mrb[0].mxu0
    %1276 = vmatprep.mubr.bf16.mxu0 %v1005
    %1277 = vmatmul.mubr.bf16.gmra.mrb[0].mxu0 %v1004
    %v1278 = vpop.f32.mrb[0].mxu0
    %v1279 = vadd.f32 0.0, %v1278
    %v1280 = vpop.f32.mrb[0].mxu0
    %v1281 = vpop.f32.mrb[0].mxu0
    %v1282 = vadd.f32 0.0, %v1281
    %v1283 = vpop.f32.mrb[0].mxu0
    %1284 = vmatprep.mubr.bf16.mxu0 %v1007
    %1285 = vmatmul.mubr.bf16.gmra.mrb[0].mxu0 %v1006
    %v1286 = vpop.f32.mrb[0].mxu0
    %v1287 = vadd.f32 0.0, %v1286
    %v1288 = vpop.f32.mrb[0].mxu0
    %v1289 = vpop.f32.mrb[0].mxu0
    %v1290 = vadd.f32 0.0, %v1289
    %v1291 = vpop.f32.mrb[0].mxu0
    %1292 = vmatprep.mubr.bf16.mxu0 %v1009
    %1293 = vmatmul.mubr.bf16.gmra.mrb[0].mxu0 %v1008
    %v1294 = vpop.f32.mrb[0].mxu0
    %v1295 = vadd.f32 0.0, %v1294
    %v1296 = vpop.f32.mrb[0].mxu0
    %v1297 = vpop.f32.mrb[0].mxu0
    %v1298 = vadd.f32 0.0, %v1297
    %v1299 = vpop.f32.mrb[0].mxu0
    %1300 = vmatprep.mubr.bf16.mxu0 %v1011
    %1301 = vmatmul.mubr.bf16.gmra.mrb[0].mxu0 %v1010
    %v1302 = vpop.f32.mrb[0].mxu0
    %v1303 = vadd.f32 0.0, %v1302
    %v1304 = vpop.f32.mrb[0].mxu0
    %v1305 = vpop.f32.mrb[0].mxu0
    %v1306 = vadd.f32 0.0, %v1305
    %v1307 = vpop.f32.mrb[0].mxu0
    %1308 = vmatprep.mubr.bf16.mxu0 %v1013
    %1309 = vmatmul.mubr.bf16.gmra.mrb[0].mxu0 %v1012
    %v1310 = vpop.f32.mrb[0].mxu0
    %v1311 = vadd.f32 0.0, %v1310
    %v1312 = vpop.f32.mrb[0].mxu0
    %v1313 = vpop.f32.mrb[0].mxu0
    %v1314 = vadd.f32 0.0, %v1313
    %v1315 = vpop.f32.mrb[0].mxu0
    %1316 = vmatprep.mubr.bf16.mxu0 %v1015
    %1317 = vmatmul.mubr.bf16.gmra.mrb[0].mxu0 %v1014
    %v1318 = vpop.f32.mrb[0].mxu0
    %v1319 = vadd.f32 0.0, %v1318
    %v1320 = vpop.f32.mrb[0].mxu0
    %v1321 = vpop.f32.mrb[0].mxu0
    %v1322 = vadd.f32 0.0, %v1321
    %v1323 = vpop.f32.mrb[0].mxu0
    %1324 = vmatprep.mubr.bf16.mxu0 %v1017
    %1325 = vmatmul.mubr.bf16.gmra.mrb[0].mxu0 %v1016
    %v1326 = vpop.f32.mrb[0].mxu0
    %v1327 = vadd.f32 0.0, %v1326
    %v1328 = vpop.f32.mrb[0].mxu0
    %v1329 = vpop.f32.mrb[0].mxu0
    %v1330 = vadd.f32 0.0, %v1329
    %v1331 = vpop.f32.mrb[0].mxu0
    %1332 = vmatprep.mubr.bf16.mxu0 %v1019
    %1333 = vmatmul.mubr.bf16.gmra.mrb[0].mxu0 %v1018
    %v1334 = vpop.f32.mrb[0].mxu0
    %v1335 = vadd.f32 0.0, %v1334
    %v1336 = vpop.f32.mrb[0].mxu0
    %v1337 = vpop.f32.mrb[0].mxu0
    %v1338 = vadd.f32 0.0, %v1337
    %v1339 = vpop.f32.mrb[0].mxu0
    %1340 = vmatprep.mubr.bf16.mxu0 %v1021
    %1341 = vmatmul.mubr.bf16.gmra.mrb[0].mxu0 %v1020
    %v1342 = vpop.f32.mrb[0].mxu0
    %v1343 = vadd.f32 0.0, %v1342
    %v1344 = vpop.f32.mrb[0].mxu0
    %v1345 = vpop.f32.mrb[0].mxu0
    %v1346 = vadd.f32 0.0, %v1345
    %v1347 = vpop.f32.mrb[0].mxu0
    %1348 = vmatprep.mubr.bf16.mxu0 %v1023
    %1349 = vmatmul.mubr.bf16.gmra.mrb[0].mxu0 %v1022
    %v1350 = vpop.f32.mrb[0].mxu0
    %v1351 = vadd.f32 0.0, %v1350
    %v1352 = vpop.f32.mrb[0].mxu0
    %v1353 = vpop.f32.mrb[0].mxu0
    %v1354 = vadd.f32 0.0, %v1353
    %v1355 = vpop.f32.mrb[0].mxu0
    %1356 = vmatprep.mubr.bf16.mxu0 %v1025
    %1357 = vmatmul.mubr.bf16.gmra.mrb[0].mxu0 %v1024
    %v1358 = vpop.f32.mrb[0].mxu0
    %v1359 = vadd.f32 0.0, %v1358
    %v1360 = vpop.f32.mrb[0].mxu0
    %v1361 = vpop.f32.mrb[0].mxu0
    %v1362 = vadd.f32 0.0, %v1361
    %v1363 = vpop.f32.mrb[0].mxu0
    %1364 = vmatprep.mubr.bf16.mxu0 %v1027
    %1365 = vmatmul.mubr.bf16.gmra.mrb[0].mxu0 %v1026
    %v1366 = vpop.f32.mrb[0].mxu0
    %v1367 = vadd.f32 0.0, %v1366
    %v1368 = vpop.f32.mrb[0].mxu0
    %v1369 = vpop.f32.mrb[0].mxu0
    %v1370 = vadd.f32 0.0, %v1369
    %v1371 = vpop.f32.mrb[0].mxu0
    %1372 = vmatprep.mubr.bf16.mxu0 %v1029
    %1373 = vmatmul.mubr.bf16.gmra.mrb[0].mxu0 %v1028
    %v1374 = vpop.f32.mrb[0].mxu0
    %v1375 = vadd.f32 0.0, %v1374
    %v1376 = vpop.f32.mrb[0].mxu0
    %v1377 = vpop.f32.mrb[0].mxu0
    %v1378 = vadd.f32 0.0, %v1377
    %v1379 = vpop.f32.mrb[0].mxu0
    %1380 = vmatprep.mubr.bf16.mxu0 %v1031
    %1381 = vmatmul.mubr.bf16.gmra.mrb[0].mxu0 %v1030
    %v1382 = vpop.f32.mrb[0].mxu0
    %v1383 = vadd.f32 0.0, %v1382
    %v1384 = vpop.f32.mrb[0].mxu0
    %v1385 = vpop.f32.mrb[0].mxu0
    %v1386 = vadd.f32 0.0, %v1385
    %v1387 = vpop.f32.mrb[0].mxu0
    %1388 = vmatprep.mubr.bf16.mxu0 %v1033
    %1389 = vmatmul.mubr.bf16.gmra.mrb[0].mxu0 %v1032
    %v1390 = vpop.f32.mrb[0].mxu0
    %v1391 = vadd.f32 0.0, %v1390
    %v1392 = vpop.f32.mrb[0].mxu0
    %v1393 = vpop.f32.mrb[0].mxu0
    %v1394 = vadd.f32 0.0, %v1393
    %v1395 = vpop.f32.mrb[0].mxu0
    %1396 = vmatprep.mubr.bf16.mxu0 %v1035
    %1397 = vmatmul.mubr.bf16.gmra.mrb[0].mxu0 %v1034
    %v1398 = vpop.f32.mrb[0].mxu0
    %v1399 = vadd.f32 0.0, %v1398
    %v1400 = vpop.f32.mrb[0].mxu0
    %v1401 = vpop.f32.mrb[0].mxu0
    %v1402 = vadd.f32 0.0, %v1401
    %v1403 = vpop.f32.mrb[0].mxu0
    %1404 = vmatprep.mubr.bf16.mxu0 %v1037
    %1405 = vmatmul.mubr.bf16.gmra.mrb[0].mxu0 %v1036
    %v1406 = vpop.f32.mrb[0].mxu0
    %v1407 = vadd.f32 0.0, %v1406
    %v1408 = vpop.f32.mrb[0].mxu0
    %v1409 = vpop.f32.mrb[0].mxu0
    %v1410 = vadd.f32 0.0, %v1409
    %v1411 = vpop.f32.mrb[0].mxu0
    %1412 = vmatprep.mubr.bf16.mxu0 %v1039
    %1413 = vmatmul.mubr.bf16.gmra.mrb[0].mxu0 %v1038
    %v1414 = vpop.f32.mrb[0].mxu0
    %v1415 = vadd.f32 0.0, %v1414
    %v1416 = vpop.f32.mrb[0].mxu0
    %v1417 = vpop.f32.mrb[0].mxu0
    %v1418 = vadd.f32 0.0, %v1417
    %v1419 = vpop.f32.mrb[0].mxu0
    %1420 = vmatprep.mubr.bf16.mxu0 %v1041
    %1421 = vmatmul.mubr.bf16.gmra.mrb[0].mxu0 %v1040
    %v1422 = vpop.f32.mrb[0].mxu0
    %v1423 = vadd.f32 0.0, %v1422
    %v1424 = vpop.f32.mrb[0].mxu0
    %v1425 = vpop.f32.mrb[0].mxu0
    %v1426 = vadd.f32 0.0, %v1425
    %v1427 = vpop.f32.mrb[0].mxu0
    %1428 = vmatprep.mubr.bf16.mxu0 %v1043
    %1429 = vmatmul.mubr.bf16.gmra.mrb[0].mxu0 %v1042
    %v1430 = vpop.f32.mrb[0].mxu0
    %v1431 = vadd.f32 0.0, %v1430
    %v1432 = vpop.f32.mrb[0].mxu0
    %v1433 = vpop.f32.mrb[0].mxu0
    %v1434 = vadd.f32 0.0, %v1433
    %v1435 = vpop.f32.mrb[0].mxu0
    %1436 = vmatprep.mubr.bf16.mxu0 %v1045
    %1437 = vmatmul.mubr.bf16.gmra.mrb[0].mxu0 %v1044
    %v1438 = vpop.f32.mrb[0].mxu0
    %v1439 = vadd.f32 0.0, %v1438
    %v1440 = vpop.f32.mrb[0].mxu0
    %v1441 = vpop.f32.mrb[0].mxu0
    %v1442 = vadd.f32 0.0, %v1441
    %v1443 = vpop.f32.mrb[0].mxu0
    %1444 = vmatprep.mubr.bf16.mxu0 %v1047
    %1445 = vmatmul.mubr.bf16.gmra.mrb[0].mxu0 %v1046
    %v1446 = vpop.f32.mrb[0].mxu0
    %v1447 = vadd.f32 0.0, %v1446
    %v1448 = vpop.f32.mrb[0].mxu0
    %v1449 = vpop.f32.mrb[0].mxu0
    %v1450 = vadd.f32 0.0, %v1449
    %v1451 = vpop.f32.mrb[0].mxu0
    %1452 = vmatprep.mubr.bf16.mxu0 %v1049
    %1453 = vmatmul.mubr.bf16.gmra.mrb[0].mxu0 %v1048
    %v1454 = vpop.f32.mrb[0].mxu0
    %v1455 = vadd.f32 0.0, %v1454
    %v1456 = vpop.f32.mrb[0].mxu0
    %v1457 = vpop.f32.mrb[0].mxu0
    %v1458 = vadd.f32 0.0, %v1457
    %v1459 = vpop.f32.mrb[0].mxu0
    %1460 = vmatprep.mubr.bf16.mxu0 %v1051
    %1461 = vmatmul.mubr.bf16.gmra.mrb[0].mxu0 %v1050
    %v1462 = vpop.f32.mrb[0].mxu0
    %v1463 = vadd.f32 0.0, %v1462
    %v1464 = vpop.f32.mrb[0].mxu0
    %v1465 = vpop.f32.mrb[0].mxu0
    %v1466 = vadd.f32 0.0, %v1465
    %v1467 = vpop.f32.mrb[0].mxu0
    %1468 = vdwg.mxu0
    %v1469 = vld [vmem:[#allocation7 + $0x80] sm:$0xf]
    %v1470 = vld [vmem:[#allocation7 + $0x84] sm:$0xf]
    %v1471 = vld [vmem:[#allocation7 + $0x88] sm:$0xf]
    %v1472 = vld [vmem:[#allocation7 + $0x8c] sm:$0xf]
    %v1473 = vld [vmem:[#allocation7 + $0x90] sm:$0xf]
    %v1474 = vld [vmem:[#allocation7 + $0x94] sm:$0xf]
    %v1475 = vld [vmem:[#allocation7 + $0x98] sm:$0xf]
    %v1476 = vld [vmem:[#allocation7 + $0x9c] sm:$0xf]
    %v1477 = vld [vmem:[#allocation7 + $0xa0] sm:$0xf]
    %v1478 = vld [vmem:[#allocation7 + $0xa4] sm:$0xf]
    %v1479 = vld [vmem:[#allocation7 + $0xa8] sm:$0xf]
    %v1480 = vld [vmem:[#allocation7 + $0xac] sm:$0xf]
    %v1481 = vld [vmem:[#allocation7 + $0xb0] sm:$0xf]
    %v1482 = vld [vmem:[#allocation7 + $0xb4] sm:$0xf]
    %v1483 = vld [vmem:[#allocation7 + $0xb8] sm:$0xf]
    %v1484 = vld [vmem:[#allocation7 + $0xbc] sm:$0xf]
    %v1485 = vld [vmem:[#allocation7 + $0xc0] sm:$0xf]
    %v1486 = vld [vmem:[#allocation7 + $0xc4] sm:$0xf]
    %v1487 = vld [vmem:[#allocation7 + $0xc8] sm:$0xf]
    %v1488 = vld [vmem:[#allocation7 + $0xcc] sm:$0xf]
    %v1489 = vld [vmem:[#allocation7 + $0xd0] sm:$0xf]
    %v1490 = vld [vmem:[#allocation7 + $0xd4] sm:$0xf]
    %v1491 = vld [vmem:[#allocation7 + $0xd8] sm:$0xf]
    %v1492 = vld [vmem:[#allocation7 + $0xdc] sm:$0xf]
    %v1493 = vld [vmem:[#allocation7 + $0xe0] sm:$0xf]
    %v1494 = vld [vmem:[#allocation7 + $0xe4] sm:$0xf]
    %v1495 = vld [vmem:[#allocation7 + $0xe8] sm:$0xf]
    %v1496 = vld [vmem:[#allocation7 + $0xec] sm:$0xf]
    %v1497 = vld [vmem:[#allocation7 + $0xf0] sm:$0xf]
    %v1498 = vld [vmem:[#allocation7 + $0xf4] sm:$0xf]
    %v1499 = vld [vmem:[#allocation7 + $0xf8] sm:$0xf]
    %v1500 = vld [vmem:[#allocation7 + $0xfc] sm:$0xf]
    %v1533 = vunpack.c.l.b16 %v1469
    %v1534 = vunpack.c.l.b16 %v1470
    %v1535 = vunpack.c.l.b16 %v1471
    %v1536 = vunpack.c.l.b16 %v1472
    %v1537 = vunpack.c.l.b16 %v1473
    %v1538 = vunpack.c.l.b16 %v1474
    %v1539 = vunpack.c.l.b16 %v1475
    %v1540 = vunpack.c.l.b16 %v1476
    %v1541 = vunpack.c.l.b16 %v1477
    %v1542 = vunpack.c.l.b16 %v1478
    %v1543 = vunpack.c.l.b16 %v1479
    %v1544 = vunpack.c.l.b16 %v1480
    %v1545 = vunpack.c.l.b16 %v1481
    %v1546 = vunpack.c.l.b16 %v1482
    %v1547 = vunpack.c.l.b16 %v1483
    %v1548 = vunpack.c.l.b16 %v1484
    %v1549 = vunpack.c.l.b16 %v1485
    %v1550 = vunpack.c.l.b16 %v1486
    %v1551 = vunpack.c.l.b16 %v1487
    %v1552 = vunpack.c.l.b16 %v1488
    %v1553 = vunpack.c.l.b16 %v1489
    %v1554 = vunpack.c.l.b16 %v1490
    %v1555 = vunpack.c.l.b16 %v1491
    %v1556 = vunpack.c.l.b16 %v1492
    %v1557 = vunpack.c.l.b16 %v1493
    %v1558 = vunpack.c.l.b16 %v1494
    %v1559 = vunpack.c.l.b16 %v1495
    %v1560 = vunpack.c.l.b16 %v1496
    %v1561 = vunpack.c.l.b16 %v1497
    %v1562 = vunpack.c.l.b16 %v1498
    %v1563 = vunpack.c.l.b16 %v1499
    %v1564 = vunpack.c.l.b16 %v1500
    %v1565 = vpack.c.b16 %v1534, %v1533
    %v1566 = vpack.c.b16 %v1536, %v1535
    %v1567 = vpack.c.b16 %v1538, %v1537
    %v1568 = vpack.c.b16 %v1540, %v1539
    %v1569 = vpack.c.b16 %v1542, %v1541
    %v1570 = vpack.c.b16 %v1544, %v1543
    %v1571 = vpack.c.b16 %v1546, %v1545
    %v1572 = vpack.c.b16 %v1548, %v1547
    %v1573 = vpack.c.b16 %v1550, %v1549
    %v1574 = vpack.c.b16 %v1552, %v1551
    %v1575 = vpack.c.b16 %v1554, %v1553
    %v1576 = vpack.c.b16 %v1556, %v1555
    %v1577 = vpack.c.b16 %v1558, %v1557
    %v1578 = vpack.c.b16 %v1560, %v1559
    %v1579 = vpack.c.b16 %v1562, %v1561
    %v1580 = vpack.c.b16 %v1564, %v1563
    %1597 = vmatprep.subr.bf16.mxu0 0
    %1598 = vmatpush1.bf16.msra.mxu0 %v1565
    %1599 = vmatprep.subr.bf16.mxu0 0
    %1600 = vmatpush1.bf16.msra.mxu0 %v1566
    %1601 = vmatprep.subr.bf16.mxu0 0
    %1602 = vmatpush1.bf16.msra.mxu0 %v1567
    %1603 = vmatprep.subr.bf16.mxu0 0
    %1604 = vmatpush1.bf16.msra.mxu0 %v1568
    %1605 = vmatprep.subr.bf16.mxu0 0
    %1606 = vmatpush1.bf16.msra.mxu0 %v1569
    %1607 = vmatprep.subr.bf16.mxu0 0
    %1608 = vmatpush1.bf16.msra.mxu0 %v1570
    %1609 = vmatprep.subr.bf16.mxu0 0
    %1610 = vmatpush1.bf16.msra.mxu0 %v1571
    %1611 = vmatprep.subr.bf16.mxu0 0
    %1612 = vmatpush1.bf16.msra.mxu0 %v1572
    %1613 = vmatprep.subr.bf16.mxu0 0
    %1614 = vmatpush1.bf16.msra.mxu0 %v1573
    %1615 = vmatprep.subr.bf16.mxu0 0
    %1616 = vmatpush1.bf16.msra.mxu0 %v1574
    %1617 = vmatprep.subr.bf16.mxu0 0
    %1618 = vmatpush1.bf16.msra.mxu0 %v1575
    %1619 = vmatprep.subr.bf16.mxu0 0
    %1620 = vmatpush1.bf16.msra.mxu0 %v1576
    %1621 = vmatprep.subr.bf16.mxu0 0
    %1622 = vmatpush1.bf16.msra.mxu0 %v1577
    %1623 = vmatprep.subr.bf16.mxu0 0
    %1624 = vmatpush1.bf16.msra.mxu0 %v1578
    %1625 = vmatprep.subr.bf16.mxu0 0
    %1626 = vmatpush1.bf16.msra.mxu0 %v1579
    %1627 = vmatprep.subr.bf16.mxu0 0
    %1628 = vmatpush1.bf16.msra.mxu0 %v1580
    %1629 = vmatprep.mubr.bf16.mxu0 %v989
    %1630 = vmatmul.mubr.bf16.gmra.mrb[0].mxu0 %v988
    %v1631 = vpop.f32.mrb[0].mxu0
    %v1632 = vadd.f32 0.0, %v1631
    %v1633 = vpop.f32.mrb[0].mxu0
    %v1634 = vpop.f32.mrb[0].mxu0
    %v1635 = vadd.f32 0.0, %v1634
    %v1636 = vpop.f32.mrb[0].mxu0
    %1637 = vmatprep.mubr.bf16.mxu0 %v991
    %1638 = vmatmul.mubr.bf16.gmra.mrb[0].mxu0 %v990
    %v1639 = vpop.f32.mrb[0].mxu0
    %v1640 = vadd.f32 0.0, %v1639
    %v1641 = vpop.f32.mrb[0].mxu0
    %v1642 = vpop.f32.mrb[0].mxu0
    %v1643 = vadd.f32 0.0, %v1642
    %v1644 = vpop.f32.mrb[0].mxu0
    %1645 = vmatprep.mubr.bf16.mxu0 %v993
    %1646 = vmatmul.mubr.bf16.gmra.mrb[0].mxu0 %v992
    %v1647 = vpop.f32.mrb[0].mxu0
    %v1648 = vadd.f32 0.0, %v1647
    %v1649 = vpop.f32.mrb[0].mxu0
    %v1650 = vpop.f32.mrb[0].mxu0
    %v1651 = vadd.f32 0.0, %v1650
    %v1652 = vpop.f32.mrb[0].mxu0
    %1653 = vmatprep.mubr.bf16.mxu0 %v995
    %1654 = vmatmul.mubr.bf16.gmra.mrb[0].mxu0 %v994
    %v1655 = vpop.f32.mrb[0].mxu0
    %v1656 = vadd.f32 0.0, %v1655
    %v1657 = vpop.f32.mrb[0].mxu0
    %v1658 = vpop.f32.mrb[0].mxu0
    %v1659 = vadd.f32 0.0, %v1658
    %v1660 = vpop.f32.mrb[0].mxu0
    %1661 = vmatprep.mubr.bf16.mxu0 %v997
    %1662 = vmatmul.mubr.bf16.gmra.mrb[0].mxu0 %v996
    %v1663 = vpop.f32.mrb[0].mxu0
    %v1664 = vadd.f32 0.0, %v1663
    %v1665 = vpop.f32.mrb[0].mxu0
    %v1666 = vpop.f32.mrb[0].mxu0
    %v1667 = vadd.f32 0.0, %v1666
    %v1668 = vpop.f32.mrb[0].mxu0
    %1669 = vmatprep.mubr.bf16.mxu0 %v999
    %1670 = vmatmul.mubr.bf16.gmra.mrb[0].mxu0 %v998
    %v1671 = vpop.f32.mrb[0].mxu0
    %v1672 = vadd.f32 0.0, %v1671
    %v1673 = vpop.f32.mrb[0].mxu0
    %v1674 = vpop.f32.mrb[0].mxu0
    %v1675 = vadd.f32 0.0, %v1674
    %v1676 = vpop.f32.mrb[0].mxu0
    %1677 = vmatprep.mubr.bf16.mxu0 %v1001
    %1678 = vmatmul.mubr.bf16.gmra.mrb[0].mxu0 %v1000
    %v1679 = vpop.f32.mrb[0].mxu0
    %v1680 = vadd.f32 0.0, %v1679
    %v1681 = vpop.f32.mrb[0].mxu0
    %v1682 = vpop.f32.mrb[0].mxu0
    %v1683 = vadd.f32 0.0, %v1682
    %v1684 = vpop.f32.mrb[0].mxu0
    %1685 = vmatprep.mubr.bf16.mxu0 %v1003
    %1686 = vmatmul.mubr.bf16.gmra.mrb[0].mxu0 %v1002
    %v1687 = vpop.f32.mrb[0].mxu0
    %v1688 = vadd.f32 0.0, %v1687
    %v1689 = vpop.f32.mrb[0].mxu0
    %v1690 = vpop.f32.mrb[0].mxu0
    %v1691 = vadd.f32 0.0, %v1690
    %v1692 = vpop.f32.mrb[0].mxu0
    %1693 = vmatprep.mubr.bf16.mxu0 %v1005
    %1694 = vmatmul.mubr.bf16.gmra.mrb[0].mxu0 %v1004
    %v1695 = vpop.f32.mrb[0].mxu0
    %v1696 = vadd.f32 0.0, %v1695
    %v1697 = vpop.f32.mrb[0].mxu0
    %v1698 = vpop.f32.mrb[0].mxu0
    %v1699 = vadd.f32 0.0, %v1698
    %v1700 = vpop.f32.mrb[0].mxu0
    %1701 = vmatprep.mubr.bf16.mxu0 %v1007
    %1702 = vmatmul.mubr.bf16.gmra.mrb[0].mxu0 %v1006
    %v1703 = vpop.f32.mrb[0].mxu0
    %v1704 = vadd.f32 0.0, %v1703
    %v1705 = vpop.f32.mrb[0].mxu0
    %v1706 = vpop.f32.mrb[0].mxu0
    %v1707 = vadd.f32 0.0, %v1706
    %v1708 = vpop.f32.mrb[0].mxu0
    %1709 = vmatprep.mubr.bf16.mxu0 %v1009
    %1710 = vmatmul.mubr.bf16.gmra.mrb[0].mxu0 %v1008
    %v1711 = vpop.f32.mrb[0].mxu0
    %v1712 = vadd.f32 0.0, %v1711
    %v1713 = vpop.f32.mrb[0].mxu0
    %v1714 = vpop.f32.mrb[0].mxu0
    %v1715 = vadd.f32 0.0, %v1714
    %v1716 = vpop.f32.mrb[0].mxu0
    %1717 = vmatprep.mubr.bf16.mxu0 %v1011
    %1718 = vmatmul.mubr.bf16.gmra.mrb[0].mxu0 %v1010
    %v1719 = vpop.f32.mrb[0].mxu0
    %v1720 = vadd.f32 0.0, %v1719
    %v1721 = vpop.f32.mrb[0].mxu0
    %v1722 = vpop.f32.mrb[0].mxu0
    %v1723 = vadd.f32 0.0, %v1722
    %v1724 = vpop.f32.mrb[0].mxu0
    %1725 = vmatprep.mubr.bf16.mxu0 %v1013
    %1726 = vmatmul.mubr.bf16.gmra.mrb[0].mxu0 %v1012
    %v1727 = vpop.f32.mrb[0].mxu0
    %v1728 = vadd.f32 0.0, %v1727
    %v1729 = vpop.f32.mrb[0].mxu0
    %v1730 = vpop.f32.mrb[0].mxu0
    %v1731 = vadd.f32 0.0, %v1730
    %v1732 = vpop.f32.mrb[0].mxu0
    %1733 = vmatprep.mubr.bf16.mxu0 %v1015
    %1734 = vmatmul.mubr.bf16.gmra.mrb[0].mxu0 %v1014
    %v1735 = vpop.f32.mrb[0].mxu0
    %v1736 = vadd.f32 0.0, %v1735
    %v1737 = vpop.f32.mrb[0].mxu0
    %v1738 = vpop.f32.mrb[0].mxu0
    %v1739 = vadd.f32 0.0, %v1738
    %v1740 = vpop.f32.mrb[0].mxu0
    %1741 = vmatprep.mubr.bf16.mxu0 %v1017
    %1742 = vmatmul.mubr.bf16.gmra.mrb[0].mxu0 %v1016
    %v1743 = vpop.f32.mrb[0].mxu0
    %v1744 = vadd.f32 0.0, %v1743
    %v1745 = vpop.f32.mrb[0].mxu0
    %v1746 = vpop.f32.mrb[0].mxu0
    %v1747 = vadd.f32 0.0, %v1746
    %v1748 = vpop.f32.mrb[0].mxu0
    %1749 = vmatprep.mubr.bf16.mxu0 %v1019
    %1750 = vmatmul.mubr.bf16.gmra.mrb[0].mxu0 %v1018
    %v1751 = vpop.f32.mrb[0].mxu0
    %v1752 = vadd.f32 0.0, %v1751
    %v1753 = vpop.f32.mrb[0].mxu0
    %v1754 = vpop.f32.mrb[0].mxu0
    %v1755 = vadd.f32 0.0, %v1754
    %v1756 = vpop.f32.mrb[0].mxu0
    %1757 = vmatprep.mubr.bf16.mxu0 %v1021
    %1758 = vmatmul.mubr.bf16.gmra.mrb[0].mxu0 %v1020
    %v1759 = vpop.f32.mrb[0].mxu0
    %v1760 = vadd.f32 0.0, %v1759
    %v1761 = vpop.f32.mrb[0].mxu0
    %v1762 = vpop.f32.mrb[0].mxu0
    %v1763 = vadd.f32 0.0, %v1762
    %v1764 = vpop.f32.mrb[0].mxu0
    %1765 = vmatprep.mubr.bf16.mxu0 %v1023
    %1766 = vmatmul.mubr.bf16.gmra.mrb[0].mxu0 %v1022
    %v1767 = vpop.f32.mrb[0].mxu0
    %v1768 = vadd.f32 0.0, %v1767
    %v1769 = vpop.f32.mrb[0].mxu0
    %v1770 = vpop.f32.mrb[0].mxu0
    %v1771 = vadd.f32 0.0, %v1770
    %v1772 = vpop.f32.mrb[0].mxu0
    %1773 = vmatprep.mubr.bf16.mxu0 %v1025
    %1774 = vmatmul.mubr.bf16.gmra.mrb[0].mxu0 %v1024
    %v1775 = vpop.f32.mrb[0].mxu0
    %v1776 = vadd.f32 0.0, %v1775
    %v1777 = vpop.f32.mrb[0].mxu0
    %v1778 = vpop.f32.mrb[0].mxu0
    %v1779 = vadd.f32 0.0, %v1778
    %v1780 = vpop.f32.mrb[0].mxu0
    %1781 = vmatprep.mubr.bf16.mxu0 %v1027
    %1782 = vmatmul.mubr.bf16.gmra.mrb[0].mxu0 %v1026
    %v1783 = vpop.f32.mrb[0].mxu0
    %v1784 = vadd.f32 0.0, %v1783
    %v1785 = vpop.f32.mrb[0].mxu0
    %v1786 = vpop.f32.mrb[0].mxu0
    %v1787 = vadd.f32 0.0, %v1786
    %v1788 = vpop.f32.mrb[0].mxu0
    %1789 = vmatprep.mubr.bf16.mxu0 %v1029
    %1790 = vmatmul.mubr.bf16.gmra.mrb[0].mxu0 %v1028
    %v1791 = vpop.f32.mrb[0].mxu0
    %v1792 = vadd.f32 0.0, %v1791
    %v1793 = vpop.f32.mrb[0].mxu0
    %v1794 = vpop.f32.mrb[0].mxu0
    %v1795 = vadd.f32 0.0, %v1794
    %v1796 = vpop.f32.mrb[0].mxu0
    %1797 = vmatprep.mubr.bf16.mxu0 %v1031
    %1798 = vmatmul.mubr.bf16.gmra.mrb[0].mxu0 %v1030
    %v1799 = vpop.f32.mrb[0].mxu0
    %v1800 = vadd.f32 0.0, %v1799
    %v1801 = vpop.f32.mrb[0].mxu0
    %v1802 = vpop.f32.mrb[0].mxu0
    %v1803 = vadd.f32 0.0, %v1802
    %v1804 = vpop.f32.mrb[0].mxu0
    %1805 = vmatprep.mubr.bf16.mxu0 %v1033
    %1806 = vmatmul.mubr.bf16.gmra.mrb[0].mxu0 %v1032
    %v1807 = vpop.f32.mrb[0].mxu0
    %v1808 = vadd.f32 0.0, %v1807
    %v1809 = vpop.f32.mrb[0].mxu0
    %v1810 = vpop.f32.mrb[0].mxu0
    %v1811 = vadd.f32 0.0, %v1810
    %v1812 = vpop.f32.mrb[0].mxu0
    %1813 = vmatprep.mubr.bf16.mxu0 %v1035
    %1814 = vmatmul.mubr.bf16.gmra.mrb[0].mxu0 %v1034
    %v1815 = vpop.f32.mrb[0].mxu0
    %v1816 = vadd.f32 0.0, %v1815
    %v1817 = vpop.f32.mrb[0].mxu0
    %v1818 = vpop.f32.mrb[0].mxu0
    %v1819 = vadd.f32 0.0, %v1818
    %v1820 = vpop.f32.mrb[0].mxu0
    %1821 = vmatprep.mubr.bf16.mxu0 %v1037
    %1822 = vmatmul.mubr.bf16.gmra.mrb[0].mxu0 %v1036
    %v1823 = vpop.f32.mrb[0].mxu0
    %v1824 = vadd.f32 0.0, %v1823
    %v1825 = vpop.f32.mrb[0].mxu0
    %v1826 = vpop.f32.mrb[0].mxu0
    %v1827 = vadd.f32 0.0, %v1826
    %v1828 = vpop.f32.mrb[0].mxu0
    %1829 = vmatprep.mubr.bf16.mxu0 %v1039
    %1830 = vmatmul.mubr.bf16.gmra.mrb[0].mxu0 %v1038
    %v1831 = vpop.f32.mrb[0].mxu0
    %v1832 = vadd.f32 0.0, %v1831
    %v1833 = vpop.f32.mrb[0].mxu0
    %v1834 = vpop.f32.mrb[0].mxu0
    %v1835 = vadd.f32 0.0, %v1834
    %v1836 = vpop.f32.mrb[0].mxu0
    %1837 = vmatprep.mubr.bf16.mxu0 %v1041
    %1838 = vmatmul.mubr.bf16.gmra.mrb[0].mxu0 %v1040
    %v1839 = vpop.f32.mrb[0].mxu0
    %v1840 = vadd.f32 0.0, %v1839
    %v1841 = vpop.f32.mrb[0].mxu0
    %v1842 = vpop.f32.mrb[0].mxu0
    %v1843 = vadd.f32 0.0, %v1842
    %v1844 = vpop.f32.mrb[0].mxu0
    %1845 = vmatprep.mubr.bf16.mxu0 %v1043
    %1846 = vmatmul.mubr.bf16.gmra.mrb[0].mxu0 %v1042
    %v1847 = vpop.f32.mrb[0].mxu0
    %v1848 = vadd.f32 0.0, %v1847
    %v1849 = vpop.f32.mrb[0].mxu0
    %v1850 = vpop.f32.mrb[0].mxu0
    %v1851 = vadd.f32 0.0, %v1850
    %v1852 = vpop.f32.mrb[0].mxu0
    %1853 = vmatprep.mubr.bf16.mxu0 %v1045
    %1854 = vmatmul.mubr.bf16.gmra.mrb[0].mxu0 %v1044
    %v1855 = vpop.f32.mrb[0].mxu0
    %v1856 = vadd.f32 0.0, %v1855
    %v1857 = vpop.f32.mrb[0].mxu0
    %v1858 = vpop.f32.mrb[0].mxu0
    %v1859 = vadd.f32 0.0, %v1858
    %v1860 = vpop.f32.mrb[0].mxu0
    %1861 = vmatprep.mubr.bf16.mxu0 %v1047
    %1862 = vmatmul.mubr.bf16.gmra.mrb[0].mxu0 %v1046
    %v1863 = vpop.f32.mrb[0].mxu0
    %v1864 = vadd.f32 0.0, %v1863
    %v1865 = vpop.f32.mrb[0].mxu0
    %v1866 = vpop.f32.mrb[0].mxu0
    %v1867 = vadd.f32 0.0, %v1866
    %v1868 = vpop.f32.mrb[0].mxu0
    %1869 = vmatprep.mubr.bf16.mxu0 %v1049
    %1870 = vmatmul.mubr.bf16.gmra.mrb[0].mxu0 %v1048
    %v1871 = vpop.f32.mrb[0].mxu0
    %v1872 = vadd.f32 0.0, %v1871
    %v1873 = vpop.f32.mrb[0].mxu0
    %v1874 = vpop.f32.mrb[0].mxu0
    %v1875 = vadd.f32 0.0, %v1874
    %v1876 = vpop.f32.mrb[0].mxu0
    %1877 = vmatprep.mubr.bf16.mxu0 %v1051
    %1878 = vmatmul.mubr.bf16.gmra.mrb[0].mxu0 %v1050
    %v1879 = vpop.f32.mrb[0].mxu0
    %v1880 = vadd.f32 0.0, %v1879
    %v1881 = vpop.f32.mrb[0].mxu0
    %v1882 = vpop.f32.mrb[0].mxu0
    %v1883 = vadd.f32 0.0, %v1882
    %v1884 = vpop.f32.mrb[0].mxu0
    %1885 = vdwg.mxu0
    %vm1950 = vcmask 1046528
    %v1951 = vrot.slane %v1632, 1
    %v1952 = vrot.slane %v1635, 1
    %v1953 = vsel %vm1950, %v1951, %v1952
    %v1954 = vrot.slane %v1640, 1
    %v1955 = vrot.slane %v1643, 1
    %v1956 = vsel %vm1950, %v1954, %v1955
    %v1957 = vrot.slane %v1648, 1
    %v1958 = vrot.slane %v1651, 1
    %v1959 = vsel %vm1950, %v1957, %v1958
    %v1960 = vrot.slane %v1656, 1
    %v1961 = vrot.slane %v1659, 1
    %v1962 = vsel %vm1950, %v1960, %v1961
    %v1963 = vrot.slane %v1664, 1
    %v1964 = vrot.slane %v1667, 1
    %v1965 = vsel %vm1950, %v1963, %v1964
    %v1966 = vrot.slane %v1672, 1
    %v1967 = vrot.slane %v1675, 1
    %v1968 = vsel %vm1950, %v1966, %v1967
    %v1969 = vrot.slane %v1680, 1
    %v1970 = vrot.slane %v1683, 1
    %v1971 = vsel %vm1950, %v1969, %v1970
    %v1972 = vrot.slane %v1688, 1
    %v1973 = vrot.slane %v1691, 1
    %v1974 = vsel %vm1950, %v1972, %v1973
    %v1975 = vrot.slane %v1696, 1
    %v1976 = vrot.slane %v1699, 1
    %v1977 = vsel %vm1950, %v1975, %v1976
    %v1978 = vrot.slane %v1704, 1
    %v1979 = vrot.slane %v1707, 1
    %v1980 = vsel %vm1950, %v1978, %v1979
    %v1981 = vrot.slane %v1712, 1
    %v1982 = vrot.slane %v1715, 1
    %v1983 = vsel %vm1950, %v1981, %v1982
    %v1984 = vrot.slane %v1720, 1
    %v1985 = vrot.slane %v1723, 1
    %v1986 = vsel %vm1950, %v1984, %v1985
    %v1987 = vrot.slane %v1728, 1
    %v1988 = vrot.slane %v1731, 1
    %v1989 = vsel %vm1950, %v1987, %v1988
    %v1990 = vrot.slane %v1736, 1
    %v1991 = vrot.slane %v1739, 1
    %v1992 = vsel %vm1950, %v1990, %v1991
    %v1993 = vrot.slane %v1744, 1
    %v1994 = vrot.slane %v1747, 1
    %v1995 = vsel %vm1950, %v1993, %v1994
    %v1996 = vrot.slane %v1752, 1
    %v1997 = vrot.slane %v1755, 1
    %v1998 = vsel %vm1950, %v1996, %v1997
    %v1999 = vrot.slane %v1760, 1
    %v2000 = vrot.slane %v1763, 1
    %v2001 = vsel %vm1950, %v1999, %v2000
    %v2002 = vrot.slane %v1768, 1
    %v2003 = vrot.slane %v1771, 1
    %v2004 = vsel %vm1950, %v2002, %v2003
    %v2005 = vrot.slane %v1776, 1
    %v2006 = vrot.slane %v1779, 1
    %v2007 = vsel %vm1950, %v2005, %v2006
    %v2008 = vrot.slane %v1784, 1
    %v2009 = vrot.slane %v1787, 1
    %v2010 = vsel %vm1950, %v2008, %v2009
    %v2011 = vrot.slane %v1792, 1
    %v2012 = vrot.slane %v1795, 1
    %v2013 = vsel %vm1950, %v2011, %v2012
    %v2014 = vrot.slane %v1800, 1
    %v2015 = vrot.slane %v1803, 1
    %v2016 = vsel %vm1950, %v2014, %v2015
    %v2017 = vrot.slane %v1808, 1
    %v2018 = vrot.slane %v1811, 1
    %v2019 = vsel %vm1950, %v2017, %v2018
    %v2020 = vrot.slane %v1816, 1
    %v2021 = vrot.slane %v1819, 1
    %v2022 = vsel %vm1950, %v2020, %v2021
    %v2023 = vrot.slane %v1824, 1
    %v2024 = vrot.slane %v1827, 1
    %v2025 = vsel %vm1950, %v2023, %v2024
    %v2026 = vrot.slane %v1832, 1
    %v2027 = vrot.slane %v1835, 1
    %v2028 = vsel %vm1950, %v2026, %v2027
    %v2029 = vrot.slane %v1840, 1
    %v2030 = vrot.slane %v1843, 1
    %v2031 = vsel %vm1950, %v2029, %v2030
    %v2032 = vrot.slane %v1848, 1
    %v2033 = vrot.slane %v1851, 1
    %v2034 = vsel %vm1950, %v2032, %v2033
    %v2035 = vrot.slane %v1856, 1
    %v2036 = vrot.slane %v1859, 1
    %v2037 = vsel %vm1950, %v2035, %v2036
    %v2038 = vrot.slane %v1864, 1
    %v2039 = vrot.slane %v1867, 1
    %v2040 = vsel %vm1950, %v2038, %v2039
    %v2041 = vrot.slane %v1872, 1
    %v2042 = vrot.slane %v1875, 1
    %v2043 = vsel %vm1950, %v2041, %v2042
    %v2044 = vrot.slane %v1880, 1
    %v2045 = vrot.slane %v1883, 1
    %v2046 = vsel %vm1950, %v2044, %v2045
    %v2111 = vadd.f32 %v1215, %v1953
    %v2112 = vadd.f32 %v1218, %v1952
    %v2113 = vadd.f32 %v1223, %v1956
    %v2114 = vadd.f32 %v1226, %v1955
    %v2115 = vadd.f32 %v1231, %v1959
    %v2116 = vadd.f32 %v1234, %v1958
    %v2117 = vadd.f32 %v1239, %v1962
    %v2118 = vadd.f32 %v1242, %v1961
    %v2119 = vadd.f32 %v1247, %v1965
    %v2120 = vadd.f32 %v1250, %v1964
    %v2121 = vadd.f32 %v1255, %v1968
    %v2122 = vadd.f32 %v1258, %v1967
    %v2123 = vadd.f32 %v1263, %v1971
    %v2124 = vadd.f32 %v1266, %v1970
    %v2125 = vadd.f32 %v1271, %v1974
    %v2126 = vadd.f32 %v1274, %v1973
    %v2127 = vadd.f32 %v1279, %v1977
    %v2128 = vadd.f32 %v1282, %v1976
    %v2129 = vadd.f32 %v1287, %v1980
    %v2130 = vadd.f32 %v1290, %v1979
    %v2131 = vadd.f32 %v1295, %v1983
    %v2132 = vadd.f32 %v1298, %v1982
    %v2133 = vadd.f32 %v1303, %v1986
    %v2134 = vadd.f32 %v1306, %v1985
    %v2135 = vadd.f32 %v1311, %v1989
    %v2136 = vadd.f32 %v1314, %v1988
    %v2137 = vadd.f32 %v1319, %v1992
    %v2138 = vadd.f32 %v1322, %v1991
    %v2139 = vadd.f32 %v1327, %v1995
    %v2140 = vadd.f32 %v1330, %v1994
    %v2141 = vadd.f32 %v1335, %v1998
    %v2142 = vadd.f32 %v1338, %v1997
    %v2143 = vadd.f32 %v1343, %v2001
    %v2144 = vadd.f32 %v1346, %v2000
    %v2145 = vadd.f32 %v1351, %v2004
    %v2146 = vadd.f32 %v1354, %v2003
    %v2147 = vadd.f32 %v1359, %v2007
    %v2148 = vadd.f32 %v1362, %v2006
    %v2149 = vadd.f32 %v1367, %v2010
    %v2150 = vadd.f32 %v1370, %v2009
    %v2151 = vadd.f32 %v1375, %v2013
    %v2152 = vadd.f32 %v1378, %v2012
    %v2153 = vadd.f32 %v1383, %v2016
    %v2154 = vadd.f32 %v1386, %v2015
    %v2155 = vadd.f32 %v1391, %v2019
    %v2156 = vadd.f32 %v1394, %v2018
    %v2157 = vadd.f32 %v1399, %v2022
    %v2158 = vadd.f32 %v1402, %v2021
    %v2159 = vadd.f32 %v1407, %v2025
    %v2160 = vadd.f32 %v1410, %v2024
    %v2161 = vadd.f32 %v1415, %v2028
    %v2162 = vadd.f32 %v1418, %v2027
    %v2163 = vadd.f32 %v1423, %v2031
    %v2164 = vadd.f32 %v1426, %v2030
    %v2165 = vadd.f32 %v1431, %v2034
    %v2166 = vadd.f32 %v1434, %v2033
    %v2167 = vadd.f32 %v1439, %v2037
    %v2168 = vadd.f32 %v1442, %v2036
    %v2169 = vadd.f32 %v1447, %v2040
    %v2170 = vadd.f32 %v1450, %v2039
    %v2171 = vadd.f32 %v1455, %v2043
    %v2172 = vadd.f32 %v1458, %v2042
    %v2173 = vadd.f32 %v1463, %v2046
    %v2174 = vadd.f32 %v1466, %v2045
    %v2175 = vld [vmem:[#allocation7 + $0x100] sm:$0xf]
    %v2176 = vld [vmem:[#allocation7 + $0x104] sm:$0xf]
    %v2177 = vld [vmem:[#allocation7 + $0x108] sm:$0xf]
    %v2178 = vld [vmem:[#allocation7 + $0x10c] sm:$0xf]
    %v2179 = vld [vmem:[#allocation7 + $0x110] sm:$0xf]
    %v2180 = vld [vmem:[#allocation7 + $0x114] sm:$0xf]
    %v2181 = vld [vmem:[#allocation7 + $0x118] sm:$0xf]
    %v2182 = vld [vmem:[#allocation7 + $0x11c] sm:$0xf]
    %v2183 = vld [vmem:[#allocation7 + $0x120] sm:$0xf]
    %v2184 = vld [vmem:[#allocation7 + $0x124] sm:$0xf]
    %v2185 = vld [vmem:[#allocation7 + $0x128] sm:$0xf]
    %v2186 = vld [vmem:[#allocation7 + $0x12c] sm:$0xf]
    %v2187 = vld [vmem:[#allocation7 + $0x130] sm:$0xf]
    %v2188 = vld [vmem:[#allocation7 + $0x134] sm:$0xf]
    %v2189 = vld [vmem:[#allocation7 + $0x138] sm:$0xf]
    %v2190 = vld [vmem:[#allocation7 + $0x13c] sm:$0xf]
    %v2191 = vld [vmem:[#allocation7 + $0x140] sm:$0xf]
    %v2192 = vld [vmem:[#allocation7 + $0x144] sm:$0xf]
    %v2193 = vld [vmem:[#allocation7 + $0x148] sm:$0xf]
    %v2194 = vld [vmem:[#allocation7 + $0x14c] sm:$0xf]
    %v2195 = vld [vmem:[#allocation7 + $0x150] sm:$0xf]
    %v2196 = vld [vmem:[#allocation7 + $0x154] sm:$0xf]
    %v2197 = vld [vmem:[#allocation7 + $0x158] sm:$0xf]
    %v2198 = vld [vmem:[#allocation7 + $0x15c] sm:$0xf]
    %v2199 = vld [vmem:[#allocation7 + $0x160] sm:$0xf]
    %v2200 = vld [vmem:[#allocation7 + $0x164] sm:$0xf]
    %v2201 = vld [vmem:[#allocation7 + $0x168] sm:$0xf]
    %v2202 = vld [vmem:[#allocation7 + $0x16c] sm:$0xf]
    %v2203 = vld [vmem:[#allocation7 + $0x170] sm:$0xf]
    %v2204 = vld [vmem:[#allocation7 + $0x174] sm:$0xf]
    %v2205 = vld [vmem:[#allocation7 + $0x178] sm:$0xf]
    %v2206 = vld [vmem:[#allocation7 + $0x17c] sm:$0xf]
    %v2239 = vunpack.c.l.b16 %v2175
    %v2240 = vunpack.c.l.b16 %v2176
    %v2241 = vunpack.c.l.b16 %v2177
    %v2242 = vunpack.c.l.b16 %v2178
    %v2243 = vunpack.c.l.b16 %v2179
    %v2244 = vunpack.c.l.b16 %v2180
    %v2245 = vunpack.c.l.b16 %v2181
    %v2246 = vunpack.c.l.b16 %v2182
    %v2247 = vunpack.c.l.b16 %v2183
    %v2248 = vunpack.c.l.b16 %v2184
    %v2249 = vunpack.c.l.b16 %v2185
    %v2250 = vunpack.c.l.b16 %v2186
    %v2251 = vunpack.c.l.b16 %v2187
    %v2252 = vunpack.c.l.b16 %v2188
    %v2253 = vunpack.c.l.b16 %v2189
    %v2254 = vunpack.c.l.b16 %v2190
    %v2255 = vunpack.c.l.b16 %v2191
    %v2256 = vunpack.c.l.b16 %v2192
    %v2257 = vunpack.c.l.b16 %v2193
    %v2258 = vunpack.c.l.b16 %v2194
    %v2259 = vunpack.c.l.b16 %v2195
    %v2260 = vunpack.c.l.b16 %v2196
    %v2261 = vunpack.c.l.b16 %v2197
    %v2262 = vunpack.c.l.b16 %v2198
    %v2263 = vunpack.c.l.b16 %v2199
    %v2264 = vunpack.c.l.b16 %v2200
    %v2265 = vunpack.c.l.b16 %v2201
    %v2266 = vunpack.c.l.b16 %v2202
    %v2267 = vunpack.c.l.b16 %v2203
    %v2268 = vunpack.c.l.b16 %v2204
    %v2269 = vunpack.c.l.b16 %v2205
    %v2270 = vunpack.c.l.b16 %v2206
    %v2271 = vpack.c.b16 %v2240, %v2239
    %v2272 = vpack.c.b16 %v2242, %v2241
    %v2273 = vpack.c.b16 %v2244, %v2243
    %v2274 = vpack.c.b16 %v2246, %v2245
    %v2275 = vpack.c.b16 %v2248, %v2247
    %v2276 = vpack.c.b16 %v2250, %v2249
    %v2277 = vpack.c.b16 %v2252, %v2251
    %v2278 = vpack.c.b16 %v2254, %v2253
    %v2279 = vpack.c.b16 %v2256, %v2255
    %v2280 = vpack.c.b16 %v2258, %v2257
    %v2281 = vpack.c.b16 %v2260, %v2259
    %v2282 = vpack.c.b16 %v2262, %v2261
    %v2283 = vpack.c.b16 %v2264, %v2263
    %v2284 = vpack.c.b16 %v2266, %v2265
    %v2285 = vpack.c.b16 %v2268, %v2267
    %v2286 = vpack.c.b16 %v2270, %v2269
    %2303 = vmatprep.subr.bf16.mxu0 0
    %2304 = vmatpush1.bf16.msra.mxu0 %v2271
    %2305 = vmatprep.subr.bf16.mxu0 0
    %2306 = vmatpush1.bf16.msra.mxu0 %v2272
    %2307 = vmatprep.subr.bf16.mxu0 0
    %2308 = vmatpush1.bf16.msra.mxu0 %v2273
    %2309 = vmatprep.subr.bf16.mxu0 0
    %2310 = vmatpush1.bf16.msra.mxu0 %v2274
    %2311 = vmatprep.subr.bf16.mxu0 0
    %2312 = vmatpush1.bf16.msra.mxu0 %v2275
    %2313 = vmatprep.subr.bf16.mxu0 0
    %2314 = vmatpush1.bf16.msra.mxu0 %v2276
    %2315 = vmatprep.subr.bf16.mxu0 0
    %2316 = vmatpush1.bf16.msra.mxu0 %v2277
    %2317 = vmatprep.subr.bf16.mxu0 0
    %2318 = vmatpush1.bf16.msra.mxu0 %v2278
    %2319 = vmatprep.subr.bf16.mxu0 0
    %2320 = vmatpush1.bf16.msra.mxu0 %v2279
    %2321 = vmatprep.subr.bf16.mxu0 0
    %2322 = vmatpush1.bf16.msra.mxu0 %v2280
    %2323 = vmatprep.subr.bf16.mxu0 0
    %2324 = vmatpush1.bf16.msra.mxu0 %v2281
    %2325 = vmatprep.subr.bf16.mxu0 0
    %2326 = vmatpush1.bf16.msra.mxu0 %v2282
    %2327 = vmatprep.subr.bf16.mxu0 0
    %2328 = vmatpush1.bf16.msra.mxu0 %v2283
    %2329 = vmatprep.subr.bf16.mxu0 0
    %2330 = vmatpush1.bf16.msra.mxu0 %v2284
    %2331 = vmatprep.subr.bf16.mxu0 0
    %2332 = vmatpush1.bf16.msra.mxu0 %v2285
    %2333 = vmatprep.subr.bf16.mxu0 0
    %2334 = vmatpush1.bf16.msra.mxu0 %v2286
    %2335 = vmatprep.mubr.bf16.mxu0 %v989
    %2336 = vmatmul.mubr.bf16.gmra.mrb[0].mxu0 %v988
    %v2337 = vpop.f32.mrb[0].mxu0
    %v2338 = vadd.f32 0.0, %v2337
    %v2339 = vpop.f32.mrb[0].mxu0
    %v2340 = vpop.f32.mrb[0].mxu0
    %v2341 = vadd.f32 0.0, %v2340
    %v2342 = vpop.f32.mrb[0].mxu0
    %2343 = vmatprep.mubr.bf16.mxu0 %v991
    %2344 = vmatmul.mubr.bf16.gmra.mrb[0].mxu0 %v990
    %v2345 = vpop.f32.mrb[0].mxu0
    %v2346 = vadd.f32 0.0, %v2345
    %v2347 = vpop.f32.mrb[0].mxu0
    %v2348 = vpop.f32.mrb[0].mxu0
    %v2349 = vadd.f32 0.0, %v2348
    %v2350 = vpop.f32.mrb[0].mxu0
    %2351 = vmatprep.mubr.bf16.mxu0 %v993
    %2352 = vmatmul.mubr.bf16.gmra.mrb[0].mxu0 %v992
    %v2353 = vpop.f32.mrb[0].mxu0
    %v2354 = vadd.f32 0.0, %v2353
    %v2355 = vpop.f32.mrb[0].mxu0
    %v2356 = vpop.f32.mrb[0].mxu0
    %v2357 = vadd.f32 0.0, %v2356
    %v2358 = vpop.f32.mrb[0].mxu0
    %2359 = vmatprep.mubr.bf16.mxu0 %v995
    %2360 = vmatmul.mubr.bf16.gmra.mrb[0].mxu0 %v994
    %v2361 = vpop.f32.mrb[0].mxu0
    %v2362 = vadd.f32 0.0, %v2361
    %v2363 = vpop.f32.mrb[0].mxu0
    %v2364 = vpop.f32.mrb[0].mxu0
    %v2365 = vadd.f32 0.0, %v2364
    %v2366 = vpop.f32.mrb[0].mxu0
    %2367 = vmatprep.mubr.bf16.mxu0 %v997
    %2368 = vmatmul.mubr.bf16.gmra.mrb[0].mxu0 %v996
    %v2369 = vpop.f32.mrb[0].mxu0
    %v2370 = vadd.f32 0.0, %v2369
    %v2371 = vpop.f32.mrb[0].mxu0
    %v2372 = vpop.f32.mrb[0].mxu0
    %v2373 = vadd.f32 0.0, %v2372
    %v2374 = vpop.f32.mrb[0].mxu0
    %2375 = vmatprep.mubr.bf16.mxu0 %v999
    %2376 = vmatmul.mubr.bf16.gmra.mrb[0].mxu0 %v998
    %v2377 = vpop.f32.mrb[0].mxu0
    %v2378 = vadd.f32 0.0, %v2377
    %v2379 = vpop.f32.mrb[0].mxu0
    %v2380 = vpop.f32.mrb[0].mxu0
    %v2381 = vadd.f32 0.0, %v2380
    %v2382 = vpop.f32.mrb[0].mxu0
    %2383 = vmatprep.mubr.bf16.mxu0 %v1001
    %2384 = vmatmul.mubr.bf16.gmra.mrb[0].mxu0 %v1000
    %v2385 = vpop.f32.mrb[0].mxu0
    %v2386 = vadd.f32 0.0, %v2385
    %v2387 = vpop.f32.mrb[0].mxu0
    %v2388 = vpop.f32.mrb[0].mxu0
    %v2389 = vadd.f32 0.0, %v2388
    %v2390 = vpop.f32.mrb[0].mxu0
    %2391 = vmatprep.mubr.bf16.mxu0 %v1003
    %2392 = vmatmul.mubr.bf16.gmra.mrb[0].mxu0 %v1002
    %v2393 = vpop.f32.mrb[0].mxu0
    %v2394 = vadd.f32 0.0, %v2393
    %v2395 = vpop.f32.mrb[0].mxu0
    %v2396 = vpop.f32.mrb[0].mxu0
    %v2397 = vadd.f32 0.0, %v2396
    %v2398 = vpop.f32.mrb[0].mxu0
    %2399 = vmatprep.mubr.bf16.mxu0 %v1005
    %2400 = vmatmul.mubr.bf16.gmra.mrb[0].mxu0 %v1004
    %v2401 = vpop.f32.mrb[0].mxu0
    %v2402 = vadd.f32 0.0, %v2401
    %v2403 = vpop.f32.mrb[0].mxu0
    %v2404 = vpop.f32.mrb[0].mxu0
    %v2405 = vadd.f32 0.0, %v2404
    %v2406 = vpop.f32.mrb[0].mxu0
    %2407 = vmatprep.mubr.bf16.mxu0 %v1007
    %2408 = vmatmul.mubr.bf16.gmra.mrb[0].mxu0 %v1006
    %v2409 = vpop.f32.mrb[0].mxu0
    %v2410 = vadd.f32 0.0, %v2409
    %v2411 = vpop.f32.mrb[0].mxu0
    %v2412 = vpop.f32.mrb[0].mxu0
    %v2413 = vadd.f32 0.0, %v2412
    %v2414 = vpop.f32.mrb[0].mxu0
    %2415 = vmatprep.mubr.bf16.mxu0 %v1009
    %2416 = vmatmul.mubr.bf16.gmra.mrb[0].mxu0 %v1008
    %v2417 = vpop.f32.mrb[0].mxu0
    %v2418 = vadd.f32 0.0, %v2417
    %v2419 = vpop.f32.mrb[0].mxu0
    %v2420 = vpop.f32.mrb[0].mxu0
    %v2421 = vadd.f32 0.0, %v2420
    %v2422 = vpop.f32.mrb[0].mxu0
    %2423 = vmatprep.mubr.bf16.mxu0 %v1011
    %2424 = vmatmul.mubr.bf16.gmra.mrb[0].mxu0 %v1010
    %v2425 = vpop.f32.mrb[0].mxu0
    %v2426 = vadd.f32 0.0, %v2425
    %v2427 = vpop.f32.mrb[0].mxu0
    %v2428 = vpop.f32.mrb[0].mxu0
    %v2429 = vadd.f32 0.0, %v2428
    %v2430 = vpop.f32.mrb[0].mxu0
    %2431 = vmatprep.mubr.bf16.mxu0 %v1013
    %2432 = vmatmul.mubr.bf16.gmra.mrb[0].mxu0 %v1012
    %v2433 = vpop.f32.mrb[0].mxu0
    %v2434 = vadd.f32 0.0, %v2433
    %v2435 = vpop.f32.mrb[0].mxu0
    %v2436 = vpop.f32.mrb[0].mxu0
    %v2437 = vadd.f32 0.0, %v2436
    %v2438 = vpop.f32.mrb[0].mxu0
    %2439 = vmatprep.mubr.bf16.mxu0 %v1015
    %2440 = vmatmul.mubr.bf16.gmra.mrb[0].mxu0 %v1014
    %v2441 = vpop.f32.mrb[0].mxu0
    %v2442 = vadd.f32 0.0, %v2441
    %v2443 = vpop.f32.mrb[0].mxu0
    %v2444 = vpop.f32.mrb[0].mxu0
    %v2445 = vadd.f32 0.0, %v2444
    %v2446 = vpop.f32.mrb[0].mxu0
    %2447 = vmatprep.mubr.bf16.mxu0 %v1017
    %2448 = vmatmul.mubr.bf16.gmra.mrb[0].mxu0 %v1016
    %v2449 = vpop.f32.mrb[0].mxu0
    %v2450 = vadd.f32 0.0, %v2449
    %v2451 = vpop.f32.mrb[0].mxu0
    %v2452 = vpop.f32.mrb[0].mxu0
    %v2453 = vadd.f32 0.0, %v2452
    %v2454 = vpop.f32.mrb[0].mxu0
    %2455 = vmatprep.mubr.bf16.mxu0 %v1019
    %2456 = vmatmul.mubr.bf16.gmra.mrb[0].mxu0 %v1018
    %v2457 = vpop.f32.mrb[0].mxu0
    %v2458 = vadd.f32 0.0, %v2457
    %v2459 = vpop.f32.mrb[0].mxu0
    %v2460 = vpop.f32.mrb[0].mxu0
    %v2461 = vadd.f32 0.0, %v2460
    %v2462 = vpop.f32.mrb[0].mxu0
    %2463 = vmatprep.mubr.bf16.mxu0 %v1021
    %2464 = vmatmul.mubr.bf16.gmra.mrb[0].mxu0 %v1020
    %v2465 = vpop.f32.mrb[0].mxu0
    %v2466 = vadd.f32 0.0, %v2465
    %v2467 = vpop.f32.mrb[0].mxu0
    %v2468 = vpop.f32.mrb[0].mxu0
    %v2469 = vadd.f32 0.0, %v2468
    %v2470 = vpop.f32.mrb[0].mxu0
    %2471 = vmatprep.mubr.bf16.mxu0 %v1023
    %2472 = vmatmul.mubr.bf16.gmra.mrb[0].mxu0 %v1022
    %v2473 = vpop.f32.mrb[0].mxu0
    %v2474 = vadd.f32 0.0, %v2473
    %v2475 = vpop.f32.mrb[0].mxu0
    %v2476 = vpop.f32.mrb[0].mxu0
    %v2477 = vadd.f32 0.0, %v2476
    %v2478 = vpop.f32.mrb[0].mxu0
    %2479 = vmatprep.mubr.bf16.mxu0 %v1025
    %2480 = vmatmul.mubr.bf16.gmra.mrb[0].mxu0 %v1024
    %v2481 = vpop.f32.mrb[0].mxu0
    %v2482 = vadd.f32 0.0, %v2481
    %v2483 = vpop.f32.mrb[0].mxu0
    %v2484 = vpop.f32.mrb[0].mxu0
    %v2485 = vadd.f32 0.0, %v2484
    %v2486 = vpop.f32.mrb[0].mxu0
    %2487 = vmatprep.mubr.bf16.mxu0 %v1027
    %2488 = vmatmul.mubr.bf16.gmra.mrb[0].mxu0 %v1026
    %v2489 = vpop.f32.mrb[0].mxu0
    %v2490 = vadd.f32 0.0, %v2489
    %v2491 = vpop.f32.mrb[0].mxu0
    %v2492 = vpop.f32.mrb[0].mxu0
    %v2493 = vadd.f32 0.0, %v2492
    %v2494 = vpop.f32.mrb[0].mxu0
    %2495 = vmatprep.mubr.bf16.mxu0 %v1029
    %2496 = vmatmul.mubr.bf16.gmra.mrb[0].mxu0 %v1028
    %v2497 = vpop.f32.mrb[0].mxu0
    %v2498 = vadd.f32 0.0, %v2497
    %v2499 = vpop.f32.mrb[0].mxu0
    %v2500 = vpop.f32.mrb[0].mxu0
    %v2501 = vadd.f32 0.0, %v2500
    %v2502 = vpop.f32.mrb[0].mxu0
    %2503 = vmatprep.mubr.bf16.mxu0 %v1031
    %2504 = vmatmul.mubr.bf16.gmra.mrb[0].mxu0 %v1030
    %v2505 = vpop.f32.mrb[0].mxu0
    %v2506 = vadd.f32 0.0, %v2505
    %v2507 = vpop.f32.mrb[0].mxu0
    %v2508 = vpop.f32.mrb[0].mxu0
    %v2509 = vadd.f32 0.0, %v2508
    %v2510 = vpop.f32.mrb[0].mxu0
    %2511 = vmatprep.mubr.bf16.mxu0 %v1033
    %2512 = vmatmul.mubr.bf16.gmra.mrb[0].mxu0 %v1032
    %v2513 = vpop.f32.mrb[0].mxu0
    %v2514 = vadd.f32 0.0, %v2513
    %v2515 = vpop.f32.mrb[0].mxu0
    %v2516 = vpop.f32.mrb[0].mxu0
    %v2517 = vadd.f32 0.0, %v2516
    %v2518 = vpop.f32.mrb[0].mxu0
    %2519 = vmatprep.mubr.bf16.mxu0 %v1035
    %2520 = vmatmul.mubr.bf16.gmra.mrb[0].mxu0 %v1034
    %v2521 = vpop.f32.mrb[0].mxu0
    %v2522 = vadd.f32 0.0, %v2521
    %v2523 = vpop.f32.mrb[0].mxu0
    %v2524 = vpop.f32.mrb[0].mxu0
    %v2525 = vadd.f32 0.0, %v2524
    %v2526 = vpop.f32.mrb[0].mxu0
    %2527 = vmatprep.mubr.bf16.mxu0 %v1037
    %2528 = vmatmul.mubr.bf16.gmra.mrb[0].mxu0 %v1036
    %v2529 = vpop.f32.mrb[0].mxu0
    %v2530 = vadd.f32 0.0, %v2529
    %v2531 = vpop.f32.mrb[0].mxu0
    %v2532 = vpop.f32.mrb[0].mxu0
    %v2533 = vadd.f32 0.0, %v2532
    %v2534 = vpop.f32.mrb[0].mxu0
    %2535 = vmatprep.mubr.bf16.mxu0 %v1039
    %2536 = vmatmul.mubr.bf16.gmra.mrb[0].mxu0 %v1038
    %v2537 = vpop.f32.mrb[0].mxu0
    %v2538 = vadd.f32 0.0, %v2537
    %v2539 = vpop.f32.mrb[0].mxu0
    %v2540 = vpop.f32.mrb[0].mxu0
    %v2541 = vadd.f32 0.0, %v2540
    %v2542 = vpop.f32.mrb[0].mxu0
    %2543 = vmatprep.mubr.bf16.mxu0 %v1041
    %2544 = vmatmul.mubr.bf16.gmra.mrb[0].mxu0 %v1040
    %v2545 = vpop.f32.mrb[0].mxu0
    %v2546 = vadd.f32 0.0, %v2545
    %v2547 = vpop.f32.mrb[0].mxu0
    %v2548 = vpop.f32.mrb[0].mxu0
    %v2549 = vadd.f32 0.0, %v2548
    %v2550 = vpop.f32.mrb[0].mxu0
    %2551 = vmatprep.mubr.bf16.mxu0 %v1043
    %2552 = vmatmul.mubr.bf16.gmra.mrb[0].mxu0 %v1042
    %v2553 = vpop.f32.mrb[0].mxu0
    %v2554 = vadd.f32 0.0, %v2553
    %v2555 = vpop.f32.mrb[0].mxu0
    %v2556 = vpop.f32.mrb[0].mxu0
    %v2557 = vadd.f32 0.0, %v2556
    %v2558 = vpop.f32.mrb[0].mxu0
    %2559 = vmatprep.mubr.bf16.mxu0 %v1045
    %2560 = vmatmul.mubr.bf16.gmra.mrb[0].mxu0 %v1044
    %v2561 = vpop.f32.mrb[0].mxu0
    %v2562 = vadd.f32 0.0, %v2561
    %v2563 = vpop.f32.mrb[0].mxu0
    %v2564 = vpop.f32.mrb[0].mxu0
    %v2565 = vadd.f32 0.0, %v2564
    %v2566 = vpop.f32.mrb[0].mxu0
    %2567 = vmatprep.mubr.bf16.mxu0 %v1047
    %2568 = vmatmul.mubr.bf16.gmra.mrb[0].mxu0 %v1046
    %v2569 = vpop.f32.mrb[0].mxu0
    %v2570 = vadd.f32 0.0, %v2569
    %v2571 = vpop.f32.mrb[0].mxu0
    %v2572 = vpop.f32.mrb[0].mxu0
    %v2573 = vadd.f32 0.0, %v2572
    %v2574 = vpop.f32.mrb[0].mxu0
    %2575 = vmatprep.mubr.bf16.mxu0 %v1049
    %2576 = vmatmul.mubr.bf16.gmra.mrb[0].mxu0 %v1048
    %v2577 = vpop.f32.mrb[0].mxu0
    %v2578 = vadd.f32 0.0, %v2577
    %v2579 = vpop.f32.mrb[0].mxu0
    %v2580 = vpop.f32.mrb[0].mxu0
    %v2581 = vadd.f32 0.0, %v2580
    %v2582 = vpop.f32.mrb[0].mxu0
    %2583 = vmatprep.mubr.bf16.mxu0 %v1051
    %2584 = vmatmul.mubr.bf16.gmra.mrb[0].mxu0 %v1050
    %v2585 = vpop.f32.mrb[0].mxu0
    %v2586 = vadd.f32 0.0, %v2585
    %v2587 = vpop.f32.mrb[0].mxu0
    %v2588 = vpop.f32.mrb[0].mxu0
    %v2589 = vadd.f32 0.0, %v2588
    %v2590 = vpop.f32.mrb[0].mxu0
    %2591 = vdwg.mxu0
    %vm2656 = vcmask 1045504
    %v2657 = vrot.slane %v2338, 2
    %v2658 = vrot.slane %v2341, 2
    %v2659 = vsel %vm2656, %v2657, %v2658
    %v2660 = vrot.slane %v2346, 2
    %v2661 = vrot.slane %v2349, 2
    %v2662 = vsel %vm2656, %v2660, %v2661
    %v2663 = vrot.slane %v2354, 2
    %v2664 = vrot.slane %v2357, 2
    %v2665 = vsel %vm2656, %v2663, %v2664
    %v2666 = vrot.slane %v2362, 2
    %v2667 = vrot.slane %v2365, 2
    %v2668 = vsel %vm2656, %v2666, %v2667
    %v2669 = vrot.slane %v2370, 2
    %v2670 = vrot.slane %v2373, 2
    %v2671 = vsel %vm2656, %v2669, %v2670
    %v2672 = vrot.slane %v2378, 2
    %v2673 = vrot.slane %v2381, 2
    %v2674 = vsel %vm2656, %v2672, %v2673
    %v2675 = vrot.slane %v2386, 2
    %v2676 = vrot.slane %v2389, 2
    %v2677 = vsel %vm2656, %v2675, %v2676
    %v2678 = vrot.slane %v2394, 2
    %v2679 = vrot.slane %v2397, 2
    %v2680 = vsel %vm2656, %v2678, %v2679
    %v2681 = vrot.slane %v2402, 2
    %v2682 = vrot.slane %v2405, 2
    %v2683 = vsel %vm2656, %v2681, %v2682
    %v2684 = vrot.slane %v2410, 2
    %v2685 = vrot.slane %v2413, 2
    %v2686 = vsel %vm2656, %v2684, %v2685
    %v2687 = vrot.slane %v2418, 2
    %v2688 = vrot.slane %v2421, 2
    %v2689 = vsel %vm2656, %v2687, %v2688
    %v2690 = vrot.slane %v2426, 2
    %v2691 = vrot.slane %v2429, 2
    %v2692 = vsel %vm2656, %v2690, %v2691
    %v2693 = vrot.slane %v2434, 2
    %v2694 = vrot.slane %v2437, 2
    %v2695 = vsel %vm2656, %v2693, %v2694
    %v2696 = vrot.slane %v2442, 2
    %v2697 = vrot.slane %v2445, 2
    %v2698 = vsel %vm2656, %v2696, %v2697
    %v2699 = vrot.slane %v2450, 2
    %v2700 = vrot.slane %v2453, 2
    %v2701 = vsel %vm2656, %v2699, %v2700
    %v2702 = vrot.slane %v2458, 2
    %v2703 = vrot.slane %v2461, 2
    %v2704 = vsel %vm2656, %v2702, %v2703
    %v2705 = vrot.slane %v2466, 2
    %v2706 = vrot.slane %v2469, 2
    %v2707 = vsel %vm2656, %v2705, %v2706
    %v2708 = vrot.slane %v2474, 2
    %v2709 = vrot.slane %v2477, 2
    %v2710 = vsel %vm2656, %v2708, %v2709
    %v2711 = vrot.slane %v2482, 2
    %v2712 = vrot.slane %v2485, 2
    %v2713 = vsel %vm2656, %v2711, %v2712
    %v2714 = vrot.slane %v2490, 2
    %v2715 = vrot.slane %v2493, 2
    %v2716 = vsel %vm2656, %v2714, %v2715
    %v2717 = vrot.slane %v2498, 2
    %v2718 = vrot.slane %v2501, 2
    %v2719 = vsel %vm2656, %v2717, %v2718
    %v2720 = vrot.slane %v2506, 2
    %v2721 = vrot.slane %v2509, 2
    %v2722 = vsel %vm2656, %v2720, %v2721
    %v2723 = vrot.slane %v2514, 2
    %v2724 = vrot.slane %v2517, 2
    %v2725 = vsel %vm2656, %v2723, %v2724
    %v2726 = vrot.slane %v2522, 2
    %v2727 = vrot.slane %v2525, 2
    %v2728 = vsel %vm2656, %v2726, %v2727
    %v2729 = vrot.slane %v2530, 2
    %v2730 = vrot.slane %v2533, 2
    %v2731 = vsel %vm2656, %v2729, %v2730
    %v2732 = vrot.slane %v2538, 2
    %v2733 = vrot.slane %v2541, 2
    %v2734 = vsel %vm2656, %v2732, %v2733
    %v2735 = vrot.slane %v2546, 2
    %v2736 = vrot.slane %v2549, 2
    %v2737 = vsel %vm2656, %v2735, %v2736
    %v2738 = vrot.slane %v2554, 2
    %v2739 = vrot.slane %v2557, 2
    %v2740 = vsel %vm2656, %v2738, %v2739
    %v2741 = vrot.slane %v2562, 2
    %v2742 = vrot.slane %v2565, 2
    %v2743 = vsel %vm2656, %v2741, %v2742
    %v2744 = vrot.slane %v2570, 2
    %v2745 = vrot.slane %v2573, 2
    %v2746 = vsel %vm2656, %v2744, %v2745
    %v2747 = vrot.slane %v2578, 2
    %v2748 = vrot.slane %v2581, 2
    %v2749 = vsel %vm2656, %v2747, %v2748
    %v2750 = vrot.slane %v2586, 2
    %v2751 = vrot.slane %v2589, 2
    %v2752 = vsel %vm2656, %v2750, %v2751
    %v2817 = vadd.f32 %v2111, %v2659
    %v2818 = vadd.f32 %v2112, %v2658
    %v2819 = vadd.f32 %v2113, %v2662
    %v2820 = vadd.f32 %v2114, %v2661
    %v2821 = vadd.f32 %v2115, %v2665
    %v2822 = vadd.f32 %v2116, %v2664
    %v2823 = vadd.f32 %v2117, %v2668
    %v2824 = vadd.f32 %v2118, %v2667
    %v2825 = vadd.f32 %v2119, %v2671
    %v2826 = vadd.f32 %v2120, %v2670
    %v2827 = vadd.f32 %v2121, %v2674
    %v2828 = vadd.f32 %v2122, %v2673
    %v2829 = vadd.f32 %v2123, %v2677
    %v2830 = vadd.f32 %v2124, %v2676
    %v2831 = vadd.f32 %v2125, %v2680
    %v2832 = vadd.f32 %v2126, %v2679
    %v2833 = vadd.f32 %v2127, %v2683
    %v2834 = vadd.f32 %v2128, %v2682
    %v2835 = vadd.f32 %v2129, %v2686
    %v2836 = vadd.f32 %v2130, %v2685
    %v2837 = vadd.f32 %v2131, %v2689
    %v2838 = vadd.f32 %v2132, %v2688
    %v2839 = vadd.f32 %v2133, %v2692
    %v2840 = vadd.f32 %v2134, %v2691
    %v2841 = vadd.f32 %v2135, %v2695
    %v2842 = vadd.f32 %v2136, %v2694
    %v2843 = vadd.f32 %v2137, %v2698
    %v2844 = vadd.f32 %v2138, %v2697
    %v2845 = vadd.f32 %v2139, %v2701
    %v2846 = vadd.f32 %v2140, %v2700
    %v2847 = vadd.f32 %v2141, %v2704
    %v2848 = vadd.f32 %v2142, %v2703
    %v2849 = vadd.f32 %v2143, %v2707
    %v2850 = vadd.f32 %v2144, %v2706
    %v2851 = vadd.f32 %v2145, %v2710
    %v2852 = vadd.f32 %v2146, %v2709
    %v2853 = vadd.f32 %v2147, %v2713
    %v2854 = vadd.f32 %v2148, %v2712
    %v2855 = vadd.f32 %v2149, %v2716
    %v2856 = vadd.f32 %v2150, %v2715
    %v2857 = vadd.f32 %v2151, %v2719
    %v2858 = vadd.f32 %v2152, %v2718
    %v2859 = vadd.f32 %v2153, %v2722
    %v2860 = vadd.f32 %v2154, %v2721
    %v2861 = vadd.f32 %v2155, %v2725
    %v2862 = vadd.f32 %v2156, %v2724
    %v2863 = vadd.f32 %v2157, %v2728
    %v2864 = vadd.f32 %v2158, %v2727
    %v2865 = vadd.f32 %v2159, %v2731
    %v2866 = vadd.f32 %v2160, %v2730
    %v2867 = vadd.f32 %v2161, %v2734
    %v2868 = vadd.f32 %v2162, %v2733
    %v2869 = vadd.f32 %v2163, %v2737
    %v2870 = vadd.f32 %v2164, %v2736
    %v2871 = vadd.f32 %v2165, %v2740
    %v2872 = vadd.f32 %v2166, %v2739
    %v2873 = vadd.f32 %v2167, %v2743
    %v2874 = vadd.f32 %v2168, %v2742
    %v2875 = vadd.f32 %v2169, %v2746
    %v2876 = vadd.f32 %v2170, %v2745
    %v2877 = vadd.f32 %v2171, %v2749
    %v2878 = vadd.f32 %v2172, %v2748
    %v2879 = vadd.f32 %v2173, %v2752
    %v2880 = vadd.f32 %v2174, %v2751
    %v2881 = vld [vmem:[%s4] sm:$0x1]
    %v2883 = vlaneseq
    %v2884 = vshrl.u32 %v2883, 7
    %v2885 = vsub.s32 0, %v2884
    %v2886 = vrot.slane %v2881, %v2885
    %v2888 = vadd.f32 %v2817, %v2886
    %v2889 = vadd.f32 %v2818, %v2886
    %v2890 = vadd.f32 %v2819, %v2886
    %v2891 = vadd.f32 %v2820, %v2886
    %v2892 = vadd.f32 %v2821, %v2886
    %v2893 = vadd.f32 %v2822, %v2886
    %v2894 = vadd.f32 %v2823, %v2886
    %v2895 = vadd.f32 %v2824, %v2886
    %v2896 = vadd.f32 %v2825, %v2886
    %v2897 = vadd.f32 %v2826, %v2886
    %v2898 = vadd.f32 %v2827, %v2886
    %v2899 = vadd.f32 %v2828, %v2886
    %v2900 = vadd.f32 %v2829, %v2886
    %v2901 = vadd.f32 %v2830, %v2886
    %v2902 = vadd.f32 %v2831, %v2886
    %v2903 = vadd.f32 %v2832, %v2886
    %v2904 = vadd.f32 %v2833, %v2886
    %v2905 = vadd.f32 %v2834, %v2886
    %v2906 = vadd.f32 %v2835, %v2886
    %v2907 = vadd.f32 %v2836, %v2886
    %v2908 = vadd.f32 %v2837, %v2886
    %v2909 = vadd.f32 %v2838, %v2886
    %v2910 = vadd.f32 %v2839, %v2886
    %v2911 = vadd.f32 %v2840, %v2886
    %v2912 = vadd.f32 %v2841, %v2886
    %v2913 = vadd.f32 %v2842, %v2886
    %v2914 = vadd.f32 %v2843, %v2886
    %v2915 = vadd.f32 %v2844, %v2886
    %v2916 = vadd.f32 %v2845, %v2886
    %v2917 = vadd.f32 %v2846, %v2886
    %v2918 = vadd.f32 %v2847, %v2886
    %v2919 = vadd.f32 %v2848, %v2886
    %v2920 = vadd.f32 %v2849, %v2886
    %v2921 = vadd.f32 %v2850, %v2886
    %v2922 = vadd.f32 %v2851, %v2886
    %v2923 = vadd.f32 %v2852, %v2886
    %v2924 = vadd.f32 %v2853, %v2886
    %v2925 = vadd.f32 %v2854, %v2886
    %v2926 = vadd.f32 %v2855, %v2886
    %v2927 = vadd.f32 %v2856, %v2886
    %v2928 = vadd.f32 %v2857, %v2886
    %v2929 = vadd.f32 %v2858, %v2886
    %v2930 = vadd.f32 %v2859, %v2886
    %v2931 = vadd.f32 %v2860, %v2886
    %v2932 = vadd.f32 %v2861, %v2886
    %v2933 = vadd.f32 %v2862, %v2886
    %v2934 = vadd.f32 %v2863, %v2886
    %v2935 = vadd.f32 %v2864, %v2886
    %v2936 = vadd.f32 %v2865, %v2886
    %v2937 = vadd.f32 %v2866, %v2886
    %v2938 = vadd.f32 %v2867, %v2886
    %v2939 = vadd.f32 %v2868, %v2886
    %v2940 = vadd.f32 %v2869, %v2886
    %v2941 = vadd.f32 %v2870, %v2886
    %v2942 = vadd.f32 %v2871, %v2886
    %v2943 = vadd.f32 %v2872, %v2886
    %v2944 = vadd.f32 %v2873, %v2886
    %v2945 = vadd.f32 %v2874, %v2886
    %v2946 = vadd.f32 %v2875, %v2886
    %v2947 = vadd.f32 %v2876, %v2886
    %v2948 = vadd.f32 %v2877, %v2886
    %v2949 = vadd.f32 %v2878, %v2886
    %v2950 = vadd.f32 %v2879, %v2886
    %v2951 = vadd.f32 %v2880, %v2886
    %v2952 = vmax.f32 %v2888, 0.0
    %v2953 = vmax.f32 %v2889, 0.0
    %v2954 = vmax.f32 %v2890, 0.0
    %v2955 = vmax.f32 %v2891, 0.0
    %v2956 = vmax.f32 %v2892, 0.0
    %v2957 = vmax.f32 %v2893, 0.0
    %v2958 = vmax.f32 %v2894, 0.0
    %v2959 = vmax.f32 %v2895, 0.0
    %v2960 = vmax.f32 %v2896, 0.0
    %v2961 = vmax.f32 %v2897, 0.0
    %v2962 = vmax.f32 %v2898, 0.0
    %v2963 = vmax.f32 %v2899, 0.0
    %v2964 = vmax.f32 %v2900, 0.0
    %v2965 = vmax.f32 %v2901, 0.0
    %v2966 = vmax.f32 %v2902, 0.0
    %v2967 = vmax.f32 %v2903, 0.0
    %v2968 = vmax.f32 %v2904, 0.0
    %v2969 = vmax.f32 %v2905, 0.0
    %v2970 = vmax.f32 %v2906, 0.0
    %v2971 = vmax.f32 %v2907, 0.0
    %v2972 = vmax.f32 %v2908, 0.0
    %v2973 = vmax.f32 %v2909, 0.0
    %v2974 = vmax.f32 %v2910, 0.0
    %v2975 = vmax.f32 %v2911, 0.0
    %v2976 = vmax.f32 %v2912, 0.0
    %v2977 = vmax.f32 %v2913, 0.0
    %v2978 = vmax.f32 %v2914, 0.0
    %v2979 = vmax.f32 %v2915, 0.0
    %v2980 = vmax.f32 %v2916, 0.0
    %v2981 = vmax.f32 %v2917, 0.0
    %v2982 = vmax.f32 %v2918, 0.0
    %v2983 = vmax.f32 %v2919, 0.0
    %v2984 = vmax.f32 %v2920, 0.0
    %v2985 = vmax.f32 %v2921, 0.0
    %v2986 = vmax.f32 %v2922, 0.0
    %v2987 = vmax.f32 %v2923, 0.0
    %v2988 = vmax.f32 %v2924, 0.0
    %v2989 = vmax.f32 %v2925, 0.0
    %v2990 = vmax.f32 %v2926, 0.0
    %v2991 = vmax.f32 %v2927, 0.0
    %v2992 = vmax.f32 %v2928, 0.0
    %v2993 = vmax.f32 %v2929, 0.0
    %v2994 = vmax.f32 %v2930, 0.0
    %v2995 = vmax.f32 %v2931, 0.0
    %v2996 = vmax.f32 %v2932, 0.0
    %v2997 = vmax.f32 %v2933, 0.0
    %v2998 = vmax.f32 %v2934, 0.0
    %v2999 = vmax.f32 %v2935, 0.0
    %v3000 = vmax.f32 %v2936, 0.0
    %v3001 = vmax.f32 %v2937, 0.0
    %v3002 = vmax.f32 %v2938, 0.0
    %v3003 = vmax.f32 %v2939, 0.0
    %v3004 = vmax.f32 %v2940, 0.0
    %v3005 = vmax.f32 %v2941, 0.0
    %v3006 = vmax.f32 %v2942, 0.0
    %v3007 = vmax.f32 %v2943, 0.0
    %v3008 = vmax.f32 %v2944, 0.0
    %v3009 = vmax.f32 %v2945, 0.0
    %v3010 = vmax.f32 %v2946, 0.0
    %v3011 = vmax.f32 %v2947, 0.0
    %v3012 = vmax.f32 %v2948, 0.0
    %v3013 = vmax.f32 %v2949, 0.0
    %v3014 = vmax.f32 %v2950, 0.0
    %v3015 = vmax.f32 %v2951, 0.0
    %vm3016 = vcmask 1043456
    %v3017 = vsel %vm3016, %v2953, -inf
    %v3018 = vmax.f32 %v2952, %v3017
    %v3019 = vrot.slane %v3018, 4
    %v3020 = vmax.f32 %v3018, %v3019
    %v3021 = vrot.slane %v3020, 2
    %v3022 = vmax.f32 %v3020, %v3021
    %v3023 = vrot.slane %v3022, 1
    %v3024 = vmax.f32 %v3022, %v3023
    %v3025 = vsel %vm3016, %v2955, -inf
    %v3026 = vmax.f32 %v2954, %v3025
    %v3027 = vrot.slane %v3026, 4
    %v3028 = vmax.f32 %v3026, %v3027
    %v3029 = vrot.slane %v3028, 2
    %v3030 = vmax.f32 %v3028, %v3029
    %v3031 = vrot.slane %v3030, 1
    %v3032 = vmax.f32 %v3030, %v3031
    %v3033 = vsel %vm3016, %v2957, -inf
    %v3034 = vmax.f32 %v2956, %v3033
    %v3035 = vrot.slane %v3034, 4
    %v3036 = vmax.f32 %v3034, %v3035
    %v3037 = vrot.slane %v3036, 2
    %v3038 = vmax.f32 %v3036, %v3037
    %v3039 = vrot.slane %v3038, 1
    %v3040 = vmax.f32 %v3038, %v3039
    %v3041 = vsel %vm3016, %v2959, -inf
    %v3042 = vmax.f32 %v2958, %v3041
    %v3043 = vrot.slane %v3042, 4
    %v3044 = vmax.f32 %v3042, %v3043
    %v3045 = vrot.slane %v3044, 2
    %v3046 = vmax.f32 %v3044, %v3045
    %v3047 = vrot.slane %v3046, 1
    %v3048 = vmax.f32 %v3046, %v3047
    %v3049 = vsel %vm3016, %v2961, -inf
    %v3050 = vmax.f32 %v2960, %v3049
    %v3051 = vrot.slane %v3050, 4
    %v3052 = vmax.f32 %v3050, %v3051
    %v3053 = vrot.slane %v3052, 2
    %v3054 = vmax.f32 %v3052, %v3053
    %v3055 = vrot.slane %v3054, 1
    %v3056 = vmax.f32 %v3054, %v3055
    %v3057 = vsel %vm3016, %v2963, -inf
    %v3058 = vmax.f32 %v2962, %v3057
    %v3059 = vrot.slane %v3058, 4
    %v3060 = vmax.f32 %v3058, %v3059
    %v3061 = vrot.slane %v3060, 2
    %v3062 = vmax.f32 %v3060, %v3061
    %v3063 = vrot.slane %v3062, 1
    %v3064 = vmax.f32 %v3062, %v3063
    %v3065 = vsel %vm3016, %v2965, -inf
    %v3066 = vmax.f32 %v2964, %v3065
    %v3067 = vrot.slane %v3066, 4
    %v3068 = vmax.f32 %v3066, %v3067
    %v3069 = vrot.slane %v3068, 2
    %v3070 = vmax.f32 %v3068, %v3069
    %v3071 = vrot.slane %v3070, 1
    %v3072 = vmax.f32 %v3070, %v3071
    %v3073 = vsel %vm3016, %v2967, -inf
    %v3074 = vmax.f32 %v2966, %v3073
    %v3075 = vrot.slane %v3074, 4
    %v3076 = vmax.f32 %v3074, %v3075
    %v3077 = vrot.slane %v3076, 2
    %v3078 = vmax.f32 %v3076, %v3077
    %v3079 = vrot.slane %v3078, 1
    %v3080 = vmax.f32 %v3078, %v3079
    %v3081 = vsel %vm3016, %v2969, -inf
    %v3082 = vmax.f32 %v2968, %v3081
    %v3083 = vrot.slane %v3082, 4
    %v3084 = vmax.f32 %v3082, %v3083
    %v3085 = vrot.slane %v3084, 2
    %v3086 = vmax.f32 %v3084, %v3085
    %v3087 = vrot.slane %v3086, 1
    %v3088 = vmax.f32 %v3086, %v3087
    %v3089 = vsel %vm3016, %v2971, -inf
    %v3090 = vmax.f32 %v2970, %v3089
    %v3091 = vrot.slane %v3090, 4
    %v3092 = vmax.f32 %v3090, %v3091
    %v3093 = vrot.slane %v3092, 2
    %v3094 = vmax.f32 %v3092, %v3093
    %v3095 = vrot.slane %v3094, 1
    %v3096 = vmax.f32 %v3094, %v3095
    %v3097 = vsel %vm3016, %v2973, -inf
    %v3098 = vmax.f32 %v2972, %v3097
    %v3099 = vrot.slane %v3098, 4
    %v3100 = vmax.f32 %v3098, %v3099
    %v3101 = vrot.slane %v3100, 2
    %v3102 = vmax.f32 %v3100, %v3101
    %v3103 = vrot.slane %v3102, 1
    %v3104 = vmax.f32 %v3102, %v3103
    %v3105 = vsel %vm3016, %v2975, -inf
    %v3106 = vmax.f32 %v2974, %v3105
    %v3107 = vrot.slane %v3106, 4
    %v3108 = vmax.f32 %v3106, %v3107
    %v3109 = vrot.slane %v3108, 2
    %v3110 = vmax.f32 %v3108, %v3109
    %v3111 = vrot.slane %v3110, 1
    %v3112 = vmax.f32 %v3110, %v3111
    %v3113 = vsel %vm3016, %v2977, -inf
    %v3114 = vmax.f32 %v2976, %v3113
    %v3115 = vrot.slane %v3114, 4
    %v3116 = vmax.f32 %v3114, %v3115
    %v3117 = vrot.slane %v3116, 2
    %v3118 = vmax.f32 %v3116, %v3117
    %v3119 = vrot.slane %v3118, 1
    %v3120 = vmax.f32 %v3118, %v3119
    %v3121 = vsel %vm3016, %v2979, -inf
    %v3122 = vmax.f32 %v2978, %v3121
    %v3123 = vrot.slane %v3122, 4
    %v3124 = vmax.f32 %v3122, %v3123
    %v3125 = vrot.slane %v3124, 2
    %v3126 = vmax.f32 %v3124, %v3125
    %v3127 = vrot.slane %v3126, 1
    %v3128 = vmax.f32 %v3126, %v3127
    %v3129 = vsel %vm3016, %v2981, -inf
    %v3130 = vmax.f32 %v2980, %v3129
    %v3131 = vrot.slane %v3130, 4
    %v3132 = vmax.f32 %v3130, %v3131
    %v3133 = vrot.slane %v3132, 2
    %v3134 = vmax.f32 %v3132, %v3133
    %v3135 = vrot.slane %v3134, 1
    %v3136 = vmax.f32 %v3134, %v3135
    %v3137 = vsel %vm3016, %v2983, -inf
    %v3138 = vmax.f32 %v2982, %v3137
    %v3139 = vrot.slane %v3138, 4
    %v3140 = vmax.f32 %v3138, %v3139
    %v3141 = vrot.slane %v3140, 2
    %v3142 = vmax.f32 %v3140, %v3141
    %v3143 = vrot.slane %v3142, 1
    %v3144 = vmax.f32 %v3142, %v3143
    %v3145 = vsel %vm3016, %v2985, -inf
    %v3146 = vmax.f32 %v2984, %v3145
    %v3147 = vrot.slane %v3146, 4
    %v3148 = vmax.f32 %v3146, %v3147
    %v3149 = vrot.slane %v3148, 2
    %v3150 = vmax.f32 %v3148, %v3149
    %v3151 = vrot.slane %v3150, 1
    %v3152 = vmax.f32 %v3150, %v3151
    %v3153 = vsel %vm3016, %v2987, -inf
    %v3154 = vmax.f32 %v2986, %v3153
    %v3155 = vrot.slane %v3154, 4
    %v3156 = vmax.f32 %v3154, %v3155
    %v3157 = vrot.slane %v3156, 2
    %v3158 = vmax.f32 %v3156, %v3157
    %v3159 = vrot.slane %v3158, 1
    %v3160 = vmax.f32 %v3158, %v3159
    %v3161 = vsel %vm3016, %v2989, -inf
    %v3162 = vmax.f32 %v2988, %v3161
    %v3163 = vrot.slane %v3162, 4
    %v3164 = vmax.f32 %v3162, %v3163
    %v3165 = vrot.slane %v3164, 2
    %v3166 = vmax.f32 %v3164, %v3165
    %v3167 = vrot.slane %v3166, 1
    %v3168 = vmax.f32 %v3166, %v3167
    %v3169 = vsel %vm3016, %v2991, -inf
    %v3170 = vmax.f32 %v2990, %v3169
    %v3171 = vrot.slane %v3170, 4
    %v3172 = vmax.f32 %v3170, %v3171
    %v3173 = vrot.slane %v3172, 2
    %v3174 = vmax.f32 %v3172, %v3173
    %v3175 = vrot.slane %v3174, 1
    %v3176 = vmax.f32 %v3174, %v3175
    %v3177 = vsel %vm3016, %v2993, -inf
    %v3178 = vmax.f32 %v2992, %v3177
    %v3179 = vrot.slane %v3178, 4
    %v3180 = vmax.f32 %v3178, %v3179
    %v3181 = vrot.slane %v3180, 2
    %v3182 = vmax.f32 %v3180, %v3181
    %v3183 = vrot.slane %v3182, 1
    %v3184 = vmax.f32 %v3182, %v3183
    %v3185 = vsel %vm3016, %v2995, -inf
    %v3186 = vmax.f32 %v2994, %v3185
    %v3187 = vrot.slane %v3186, 4
    %v3188 = vmax.f32 %v3186, %v3187
    %v3189 = vrot.slane %v3188, 2
    %v3190 = vmax.f32 %v3188, %v3189
    %v3191 = vrot.slane %v3190, 1
    %v3192 = vmax.f32 %v3190, %v3191
    %v3193 = vsel %vm3016, %v2997, -inf
    %v3194 = vmax.f32 %v2996, %v3193
    %v3195 = vrot.slane %v3194, 4
    %v3196 = vmax.f32 %v3194, %v3195
    %v3197 = vrot.slane %v3196, 2
    %v3198 = vmax.f32 %v3196, %v3197
    %v3199 = vrot.slane %v3198, 1
    %v3200 = vmax.f32 %v3198, %v3199
    %v3201 = vsel %vm3016, %v2999, -inf
    %v3202 = vmax.f32 %v2998, %v3201
    %v3203 = vrot.slane %v3202, 4
    %v3204 = vmax.f32 %v3202, %v3203
    %v3205 = vrot.slane %v3204, 2
    %v3206 = vmax.f32 %v3204, %v3205
    %v3207 = vrot.slane %v3206, 1
    %v3208 = vmax.f32 %v3206, %v3207
    %v3209 = vsel %vm3016, %v3001, -inf
    %v3210 = vmax.f32 %v3000, %v3209
    %v3211 = vrot.slane %v3210, 4
    %v3212 = vmax.f32 %v3210, %v3211
    %v3213 = vrot.slane %v3212, 2
    %v3214 = vmax.f32 %v3212, %v3213
    %v3215 = vrot.slane %v3214, 1
    %v3216 = vmax.f32 %v3214, %v3215
    %v3217 = vsel %vm3016, %v3003, -inf
    %v3218 = vmax.f32 %v3002, %v3217
    %v3219 = vrot.slane %v3218, 4
    %v3220 = vmax.f32 %v3218, %v3219
    %v3221 = vrot.slane %v3220, 2
    %v3222 = vmax.f32 %v3220, %v3221
    %v3223 = vrot.slane %v3222, 1
    %v3224 = vmax.f32 %v3222, %v3223
    %v3225 = vsel %vm3016, %v3005, -inf
    %v3226 = vmax.f32 %v3004, %v3225
    %v3227 = vrot.slane %v3226, 4
    %v3228 = vmax.f32 %v3226, %v3227
    %v3229 = vrot.slane %v3228, 2
    %v3230 = vmax.f32 %v3228, %v3229
    %v3231 = vrot.slane %v3230, 1
    %v3232 = vmax.f32 %v3230, %v3231
    %v3233 = vsel %vm3016, %v3007, -inf
    %v3234 = vmax.f32 %v3006, %v3233
    %v3235 = vrot.slane %v3234, 4
    %v3236 = vmax.f32 %v3234, %v3235
    %v3237 = vrot.slane %v3236, 2
    %v3238 = vmax.f32 %v3236, %v3237
    %v3239 = vrot.slane %v3238, 1
    %v3240 = vmax.f32 %v3238, %v3239
    %v3241 = vsel %vm3016, %v3009, -inf
    %v3242 = vmax.f32 %v3008, %v3241
    %v3243 = vrot.slane %v3242, 4
    %v3244 = vmax.f32 %v3242, %v3243
    %v3245 = vrot.slane %v3244, 2
    %v3246 = vmax.f32 %v3244, %v3245
    %v3247 = vrot.slane %v3246, 1
    %v3248 = vmax.f32 %v3246, %v3247
    %v3249 = vsel %vm3016, %v3011, -inf
    %v3250 = vmax.f32 %v3010, %v3249
    %v3251 = vrot.slane %v3250, 4
    %v3252 = vmax.f32 %v3250, %v3251
    %v3253 = vrot.slane %v3252, 2
    %v3254 = vmax.f32 %v3252, %v3253
    %v3255 = vrot.slane %v3254, 1
    %v3256 = vmax.f32 %v3254, %v3255
    %v3257 = vsel %vm3016, %v3013, -inf
    %v3258 = vmax.f32 %v3012, %v3257
    %v3259 = vrot.slane %v3258, 4
    %v3260 = vmax.f32 %v3258, %v3259
    %v3261 = vrot.slane %v3260, 2
    %v3262 = vmax.f32 %v3260, %v3261
    %v3263 = vrot.slane %v3262, 1
    %v3264 = vmax.f32 %v3262, %v3263
    %v3265 = vsel %vm3016, %v3015, -inf
    %v3266 = vmax.f32 %v3014, %v3265
    %v3267 = vrot.slane %v3266, 4
    %v3268 = vmax.f32 %v3266, %v3267
    %v3269 = vrot.slane %v3268, 2
    %v3270 = vmax.f32 %v3268, %v3269
    %v3271 = vrot.slane %v3270, 1
    %v3272 = vmax.f32 %v3270, %v3271
    %v3273 = vpack.c.bf16 %v3024, %v3024
    %v3274 = vpack.c.bf16 %v3032, %v3032
    %v3275 = vpack.c.bf16 %v3040, %v3040
    %v3276 = vpack.c.bf16 %v3048, %v3048
    %v3277 = vpack.c.bf16 %v3056, %v3056
    %v3278 = vpack.c.bf16 %v3064, %v3064
    %v3279 = vpack.c.bf16 %v3072, %v3072
    %v3280 = vpack.c.bf16 %v3080, %v3080
    %v3281 = vpack.c.bf16 %v3088, %v3088
    %v3282 = vpack.c.bf16 %v3096, %v3096
    %v3283 = vpack.c.bf16 %v3104, %v3104
    %v3284 = vpack.c.bf16 %v3112, %v3112
    %v3285 = vpack.c.bf16 %v3120, %v3120
    %v3286 = vpack.c.bf16 %v3128, %v3128
    %v3287 = vpack.c.bf16 %v3136, %v3136
    %v3288 = vpack.c.bf16 %v3144, %v3144
    %v3289 = vpack.c.bf16 %v3152, %v3152
    %v3290 = vpack.c.bf16 %v3160, %v3160
    %v3291 = vpack.c.bf16 %v3168, %v3168
    %v3292 = vpack.c.bf16 %v3176, %v3176
    %v3293 = vpack.c.bf16 %v3184, %v3184
    %v3294 = vpack.c.bf16 %v3192, %v3192
    %v3295 = vpack.c.bf16 %v3200, %v3200
    %v3296 = vpack.c.bf16 %v3208, %v3208
    %v3297 = vpack.c.bf16 %v3216, %v3216
    %v3298 = vpack.c.bf16 %v3224, %v3224
    %v3299 = vpack.c.bf16 %v3232, %v3232
    %v3300 = vpack.c.bf16 %v3240, %v3240
    %v3301 = vpack.c.bf16 %v3248, %v3248
    %v3302 = vpack.c.bf16 %v3256, %v3256
    %v3303 = vpack.c.bf16 %v3264, %v3264
    %v3304 = vpack.c.bf16 %v3272, %v3272
    %v3305 = vld [vmem:[#allocation8] sm:$0xf]
    %v3306 = vld [vmem:[#allocation8 + $0x4] sm:$0xf]
    %v3307 = vld [vmem:[#allocation8 + $0x8] sm:$0xf]
    %v3308 = vld [vmem:[#allocation8 + $0xc] sm:$0xf]
    %v3309 = vld [vmem:[#allocation8 + $0x10] sm:$0xf]
    %v3310 = vld [vmem:[#allocation8 + $0x14] sm:$0xf]
    %v3311 = vld [vmem:[#allocation8 + $0x18] sm:$0xf]
    %v3312 = vld [vmem:[#allocation8 + $0x1c] sm:$0xf]
    %v3313 = vld [vmem:[#allocation8 + $0x20] sm:$0xf]
    %v3314 = vld [vmem:[#allocation8 + $0x24] sm:$0xf]
    %v3315 = vld [vmem:[#allocation8 + $0x28] sm:$0xf]
    %v3316 = vld [vmem:[#allocation8 + $0x2c] sm:$0xf]
    %v3317 = vld [vmem:[#allocation8 + $0x30] sm:$0xf]
    %v3318 = vld [vmem:[#allocation8 + $0x34] sm:$0xf]
    %v3319 = vld [vmem:[#allocation8 + $0x38] sm:$0xf]
    %v3320 = vld [vmem:[#allocation8 + $0x3c] sm:$0xf]
    %v3321 = vld [vmem:[%s6] sm:$0x1]
    %v3323 = vlaneseq
    %v3324 = vshrl.u32 %v3323, 7
    %v3325 = vsub.s32 0, %v3324
    %v3326 = vrot.slane %v3321, %v3325
    %v3360 = vunpack.c.l.b16 %v3273
    %v3361 = vunpack.c.l.b16 %v3274
    %v3362 = vunpack.c.l.b16 %v3275
    %v3363 = vunpack.c.l.b16 %v3276
    %v3364 = vunpack.c.l.b16 %v3277
    %v3365 = vunpack.c.l.b16 %v3278
    %v3366 = vunpack.c.l.b16 %v3279
    %v3367 = vunpack.c.l.b16 %v3280
    %v3368 = vunpack.c.l.b16 %v3281
    %v3369 = vunpack.c.l.b16 %v3282
    %v3370 = vunpack.c.l.b16 %v3283
    %v3371 = vunpack.c.l.b16 %v3284
    %v3372 = vunpack.c.l.b16 %v3285
    %v3373 = vunpack.c.l.b16 %v3286
    %v3374 = vunpack.c.l.b16 %v3287
    %v3375 = vunpack.c.l.b16 %v3288
    %v3376 = vunpack.c.l.b16 %v3289
    %v3377 = vunpack.c.l.b16 %v3290
    %v3378 = vunpack.c.l.b16 %v3291
    %v3379 = vunpack.c.l.b16 %v3292
    %v3380 = vunpack.c.l.b16 %v3293
    %v3381 = vunpack.c.l.b16 %v3294
    %v3382 = vunpack.c.l.b16 %v3295
    %v3383 = vunpack.c.l.b16 %v3296
    %v3384 = vunpack.c.l.b16 %v3297
    %v3385 = vunpack.c.l.b16 %v3298
    %v3386 = vunpack.c.l.b16 %v3299
    %v3387 = vunpack.c.l.b16 %v3300
    %v3388 = vunpack.c.l.b16 %v3301
    %v3389 = vunpack.c.l.b16 %v3302
    %v3390 = vunpack.c.l.b16 %v3303
    %v3391 = vunpack.c.l.b16 %v3304
    %vm3392 = vcmask 1041409
    %v3393 = vsel %vm3392, %v3361, %v3360
    %vm3394 = vcmask 1042434
    %v3395 = vsel %vm3394, %v3362, %v3393
    %vm3396 = vcmask 1043459
    %v3397 = vsel %vm3396, %v3363, %v3395
    %vm3398 = vcmask 1044484
    %v3399 = vsel %vm3398, %v3364, %v3397
    %vm3400 = vcmask 1045509
    %v3401 = vsel %vm3400, %v3365, %v3399
    %vm3402 = vcmask 1046534
    %v3403 = vsel %vm3402, %v3366, %v3401
    %vm3404 = vcmask 1047559
    %v3405 = vsel %vm3404, %v3367, %v3403
    %v3406 = vsel %vm3392, %v3369, %v3368
    %v3407 = vsel %vm3394, %v3370, %v3406
    %v3408 = vsel %vm3396, %v3371, %v3407
    %v3409 = vsel %vm3398, %v3372, %v3408
    %v3410 = vsel %vm3400, %v3373, %v3409
    %v3411 = vsel %vm3402, %v3374, %v3410
    %v3412 = vsel %vm3404, %v3375, %v3411
    %v3413 = vsel %vm3392, %v3377, %v3376
    %v3414 = vsel %vm3394, %v3378, %v3413
    %v3415 = vsel %vm3396, %v3379, %v3414
    %v3416 = vsel %vm3398, %v3380, %v3415
    %v3417 = vsel %vm3400, %v3381, %v3416
    %v3418 = vsel %vm3402, %v3382, %v3417
    %v3419 = vsel %vm3404, %v3383, %v3418
    %v3420 = vsel %vm3392, %v3385, %v3384
    %v3421 = vsel %vm3394, %v3386, %v3420
    %v3422 = vsel %vm3396, %v3387, %v3421
    %v3423 = vsel %vm3398, %v3388, %v3422
    %v3424 = vsel %vm3400, %v3389, %v3423
    %v3425 = vsel %vm3402, %v3390, %v3424
    %v3426 = vsel %vm3404, %v3391, %v3425
    %v3427 = vpack.c.b16 %v3412, %v3405
    %v3428 = vpack.c.b16 %v3426, %v3419
    %v3447 = vunpack.c.l.b16 %v3305
    %v3448 = vunpack.c.l.b16 %v3306
    %v3449 = vunpack.c.l.b16 %v3307
    %v3450 = vunpack.c.l.b16 %v3308
    %v3451 = vunpack.c.l.b16 %v3309
    %v3452 = vunpack.c.l.b16 %v3310
    %v3453 = vunpack.c.l.b16 %v3311
    %v3454 = vunpack.c.l.b16 %v3312
    %v3455 = vunpack.c.l.b16 %v3313
    %v3456 = vunpack.c.l.b16 %v3314
    %v3457 = vunpack.c.l.b16 %v3315
    %v3458 = vunpack.c.l.b16 %v3316
    %v3459 = vunpack.c.l.b16 %v3317
    %v3460 = vunpack.c.l.b16 %v3318
    %v3461 = vunpack.c.l.b16 %v3319
    %v3462 = vunpack.c.l.b16 %v3320
    %v3463 = vpack.c.b16 %v3448, %v3447
    %v3464 = vpack.c.b16 %v3450, %v3449
    %v3465 = vpack.c.b16 %v3452, %v3451
    %v3466 = vpack.c.b16 %v3454, %v3453
    %v3467 = vpack.c.b16 %v3456, %v3455
    %v3468 = vpack.c.b16 %v3458, %v3457
    %v3469 = vpack.c.b16 %v3460, %v3459
    %v3470 = vpack.c.b16 %v3462, %v3461
    %3479 = vmatprep.subr.bf16.mxu0 0
    %3480 = vmatpush1.bf16.msra.mxu0 %v3463
    %3481 = vmatprep.subr.bf16.mxu0 0
    %3482 = vmatpush1.bf16.msra.mxu0 %v3464
    %3483 = vmatprep.subr.bf16.mxu0 0
    %3484 = vmatpush1.bf16.msra.mxu0 %v3465
    %3485 = vmatprep.subr.bf16.mxu0 0
    %3486 = vmatpush1.bf16.msra.mxu0 %v3466
    %3487 = vmatprep.subr.bf16.mxu0 0
    %3488 = vmatpush1.bf16.msra.mxu0 %v3467
    %3489 = vmatprep.subr.bf16.mxu0 0
    %3490 = vmatpush1.bf16.msra.mxu0 %v3468
    %3491 = vmatprep.subr.bf16.mxu0 0
    %3492 = vmatpush1.bf16.msra.mxu0 %v3469
    %3493 = vmatprep.subr.bf16.mxu0 0
    %3494 = vmatpush1.bf16.msra.mxu0 %v3470
    %3495 = vmatprep.subr.bf16.mxu0 0
    %3496 = vmatpush1.bf16.msra.mxu0 0
    %3497 = vmatprep.subr.bf16.mxu0 0
    %3498 = vmatpush1.bf16.msra.mxu0 0
    %3499 = vmatprep.subr.bf16.mxu0 0
    %3500 = vmatpush1.bf16.msra.mxu0 0
    %3501 = vmatprep.subr.bf16.mxu0 0
    %3502 = vmatpush1.bf16.msra.mxu0 0
    %3503 = vmatprep.subr.bf16.mxu0 0
    %3504 = vmatpush1.bf16.msra.mxu0 0
    %3505 = vmatprep.subr.bf16.mxu0 0
    %3506 = vmatpush1.bf16.msra.mxu0 0
    %3507 = vmatprep.subr.bf16.mxu0 0
    %3508 = vmatpush1.bf16.msra.mxu0 0
    %3509 = vmatprep.subr.bf16.mxu0 0
    %3510 = vmatpush1.bf16.msra.mxu0 0
    %3511 = vmatprep.mubr.bf16.mxu0 0
    %3512 = vmatmul.mubr.bf16.gmra.mrb[0].mxu0 %v3427
    %v3513 = vpop.f32.mrb[0].mxu0
    %v3514 = vadd.f32 %v3326, %v3513
    %v3515 = vpop.f32.mrb[0].mxu0
    %v3516 = vpop.f32.mrb[0].mxu0
    %v3517 = vadd.f32 %v3326, %v3516
    %v3518 = vpop.f32.mrb[0].mxu0
    %3519 = vmatprep.mubr.bf16.mxu0 0
    %3520 = vmatmul.mubr.bf16.gmra.mrb[0].mxu0 %v3428
    %v3521 = vpop.f32.mrb[0].mxu0
    %v3522 = vadd.f32 %v3326, %v3521
    %v3523 = vpop.f32.mrb[0].mxu0
    %v3524 = vpop.f32.mrb[0].mxu0
    %v3525 = vadd.f32 %v3326, %v3524
    %v3526 = vpop.f32.mrb[0].mxu0
    %3527 = vdwg.mxu0
    %v3528 = vpack.c.bf16 %v3517, %v3514
    %v3529 = vpack.c.bf16 %v3525, %v3522
    %v3530 = vld [vmem:[#allocation10] sm:$0xf]
    %v3531 = vld [vmem:[#allocation10 + $0x4] sm:$0xf]
    %v3532 = vld [vmem:[#allocation10 + $0x8] sm:$0xf]
    %v3533 = vld [vmem:[#allocation10 + $0xc] sm:$0xf]
    %v3534 = vld [vmem:[#allocation10 + $0x10] sm:$0xf]
    %v3535 = vld [vmem:[#allocation10 + $0x14] sm:$0xf]
    %v3536 = vld [vmem:[#allocation10 + $0x18] sm:$0xf]
    %v3537 = vld [vmem:[#allocation10 + $0x1c] sm:$0xf]
    %v3538 = vld [vmem:[#allocation10 + $0x20] sm:$0xf]
    %v3539 = vld [vmem:[#allocation10 + $0x24] sm:$0xf]
    %v3540 = vld [vmem:[#allocation10 + $0x28] sm:$0xf]
    %v3541 = vld [vmem:[#allocation10 + $0x2c] sm:$0xf]
    %v3542 = vld [vmem:[#allocation10 + $0x30] sm:$0xf]
    %v3543 = vld [vmem:[#allocation10 + $0x34] sm:$0xf]
    %v3544 = vld [vmem:[#allocation10 + $0x38] sm:$0xf]
    %v3545 = vld [vmem:[#allocation10 + $0x3c] sm:$0xf]
    %v3546 = vld [vmem:[%s8] sm:$0x1]
    %v3548 = vlaneseq
    %v3549 = vshrl.u32 %v3548, 7
    %v3550 = vsub.s32 0, %v3549
    %v3551 = vrot.slane %v3546, %v3550
    %v3569 = vunpack.c.l.b16 %v3530
    %v3570 = vunpack.c.l.b16 %v3531
    %v3571 = vunpack.c.l.b16 %v3532
    %v3572 = vunpack.c.l.b16 %v3533
    %v3573 = vunpack.c.l.b16 %v3534
    %v3574 = vunpack.c.l.b16 %v3535
    %v3575 = vunpack.c.l.b16 %v3536
    %v3576 = vunpack.c.l.b16 %v3537
    %v3577 = vunpack.c.l.b16 %v3538
    %v3578 = vunpack.c.l.b16 %v3539
    %v3579 = vunpack.c.l.b16 %v3540
    %v3580 = vunpack.c.l.b16 %v3541
    %v3581 = vunpack.c.l.b16 %v3542
    %v3582 = vunpack.c.l.b16 %v3543
    %v3583 = vunpack.c.l.b16 %v3544
    %v3584 = vunpack.c.l.b16 %v3545
    %v3585 = vpack.c.b16 %v3570, %v3569
    %v3586 = vpack.c.b16 %v3572, %v3571
    %v3587 = vpack.c.b16 %v3574, %v3573
    %v3588 = vpack.c.b16 %v3576, %v3575
    %v3589 = vpack.c.b16 %v3578, %v3577
    %v3590 = vpack.c.b16 %v3580, %v3579
    %v3591 = vpack.c.b16 %v3582, %v3581
    %v3592 = vpack.c.b16 %v3584, %v3583
    %3601 = vmatprep.subr.bf16.mxu0 0
    %3602 = vmatpush1.bf16.msra.mxu0 %v3585
    %3603 = vmatprep.subr.bf16.mxu0 0
    %3604 = vmatpush1.bf16.msra.mxu0 %v3586
    %3605 = vmatprep.subr.bf16.mxu0 0
    %3606 = vmatpush1.bf16.msra.mxu0 %v3587
    %3607 = vmatprep.subr.bf16.mxu0 0
    %3608 = vmatpush1.bf16.msra.mxu0 %v3588
    %3609 = vmatprep.subr.bf16.mxu0 0
    %3610 = vmatpush1.bf16.msra.mxu0 %v3589
    %3611 = vmatprep.subr.bf16.mxu0 0
    %3612 = vmatpush1.bf16.msra.mxu0 %v3590
    %3613 = vmatprep.subr.bf16.mxu0 0
    %3614 = vmatpush1.bf16.msra.mxu0 %v3591
    %3615 = vmatprep.subr.bf16.mxu0 0
    %3616 = vmatpush1.bf16.msra.mxu0 %v3592
    %3617 = vmatprep.subr.bf16.mxu0 0
    %3618 = vmatpush1.bf16.msra.mxu0 0
    %3619 = vmatprep.subr.bf16.mxu0 0
    %3620 = vmatpush1.bf16.msra.mxu0 0
    %3621 = vmatprep.subr.bf16.mxu0 0
    %3622 = vmatpush1.bf16.msra.mxu0 0
    %3623 = vmatprep.subr.bf16.mxu0 0
    %3624 = vmatpush1.bf16.msra.mxu0 0
    %3625 = vmatprep.subr.bf16.mxu0 0
    %3626 = vmatpush1.bf16.msra.mxu0 0
    %3627 = vmatprep.subr.bf16.mxu0 0
    %3628 = vmatpush1.bf16.msra.mxu0 0
    %3629 = vmatprep.subr.bf16.mxu0 0
    %3630 = vmatpush1.bf16.msra.mxu0 0
    %3631 = vmatprep.subr.bf16.mxu0 0
    %3632 = vmatpush1.bf16.msra.mxu0 0
    %3633 = vmatprep.mubr.bf16.mxu0 0
    %3634 = vmatmul.mubr.bf16.gmra.mrb[0].mxu0 %v3528
    %v3635 = vpop.f32.mrb[0].mxu0
    %v3636 = vadd.f32 %v3551, %v3635
    %v3637 = vpop.f32.mrb[0].mxu0
    %v3638 = vpop.f32.mrb[0].mxu0
    %v3639 = vadd.f32 %v3551, %v3638
    %v3640 = vpop.f32.mrb[0].mxu0
    %3641 = vmatprep.mubr.bf16.mxu0 0
    %3642 = vmatmul.mubr.bf16.gmra.mrb[0].mxu0 %v3529
    %v3643 = vpop.f32.mrb[0].mxu0
    %v3644 = vadd.f32 %v3551, %v3643
    %v3645 = vpop.f32.mrb[0].mxu0
    %v3646 = vpop.f32.mrb[0].mxu0
    %v3647 = vadd.f32 %v3551, %v3646
    %v3648 = vpop.f32.mrb[0].mxu0
    %3649 = vdwg.mxu0
    %3650 = vmax.xlane.f32.xlu0 %v3636
    %v3651 = vpop.xlane.xlu0 %3650
    %3652 = vmax.xlane.f32.xlu0 %v3639
    %v3653 = vpop.xlane.xlu0 %3652
    %3654 = vmax.xlane.f32.xlu0 %v3644
    %v3655 = vpop.xlane.xlu0 %3654
    %3656 = vmax.xlane.f32.xlu0 %v3647
    %v3657 = vpop.xlane.xlu0 %3656
    %v3658 = vsub.f32 %v3636, %v3651
    %v3659 = vsub.f32 %v3639, %v3653
    %v3660 = vsub.f32 %v3644, %v3655
    %v3661 = vsub.f32 %v3647, %v3657
    %v3662 = vmul.f32 %v3658, 1.442695
    %v3663 = vpow.pop %v3662
    %v3664 = vmul.f32 %v3659, 1.442695
    %v3665 = vpow.pop %v3664
    %v3666 = vmul.f32 %v3660, 1.442695
    %v3667 = vpow.pop %v3666
    %v3668 = vmul.f32 %v3661, 1.442695
    %v3669 = vpow.pop %v3668
    %3670 = vadd.xlane.f32.xlu0 %v3663
    %v3671 = vpop.xlane.xlu0 %3670
    %3672 = vadd.xlane.f32.xlu0 %v3665
    %v3673 = vpop.xlane.xlu0 %3672
    %3674 = vadd.xlane.f32.xlu0 %v3667
    %v3675 = vpop.xlane.xlu0 %3674
    %3676 = vadd.xlane.f32.xlu0 %v3669
    %v3677 = vpop.xlane.xlu0 %3676
    %v3678 = vlog2.pop %v3671
    %v3679 = vmul.f32 %v3678, 0.6931472
    %v3680 = vlog2.pop %v3673
    %v3681 = vmul.f32 %v3680, 0.6931472
    %v3682 = vlog2.pop %v3675
    %v3683 = vmul.f32 %v3682, 0.6931472
    %v3684 = vlog2.pop %v3677
    %v3685 = vmul.f32 %v3684, 0.6931472
    %v3686 = vsub.f32 %v3658, %v3679
    %v3687 = vsub.f32 %v3659, %v3681
    %v3688 = vsub.f32 %v3660, %v3683
    %v3689 = vsub.f32 %v3661, %v3685
    %3690 = vst [vmem:[#allocation11] sm:$0xff] %v3686
    %3691 = vst [vmem:[#allocation11 + $0x8] sm:$0xff] %v3687
    %3692 = vst [vmem:[#allocation11 + $0x10] sm:$0xff] %v3688
    %3693 = vst [vmem:[#allocation11 + $0x18] sm:$0xff] %v3689
    // Predicated region
    $region58: #{tpu_custom_call.1} parent=1 // pred_check
      _
    $region59: #{tpu_custom_call.1} parent=1 // pred_check_branch
      %3695 = sbr.rel (0) target = $region61
    $region60: #{tpu_custom_call.1} parent=1 // pred_region
      %s3697 = ssub.s32 512, 512
      %3698 = vsyncadd [#allocation4], %s3697
      %s3699 = sshll.u32 [#allocation11], 4
      %s3700 = int_to_ptr.vmem [resolvable:$true] %s3699
      %3705 = dma.vmem_to_hbm [thread:$0]  %s3700, 512, %s9, [#allocation4], 128, 128, 8
    $region61: #{tpu_custom_call.1} parent=1 // pred_fallthru
      _
    // Predicated region
    $region62: #{tpu_custom_call.1} parent=1 // pred_check
      _
    $region63: #{tpu_custom_call.1} parent=1 // pred_check_branch
      %3707 = sbr.rel (0) target = $region65
    $region64: #{tpu_custom_call.1} parent=1 // pred_region
      %3708 = dma.done [#allocation4], 512
    $region65: #{tpu_custom_call.1} parent=1 // pred_fallthru
      _
    %3709 = vsyncpa [#allocation3], 1
    %3710 = vsyncpa [#allocation6], 1
    %3711 = vsyncpa [#allocation9], 1
    %3712 = vsyncpa [#allocation4], 1

</llo_original>
